<compile_context>
chip_gen: v6e
topology: v6e:2x2x1
jax: 0.10.0
libtpu: 0.0.40
codegen_flags: <defaults>
</compile_context>

<pallas_src>
import functools

import jax
import jax.numpy as jnp
from jax.experimental import pallas as pl
from jax.experimental.pallas import tpu as pltpu

_ROW_TILE = 512                 # row tile for large B*L (multiple of 8)
_VMEM_LIMIT = 32 * 1024 * 1024  # explicit scoped-VMEM budget, safe on v5e/v6e/v7x
# MXU operand dtype for the big matmuls.  jnp.bfloat16 gives ~2-4x MXU throughput
# and halves HBM traffic on all generations; kept at float32 here so the numerics
# match the float32 PyTorch reference exactly.
_MXU_DTYPE = jnp.float32


def _cparams(*semantics):
    return pltpu.CompilerParams(dimension_semantics=tuple(semantics),
                                vmem_limit_bytes=_VMEM_LIMIT)


def _round_up(x, m):
    return (x + m - 1) // m * m


def _row_tiles(m):
    """Row tile (multiple of 8) and padded row count for a (M, C) operand."""
    if m <= _ROW_TILE:
        tm = _round_up(m, 8)
        return tm, tm
    return _ROW_TILE, _round_up(m, _ROW_TILE)


def _pad_rows(x, rows, axis):
    if x.shape[axis] == rows:
        return x
    pad = [(0, 0)] * x.ndim
    pad[axis] = (0, rows - x.shape[axis])
    return jnp.pad(x, pad)


def _ln(h, gamma, beta):
    """LayerNorm over the last axis (biased variance, eps=1e-5), f32 values."""
    mean = jnp.mean(h, axis=-1, keepdims=True)
    cen = h - mean
    var = jnp.mean(cen * cen, axis=-1, keepdims=True)
    return cen * jax.lax.rsqrt(var + 1e-5) * gamma + beta


# ----------------------------------------------------------------------------
# Kernel 1: tiled multi-tap matmul   out = sum_t X[t] @ W[t] + b  (opt. tanh)
# ----------------------------------------------------------------------------
def _tap_matmul_kernel(x_ref, w_ref, b_ref, o_ref, acc_ref, *, n_taps, apply_tanh):
    t = pl.program_id(1)

    @pl.when(t == 0)
    def _init():
        acc_ref[...] = jnp.zeros_like(acc_ref)

    acc_ref[...] += jnp.dot(x_ref[0], w_ref[0], preferred_element_type=jnp.float32)

    @pl.when(t == n_taps - 1)
    def _finalize():
        y = acc_ref[...] + b_ref[...]
        if apply_tanh:
            y = jnp.tanh(y)
        o_ref[...] = y.astype(o_ref.dtype)


def tap_matmul(x_taps, w_taps, bias, *, apply_tanh=False):
    """out[m, n] = sum_t x_taps[t, m, :] @ w_taps[t, :, n] + bias[n].

    Grid = (row tiles ["parallel" -> megacore], taps ["arbitrary" reduction with
    a f32 VMEM accumulator]).  Rows are zero-padded to the tile; pad sliced off.
    """
    T, M, K = x_taps.shape
    N = w_taps.shape[-1]
    tm, m_pad = _row_tiles(M)
    xp = _pad_rows(x_taps, m_pad, axis=1).astype(_MXU_DTYPE)
    wp = w_taps.astype(_MXU_DTYPE)
    bp = bias.reshape(1, N).astype(jnp.float32)
    out = pl.pallas_call(
        functools.partial(_tap_matmul_kernel, n_taps=T, apply_tanh=apply_tanh),
        grid=(m_pad // tm, T),
        in_specs=[
            pl.BlockSpec((1, tm, K), lambda i, t: (t, i, 0)),
            pl.BlockSpec((1, K, N), lambda i, t: (t, 0, 0)),
            pl.BlockSpec((1, N), lambda i, t: (0, 0)),
        ],
        out_specs=pl.BlockSpec((tm, N), lambda i, t: (i, 0)),
        out_shape=jax.ShapeDtypeStruct((m_pad, N), jnp.float32),
        scratch_shapes=[pltpu.VMEM((tm, N), jnp.float32)],
        compiler_params=_cparams("parallel", "arbitrary"),
    )(xp, wp, bp)
    return out[:M]


# ----------------------------------------------------------------------------
# Kernel 2: fused residual-add + LayerNorm (row-tiled)
# ----------------------------------------------------------------------------
def _add_ln_kernel(x_ref, r_ref, g_ref, b_ref, o_ref):
    h = x_ref[...].astype(jnp.float32) + r_ref[...].astype(jnp.float32)
    o_ref[...] = _ln(h, g_ref[...], b_ref[...]).astype(o_ref.dtype)


def add_layer_norm(x2d, r2d, gamma, beta):
    M, C = x2d.shape
    tm, m_pad = _row_tiles(M)
    out = pl.pallas_call(
        _add_ln_kernel,
        grid=(m_pad // tm,),
        in_specs=[
            pl.BlockSpec((tm, C), lambda i: (i, 0)),
            pl.BlockSpec((tm, C), lambda i: (i, 0)),
            pl.BlockSpec((1, C), lambda i: (0, 0)),
            pl.BlockSpec((1, C), lambda i: (0, 0)),
        ],
        out_specs=pl.BlockSpec((tm, C), lambda i: (i, 0)),
        out_shape=jax.ShapeDtypeStruct((m_pad, C), jnp.float32),
        compiler_params=_cparams("parallel"),
    )(_pad_rows(x2d, m_pad, 0).astype(jnp.float32),
      _pad_rows(r2d, m_pad, 0).astype(jnp.float32),
      gamma.reshape(1, C).astype(jnp.float32),
      beta.reshape(1, C).astype(jnp.float32))
    return out[:M]


# ----------------------------------------------------------------------------
# Kernel 3: fused causal isometric conv + tanh + residual + LayerNorm
# ----------------------------------------------------------------------------
def _isometric_kernel(x1_ref, w_ref, b_ref, g_ref, bt_ref, o_ref, acc_ref, *, iso_k):
    x1 = x1_ref[0].astype(jnp.float32)             # (Lc, C)
    lc = x1.shape[0]
    acc_ref[...] = jnp.zeros_like(acc_ref)
    # Reference: z = concat(zeros(Lc-1), x1); out[t] = sum_j z[t+j] @ W_j.
    # The zero prefix contributes nothing, so each tap contracts only its valid
    # window and accumulates into the matching output rows (no zeros built).
    for j in range(iso_k):
        rows = j + 1                                # valid input rows for tap j
        start = lc - 1 - j                          # first output row it touches
        part = jnp.dot(x1[:rows, :], w_ref[j].astype(jnp.float32),
                       preferred_element_type=jnp.float32)
        acc_ref[pl.ds(start, rows), :] += part
    y = jnp.tanh(acc_ref[...] + b_ref[...])         # tanh(isometric_conv(...))
    h = y + x1                                      # fused (xi + x1) residual
    o_ref[0] = _ln(h, g_ref[...], bt_ref[...]).astype(o_ref.dtype)


def isometric_conv_ln(x1_blc, iso_w, iso_b, gamma, beta):
    """tanh(causal isometric Conv1d(x1)) + x1 -> LayerNorm, one kernel per batch row.

    iso_w is the PyTorch (Cout, Cin, K) Conv1d weight; the reference's
    zero-prefix construction requires K == Lc (the down-sampled length).
    """
    B, Lc, C = x1_blc.shape
    iso_k = iso_w.shape[-1]
    assert iso_k == Lc, "MICN isometric kernel must equal the down-sampled length"
    w_taps = iso_w.transpose(2, 1, 0).astype(jnp.float32)    # (K, Cin, Cout)
    return pl.pallas_call(
        functools.partial(_isometric_kernel, iso_k=iso_k),
        grid=(B,),
        in_specs=[
            pl.BlockSpec((1, Lc, C), lambda b: (b, 0, 0)),
            pl.BlockSpec((iso_k, C, C), lambda b: (0, 0, 0)),
            pl.BlockSpec((1, C), lambda b: (0, 0)),
            pl.BlockSpec((1, C), lambda b: (0, 0)),
            pl.BlockSpec((1, C), lambda b: (0, 0)),
        ],
        out_specs=pl.BlockSpec((1, Lc, C), lambda b: (b, 0, 0)),
        out_shape=jax.ShapeDtypeStruct((B, Lc, C), jnp.float32),
        scratch_shapes=[pltpu.VMEM((Lc, C), jnp.float32)],
        compiler_params=_cparams("parallel"),
    )(x1_blc.astype(jnp.float32), w_taps,
      iso_b.reshape(1, C).astype(jnp.float32),
      gamma.reshape(1, C).astype(jnp.float32),
      beta.reshape(1, C).astype(jnp.float32))


# ----------------------------------------------------------------------------
# Kernel 4: fused norm1 -> conv1(1x1) -> conv2(1x1) -> +residual -> norm2
# ----------------------------------------------------------------------------
def _ffn_kernel(x_ref, g1_ref, b1_ref, w1_ref, c1_ref, w2_ref, c2_ref,
                g2_ref, b2_ref, o_ref):
    x = x_ref[...].astype(jnp.float32)                       # mg tile (tm, C)
    y = _ln(x, g1_ref[...], b1_ref[...])                     # norm1
    h = jnp.dot(y.astype(w1_ref.dtype), w1_ref[...],
                preferred_element_type=jnp.float32) + c1_ref[...]
    y2 = jnp.dot(h.astype(w2_ref.dtype), w2_ref[...],
                 preferred_element_type=jnp.float32) + c2_ref[...]
    o_ref[...] = _ln(x + y2, g2_ref[...], b2_ref[...]).astype(o_ref.dtype)


def ffn_norm_block(mg2d, p):
    M, C = mg2d.shape
    H = p["conv1_w"].shape[0]                                # 4*C
    tm, m_pad = _row_tiles(M)
    w1 = p["conv1_w"][:, :, 0].T.astype(_MXU_DTYPE)          # (C, 4C)
    w2 = p["conv2_w"][:, :, 0].T.astype(_MXU_DTYPE)          # (4C, C)
    out = pl.pallas_call(
        _ffn_kernel,
        grid=(m_pad // tm,),
        in_specs=[
            pl.BlockSpec((tm, C), lambda i: (i, 0)),
            pl.BlockSpec((1, C), lambda i: (0, 0)),
            pl.BlockSpec((1, C), lambda i: (0, 0)),
            pl.BlockSpec((C, H), lambda i: (0, 0)),
            pl.BlockSpec((1, H), lambda i: (0, 0)),
            pl.BlockSpec((H, C), lambda i: (0, 0)),
            pl.BlockSpec((1, C), lambda i: (0, 0)),
            pl.BlockSpec((1, C), lambda i: (0, 0)),
            pl.BlockSpec((1, C), lambda i: (0, 0)),
        ],
        out_specs=pl.BlockSpec((tm, C), lambda i: (i, 0)),
        out_shape=jax.ShapeDtypeStruct((m_pad, C), jnp.float32),
        compiler_params=_cparams("parallel"),
    )(_pad_rows(mg2d, m_pad, 0).astype(jnp.float32),
      p["norm1_g"].reshape(1, C).astype(jnp.float32),
      p["norm1_b"].reshape(1, C).astype(jnp.float32),
      w1, p["conv1_b"].reshape(1, H).astype(jnp.float32),
      w2, p["conv2_b"].reshape(1, C).astype(jnp.float32),
      p["norm2_g"].reshape(1, C).astype(jnp.float32),
      p["norm2_b"].reshape(1, C).astype(jnp.float32))
    return out[:M]


# ----------------------------------------------------------------------------
# Kernel 5: series_decomp seasonal residual (x - moving_avg) via windowed sum
# ----------------------------------------------------------------------------
def _decomp_kernel(xp_ref, o_ref, *, k, pad, out_len):
    xp = xp_ref[0].astype(jnp.float32)            # (Lp, C) replicate-padded sequence
    acc = xp[0:out_len, :]
    for j in range(1, k):
        acc = acc + xp[j:j + out_len, :]
    o_ref[0] = (xp[pad:pad + out_len, :] - acc * (1.0 / k)).astype(o_ref.dtype)


def series_decomp_residual(x_blc, kernel):
    """Autoformer/MICN series_decomp seasonal part: x - moving_avg(x), odd kernel."""
    B, L, C = x_blc.shape
    assert kernel % 2 == 1, "decomp kernel must be odd"
    pad = (kernel - 1) // 2
    front = jnp.repeat(x_blc[:, :1, :], pad, axis=1)
    end = jnp.repeat(x_blc[:, -1:, :], pad, axis=1)
    xp = jnp.concatenate([front, x_blc, end], axis=1)        # (B, L + 2*pad, C)
    Lp = L + 2 * pad
    return pl.pallas_call(
        functools.partial(_decomp_kernel, k=kernel, pad=pad, out_len=L),
        grid=(B,),
        in_specs=[pl.BlockSpec((1, Lp, C), lambda b: (b, 0, 0))],
        out_specs=pl.BlockSpec((1, L, C), lambda b: (b, 0, 0)),
        out_shape=jax.ShapeDtypeStruct((B, L, C), jnp.float32),
        compiler_params=_cparams("parallel"),
    )(xp.astype(jnp.float32))


# ----------------------------------------------------------------------------
# Conv wrappers (channel-last; time-axis indexing is cheap, lane-preserving glue)
# ----------------------------------------------------------------------------
def downsample_conv_tanh(x_blc, weight, bias, k):
    """tanh(Conv1d(kernel=k, stride=k, padding=k//2)) in (B, L, C) layout.

    Because stride == kernel, the k taps partition the padded input, so the
    (k, B*Lc, C) tap stack carries no more bytes than the input itself and the
    feature axis stays on lanes (no (B, C, L) transposes, no im2col blow-up).
    """
    B, L, C = x_blc.shape
    pad = k // 2
    xp = jnp.pad(x_blc, ((0, 0), (pad, pad), (0, 0)))
    Lp = L + 2 * pad
    Lc = (Lp - k) // k + 1
    taps = [xp[:, j:j + (Lc - 1) * k + 1:k, :].reshape(B * Lc, C) for j in range(k)]
    x_taps = jnp.stack(taps, axis=0)                         # (k, B*Lc, C)
    w_taps = weight.transpose(2, 1, 0)                       # (k, Cin, Cout)
    y = tap_matmul(x_taps, w_taps, bias, apply_tanh=True)    # (B*Lc, Cout)
    return y.reshape(B, Lc, C)


def conv_transpose_tanh(x_blc, weight, bias, k):
    """tanh(ConvTranspose1d(kernel=k, stride=k, padding=0)); (B,Lc,C) -> (B,Lc*k,C).

    With stride == kernel every output step gets exactly one (t, tap)
    contribution, so the op is a single lane-dense (C -> k*C) matmul whose
    output reshapes straight back to channel-last.
    """
    B, Lc, Cin = x_blc.shape
    _, Cout, K = weight.shape                                # PyTorch: (Cin, Cout, K)
    w2 = weight.transpose(0, 2, 1).reshape(1, Cin, K * Cout)  # columns = (tap, cout)
    b2 = jnp.tile(bias, K)                                   # matches (tap, cout) order
    y = tap_matmul(x_blc.reshape(1, B * Lc, Cin), w2, b2, apply_tanh=True)
    return y.reshape(B, Lc * K, Cout)


# ----------------------------------------------------------------------------
# MIC layer / SeasonalPrediction forward
# ----------------------------------------------------------------------------
def conv_trans_conv(inp_blc, conv_w, conv_b, trans_w, trans_b, iso_w, iso_b,
                    norm_g, norm_b, k):
    B, L, C = inp_blc.shape
    # down-sampling conv + tanh (dropout p=0.05 is identity in eval mode)
    x1 = downsample_conv_tanh(inp_blc, conv_w, conv_b, k)             # (B, Lc, C)
    # fused: causal isometric conv + tanh + (xi + x1) + LayerNorm
    xn = isometric_conv_ln(x1, iso_w, iso_b, norm_g, norm_b)          # (B, Lc, C)
    # transposed conv (up-sample) + tanh, truncate to L
    xt = conv_transpose_tanh(xn, trans_w, trans_b, k)[:, :L, :]       # (B, L, C)
    # fused residual + LayerNorm
    out = add_layer_norm(xt.reshape(B * L, C), inp_blc.reshape(B * L, C),
                         norm_g, norm_b)
    return out.reshape(B, L, C)


def mic_forward(src, p):
    B, L, C = src.shape
    multi = []
    for i, k in enumerate(p["conv_kernel"]):
        s = series_decomp_residual(src, p["decomp_kernel"][i])
        s = conv_trans_conv(s, p["conv_w"][i], p["conv_b"][i],
                            p["trans_w"][i], p["trans_b"][i],
                            p["iso_w"][i], p["iso_b"][i],
                            p["norm_g"], p["norm_b"], k)
        multi.append(s.reshape(B * L, C))
    # merge: Conv2d(C, C, (nk, 1)) over the stacked branches == nk-tap matmul
    x_taps = jnp.stack(multi, axis=0)                                 # (nk, B*L, C)
    w_taps = p["merge_w"][:, :, :, 0].transpose(2, 1, 0)              # (nk, Cin, Cout)
    mg = tap_matmul(x_taps, w_taps, p["merge_b"])                     # (B*L, C)
    # fused: norm1 -> conv1 -> conv2 -> (+mg) -> norm2, single kernel
    return ffn_norm_block(mg, p).reshape(B, L, C)


def projection(dec_blc, proj_w, proj_b):
    """Final Linear(C -> c_out); c_out lane-padded to 128 inside the matmul so the
    kernel stores stay lane-dense, sliced back outside."""
    B, L, C = dec_blc.shape
    c_out = proj_w.shape[0]
    n_pad = _round_up(max(c_out, 128), 128)
    w = jnp.zeros((1, C, n_pad), jnp.float32).at[0, :, :c_out].set(proj_w.T)
    b = jnp.zeros((n_pad,), jnp.float32).at[:c_out].set(proj_b)
    y = tap_matmul(dec_blc.reshape(1, B * L, C), w, b)                # (B*L, n_pad)
    return y[:, :c_out].reshape(B, L, c_out)


def seasonal_prediction_forward(dec, params):
    for layer_p in params["mic_layers"]:
        dec = mic_forward(dec, layer_p)
    return projection(dec, params["proj_w"], params["proj_b"])


# ----------------------------------------------------------------------------
# Deterministic parameter init (synthetic; shapes follow the PyTorch __init__)
# ----------------------------------------------------------------------------
def init_params(key, C, c_out, d_layers, conv_kernel, decomp_kernel, iso_kernel):
    cnt = [0]

    def nrm(shape, scale=0.05):
        cnt[0] += 1
        return scale * jax.random.normal(jax.random.fold_in(key, cnt[0]), shape, jnp.float32)

    nk = len(conv_kernel)
    layers = []
    for _ in range(d_layers):
        layers.append(dict(
            conv_kernel=conv_kernel,
            decomp_kernel=decomp_kernel,
            conv_w=[nrm((C, C, k)) for k in conv_kernel],
            conv_b=[nrm((C,)) for _ in conv_kernel],
            trans_w=[nrm((C, C, k)) for k in conv_kernel],       # ConvTranspose1d: (Cin, Cout, K)
            trans_b=[nrm((C,)) for _ in conv_kernel],
            iso_w=[nrm((C, C, ik)) for ik in iso_kernel],
            iso_b=[nrm((C,)) for _ in iso_kernel],
            norm_g=jnp.ones((C,), jnp.float32), norm_b=jnp.zeros((C,), jnp.float32),
            merge_w=nrm((C, C, nk, 1)), merge_b=nrm((C,)),
            conv1_w=nrm((4 * C, C, 1)), conv1_b=nrm((4 * C,)),
            conv2_w=nrm((C, 4 * C, 1)), conv2_b=nrm((C,)),
            norm1_g=jnp.ones((C,), jnp.float32), norm1_b=jnp.zeros((C,), jnp.float32),
            norm2_g=jnp.ones((C,), jnp.float32), norm2_b=jnp.zeros((C,), jnp.float32),
        ))
    return dict(mic_layers=layers, proj_w=nrm((c_out, C)), proj_b=nrm((c_out,)))


# ----------------------------------------------------------------------------
if __name__ == "__main__":
    # Small, self-consistent config:
    #   embedding_size C = 32, seq len L = 16, batch B = 2, c_out = 1, d_layers = 1
    #   conv_kernel = (2, 4); decomp kernels must be odd -> (3, 5);
    #   isometric kernel = down-sampled length per branch (MICN's construction).
    B, L, C, c_out = 2, 16, 32, 1
    conv_kernel = (2, 4)
    decomp_kernel = (3, 5)
    iso_kernel = tuple((L + 2 * (k // 2) - k) // k + 1 for k in conv_kernel)  # (9, 5)

    key = jax.random.PRNGKey(0)
    k_in, k_par = jax.random.split(key)
    dec = jax.random.normal(k_in, (B, L, C), jnp.float32)
    params = init_params(k_par, C, c_out, d_layers=1, conv_kernel=conv_kernel,
                         decomp_kernel=decomp_kernel, iso_kernel=iso_kernel)

    fwd = jax.jit(lambda d: seasonal_prediction_forward(d, params))
    out = jax.block_until_ready(fwd(dec))
    assert out.shape == (B, L, c_out), out.shape
    assert bool(jnp.all(jnp.isfinite(out)))
    print("KERNEL_OK")
</pallas_src>

<mosaic_0001>
module attributes {stable_mosaic.version = 11 : i64} {
  func.func @_decomp_kernel(%arg0: i32, %arg1: memref<1x20x32xf32, #tpu.memory_space<vmem>>, %arg2: memref<1x16x32xf32, #tpu.memory_space<vmem>>) attributes {dimension_semantics = [#tpu.dimension_semantics<parallel>], iteration_bounds = array<i64: 2>, scalar_prefetch = 0 : i64, scratch_operands = 0 : i64, tpu.core_type = #tpu.core_type<tc>, window_params = [{transform_indices = @transform_0, window_bounds = array<i64: 1, 20, 32>}, {transform_indices = @transform_1, window_bounds = array<i64: 1, 16, 32>}]} {
    %c0 = arith.constant 0 : index
    %c0_0 = arith.constant 0 : index
    %c0_1 = arith.constant 0 : index
    %0 = vector.load %arg1[%c0, %c0_0, %c0_1] : memref<1x20x32xf32, #tpu.memory_space<vmem>>, vector<1x20x32xf32>
    %1 = vector.shape_cast %0 : vector<1x20x32xf32> to vector<20x32xf32>
    %2 = vector.extract_strided_slice %1 {offsets = [0, 0], sizes = [16, 32], strides = [1, 1]} : vector<20x32xf32> to vector<16x32xf32>
    %3 = vector.extract_strided_slice %1 {offsets = [1, 0], sizes = [16, 32], strides = [1, 1]} : vector<20x32xf32> to vector<16x32xf32>
    %4 = arith.addf %2, %3 : vector<16x32xf32>
    %5 = vector.extract_strided_slice %1 {offsets = [2, 0], sizes = [16, 32], strides = [1, 1]} : vector<20x32xf32> to vector<16x32xf32>
    %6 = arith.addf %4, %5 : vector<16x32xf32>
    %7 = vector.extract_strided_slice %1 {offsets = [3, 0], sizes = [16, 32], strides = [1, 1]} : vector<20x32xf32> to vector<16x32xf32>
    %8 = arith.addf %6, %7 : vector<16x32xf32>
    %9 = vector.extract_strided_slice %1 {offsets = [4, 0], sizes = [16, 32], strides = [1, 1]} : vector<20x32xf32> to vector<16x32xf32>
    %10 = arith.addf %8, %9 : vector<16x32xf32>
    %11 = vector.extract_strided_slice %1 {offsets = [2, 0], sizes = [16, 32], strides = [1, 1]} : vector<20x32xf32> to vector<16x32xf32>
    %cst = arith.constant 2.000000e-01 : f32
    %12 = vector.broadcast %cst : f32 to vector<16x32xf32>
    %13 = arith.mulf %10, %12 : vector<16x32xf32>
    %14 = arith.subf %11, %13 : vector<16x32xf32>
    %c0_2 = arith.constant 0 : index
    %c0_3 = arith.constant 0 : index
    %c0_4 = arith.constant 0 : index
    %15 = vector.load %arg2[%c0_2, %c0_3, %c0_4] : memref<1x16x32xf32, #tpu.memory_space<vmem>>, vector<1x16x32xf32>
    %16 = vector.shape_cast %15 : vector<1x16x32xf32> to vector<16x32xf32>
    %17 = vector.shape_cast %14 : vector<16x32xf32> to vector<1x16x32xf32>
    tpu.vector_store %arg2[%c0_2, %c0_3, %c0_4], %17 {strides = array<i32>} : memref<1x16x32xf32, #tpu.memory_space<vmem>>, vector<1x16x32xf32>,
    return
  }
  func.func @transform_0(%arg0: i32) -> (i32, i32, i32) {
    %c0_i32 = arith.constant 0 : i32
    %c0_i32_0 = arith.constant 0 : i32
    %c0_i32_1 = arith.constant 0 : i32
    return %arg0, %c0_i32, %c0_i32_0 : i32, i32, i32
  }
  func.func @transform_1(%arg0: i32) -> (i32, i32, i32) {
    %c0_i32 = arith.constant 0 : i32
    %c0_i32_0 = arith.constant 0 : i32
    %c0_i32_1 = arith.constant 0 : i32
    return %arg0, %c0_i32, %c0_i32_0 : i32, i32, i32
  }
}

module attributes {stable_mosaic.version = 11 : i64} {
  func.func @_tap_matmul_kernel(%arg0: i32, %arg1: i32, %arg2: memref<1x16x32xf32, #tpu.memory_space<vmem>>, %arg3: memref<1x32x32xf32, #tpu.memory_space<vmem>>, %arg4: memref<1x32xf32, #tpu.memory_space<vmem>>, %arg5: memref<16x32xf32, #tpu.memory_space<vmem>>, %arg6: memref<16x32xf32, #tpu.memory_space<vmem>>) attributes {dimension_semantics = [#tpu.dimension_semantics<parallel>, #tpu.dimension_semantics<arbitrary>], iteration_bounds = array<i64: 1, 4>, scalar_prefetch = 0 : i64, scratch_operands = 1 : i64, tpu.core_type = #tpu.core_type<tc>, window_params = [{transform_indices = @transform_0, window_bounds = array<i64: 1, 16, 32>}, {transform_indices = @transform_1, window_bounds = array<i64: 1, 32, 32>}, {pipeline_mode = #tpu.pipeline_mode<synchronous>, transform_indices = @transform_2, window_bounds = array<i64: 1, 32>}, {transform_indices = @transform_3, window_bounds = array<i64: 16, 32>}]} {
    %c0_i32 = arith.constant 0 : i32
    %0 = arith.cmpi eq, %arg1, %c0_i32 : i32
    %1 = arith.extui %0 : i1 to i32
    %c0_i32_0 = arith.constant 0 : i32
    %2 = arith.cmpi ne, %1, %c0_i32_0 : i32
    scf.if %2 {
      %cst_11 = arith.constant 0.000000e+00 : f32
      %14 = vector.broadcast %cst_11 : f32 to vector<16x32xf32>
      %c0_12 = arith.constant 0 : index
      %c0_13 = arith.constant 0 : index
      %15 = vector.load %arg6[%c0_12, %c0_13] : memref<16x32xf32, #tpu.memory_space<vmem>>, vector<16x32xf32>
      tpu.vector_store %arg6[%c0_12, %c0_13], %14 {strides = array<i32>} : memref<16x32xf32, #tpu.memory_space<vmem>>, vector<16x32xf32>,
    } else {
    }
    %c0 = arith.constant 0 : index
    %c0_1 = arith.constant 0 : index
    %3 = vector.load %arg6[%c0, %c0_1] : memref<16x32xf32, #tpu.memory_space<vmem>>, vector<16x32xf32>
    %c0_2 = arith.constant 0 : index
    %c0_3 = arith.constant 0 : index
    %c0_4 = arith.constant 0 : index
    %4 = vector.load %arg2[%c0_2, %c0_3, %c0_4] : memref<1x16x32xf32, #tpu.memory_space<vmem>>, vector<1x16x32xf32>
    %5 = vector.shape_cast %4 : vector<1x16x32xf32> to vector<16x32xf32>
    %c0_5 = arith.constant 0 : index
    %c0_6 = arith.constant 0 : index
    %c0_7 = arith.constant 0 : index
    %6 = vector.load %arg3[%c0_5, %c0_6, %c0_7] : memref<1x32x32xf32, #tpu.memory_space<vmem>>, vector<1x32x32xf32>
    %7 = vector.shape_cast %6 : vector<1x32x32xf32> to vector<32x32xf32>
    %cst = arith.constant dense<0.000000e+00> : vector<16x32xf32>
    %8 = tpu.matmul %5, %7, %cst {dimension_numbers = #tpu.dot_dimension_numbers<[1], [0], [0], [1], [0, 0, 1, 1], [], []>} : vector<16x32xf32>, vector<32x32xf32>, vector<16x32xf32> -> vector<16x32xf32>
    %9 = arith.addf %3, %8 : vector<16x32xf32>
    %c0_8 = arith.constant 0 : index
    %c0_9 = arith.constant 0 : index
    %10 = vector.load %arg6[%c0_8, %c0_9] : memref<16x32xf32, #tpu.memory_space<vmem>>, vector<16x32xf32>
    tpu.vector_store %arg6[%c0_8, %c0_9], %9 {strides = array<i32>} : memref<16x32xf32, #tpu.memory_space<vmem>>, vector<16x32xf32>,
    %c3_i32 = arith.constant 3 : i32
    %11 = arith.cmpi eq, %arg1, %c3_i32 : i32
    %12 = arith.extui %11 : i1 to i32
    %c0_i32_10 = arith.constant 0 : i32
    %13 = arith.cmpi ne, %12, %c0_i32_10 : i32
    scf.if %13 {
      %c0_11 = arith.constant 0 : index
      %c0_12 = arith.constant 0 : index
      %14 = vector.load %arg6[%c0_11, %c0_12] : memref<16x32xf32, #tpu.memory_space<vmem>>, vector<16x32xf32>
      %c0_13 = arith.constant 0 : index
      %c0_14 = arith.constant 0 : index
      %15 = vector.load %arg4[%c0_13, %c0_14] : memref<1x32xf32, #tpu.memory_space<vmem>>, vector<1x32xf32>
      %16 = vector.broadcast %15 : vector<1x32xf32> to vector<16x32xf32>
      %17 = arith.addf %14, %16 : vector<16x32xf32>
      %18 = math.tanh %17 : vector<16x32xf32>
      %c0_15 = arith.constant 0 : index
      %c0_16 = arith.constant 0 : index
      %19 = vector.load %arg5[%c0_15, %c0_16] : memref<16x32xf32, #tpu.memory_space<vmem>>, vector<16x32xf32>
      tpu.vector_store %arg5[%c0_15, %c0_16], %18 {strides = array<i32>} : memref<16x32xf32, #tpu.memory_space<vmem>>, vector<16x32xf32>,
    } else {
    }
    return
  }
  func.func @transform_0(%arg0: i32, %arg1: i32) -> (i32, i32, i32) {
    %c0_i32 = arith.constant 0 : i32
    %c0_i32_0 = arith.constant 0 : i32
    return %arg1, %arg0, %c0_i32 : i32, i32, i32
  }
  func.func @transform_1(%arg0: i32, %arg1: i32) -> (i32, i32, i32) {
    %c0_i32 = arith.constant 0 : i32
    %c0_i32_0 = arith.constant 0 : i32
    %c0_i32_1 = arith.constant 0 : i32
    return %arg1, %c0_i32, %c0_i32_0 : i32, i32, i32
  }
  func.func @transform_2(%arg0: i32, %arg1: i32) -> (i32, i32) {
    %c0_i32 = arith.constant 0 : i32
    %c0_i32_0 = arith.constant 0 : i32
    %c0_i32_1 = arith.constant 0 : i32
    return %c0_i32, %c0_i32_0 : i32, i32
  }
  func.func @transform_3(%arg0: i32, %arg1: i32) -> (i32, i32) {
    %c0_i32 = arith.constant 0 : i32
    %c0_i32_0 = arith.constant 0 : i32
    return %arg0, %c0_i32 : i32, i32
  }
}

module attributes {stable_mosaic.version = 11 : i64} {
  func.func @_isometric_kernel(%arg0: i32, %arg1: memref<1x5x32xf32, #tpu.memory_space<vmem>>, %arg2: memref<5x32x32xf32, #tpu.memory_space<vmem>>, %arg3: memref<1x32xf32, #tpu.memory_space<vmem>>, %arg4: memref<1x32xf32, #tpu.memory_space<vmem>>, %arg5: memref<1x32xf32, #tpu.memory_space<vmem>>, %arg6: memref<1x5x32xf32, #tpu.memory_space<vmem>>, %arg7: memref<5x32xf32, #tpu.memory_space<vmem>>) attributes {dimension_semantics = [#tpu.dimension_semantics<parallel>], iteration_bounds = array<i64: 2>, scalar_prefetch = 0 : i64, scratch_operands = 1 : i64, tpu.core_type = #tpu.core_type<tc>, window_params = [{transform_indices = @transform_0, window_bounds = array<i64: 1, 5, 32>}, {pipeline_mode = #tpu.pipeline_mode<synchronous>, transform_indices = @transform_1, window_bounds = array<i64: 5, 32, 32>}, {pipeline_mode = #tpu.pipeline_mode<synchronous>, transform_indices = @transform_2, window_bounds = array<i64: 1, 32>}, {pipeline_mode = #tpu.pipeline_mode<synchronous>, transform_indices = @transform_3, window_bounds = array<i64: 1, 32>}, {pipeline_mode = #tpu.pipeline_mode<synchronous>, transform_indices = @transform_4, window_bounds = array<i64: 1, 32>}, {transform_indices = @transform_5, window_bounds = array<i64: 1, 5, 32>}]} {
    %c0 = arith.constant 0 : index
    %c0_0 = arith.constant 0 : index
    %c0_1 = arith.constant 0 : index
    %0 = vector.load %arg1[%c0, %c0_0, %c0_1] : memref<1x5x32xf32, #tpu.memory_space<vmem>>, vector<1x5x32xf32>
    %1 = vector.shape_cast %0 : vector<1x5x32xf32> to vector<5x32xf32>
    %cst = arith.constant 0.000000e+00 : f32
    %2 = vector.broadcast %cst : f32 to vector<5x32xf32>
    %c0_2 = arith.constant 0 : index
    %c0_3 = arith.constant 0 : index
    %3 = vector.load %arg7[%c0_2, %c0_3] : memref<5x32xf32, #tpu.memory_space<vmem>>, vector<5x32xf32>
    tpu.vector_store %arg7[%c0_2, %c0_3], %2 {strides = array<i32>} : memref<5x32xf32, #tpu.memory_space<vmem>>, vector<5x32xf32>,
    %4 = vector.extract_strided_slice %1 {offsets = [0, 0], sizes = [1, 32], strides = [1, 1]} : vector<5x32xf32> to vector<1x32xf32>
    %c0_4 = arith.constant 0 : index
    %c0_5 = arith.constant 0 : index
    %c0_6 = arith.constant 0 : index
    %5 = vector.load %arg2[%c0_4, %c0_5, %c0_6] : memref<5x32x32xf32, #tpu.memory_space<vmem>>, vector<1x32x32xf32>
    %6 = vector.shape_cast %5 : vector<1x32x32xf32> to vector<32x32xf32>
    %cst_7 = arith.constant dense<0.000000e+00> : vector<1x32xf32>
    %7 = tpu.matmul %4, %6, %cst_7 {dimension_numbers = #tpu.dot_dimension_numbers<[1], [0], [0], [1], [0, 0, 1, 1], [], []>} : vector<1x32xf32>, vector<32x32xf32>, vector<1x32xf32> -> vector<1x32xf32>
    %c4 = arith.constant 4 : index
    %c0_8 = arith.constant 0 : index
    %8 = vector.load %arg7[%c4, %c0_8] : memref<5x32xf32, #tpu.memory_space<vmem>>, vector<1x32xf32>
    %9 = arith.addf %8, %7 : vector<1x32xf32>
    %c4_9 = arith.constant 4 : index
    %c0_10 = arith.constant 0 : index
    %10 = vector.load %arg7[%c4_9, %c0_10] : memref<5x32xf32, #tpu.memory_space<vmem>>, vector<1x32xf32>
    tpu.vector_store %arg7[%c4_9, %c0_10], %9 {strides = array<i32>} : memref<5x32xf32, #tpu.memory_space<vmem>>, vector<1x32xf32>,
    %11 = vector.extract_strided_slice %1 {offsets = [0, 0], sizes = [2, 32], strides = [1, 1]} : vector<5x32xf32> to vector<2x32xf32>
    %c1 = arith.constant 1 : index
    %c0_11 = arith.constant 0 : index
    %c0_12 = arith.constant 0 : index
    %12 = vector.load %arg2[%c1, %c0_11, %c0_12] : memref<5x32x32xf32, #tpu.memory_space<vmem>>, vector<1x32x32xf32>
    %13 = vector.shape_cast %12 : vector<1x32x32xf32> to vector<32x32xf32>
    %cst_13 = arith.constant dense<0.000000e+00> : vector<2x32xf32>
    %14 = tpu.matmul %11, %13, %cst_13 {dimension_numbers = #tpu.dot_dimension_numbers<[1], [0], [0], [1], [0, 0, 1, 1], [], []>} : vector<2x32xf32>, vector<32x32xf32>, vector<2x32xf32> -> vector<2x32xf32>
    %c3 = arith.constant 3 : index
    %c0_14 = arith.constant 0 : index
    %15 = vector.load %arg7[%c3, %c0_14] : memref<5x32xf32, #tpu.memory_space<vmem>>, vector<2x32xf32>
    %16 = arith.addf %15, %14 : vector<2x32xf32>
    %c3_15 = arith.constant 3 : index
    %c0_16 = arith.constant 0 : index
    %17 = vector.load %arg7[%c3_15, %c0_16] : memref<5x32xf32, #tpu.memory_space<vmem>>, vector<2x32xf32>
    tpu.vector_store %arg7[%c3_15, %c0_16], %16 {strides = array<i32>} : memref<5x32xf32, #tpu.memory_space<vmem>>, vector<2x32xf32>,
    %18 = vector.extract_strided_slice %1 {offsets = [0, 0], sizes = [3, 32], strides = [1, 1]} : vector<5x32xf32> to vector<3x32xf32>
    %c2 = arith.constant 2 : index
    %c0_17 = arith.constant 0 : index
    %c0_18 = arith.constant 0 : index
    %19 = vector.load %arg2[%c2, %c0_17, %c0_18] : memref<5x32x32xf32, #tpu.memory_space<vmem>>, vector<1x32x32xf32>
    %20 = vector.shape_cast %19 : vector<1x32x32xf32> to vector<32x32xf32>
    %cst_19 = arith.constant dense<0.000000e+00> : vector<3x32xf32>
    %21 = tpu.matmul %18, %20, %cst_19 {dimension_numbers = #tpu.dot_dimension_numbers<[1], [0], [0], [1], [0, 0, 1, 1], [], []>} : vector<3x32xf32>, vector<32x32xf32>, vector<3x32xf32> -> vector<3x32xf32>
    %c2_20 = arith.constant 2 : index
    %c0_21 = arith.constant 0 : index
    %22 = vector.load %arg7[%c2_20, %c0_21] : memref<5x32xf32, #tpu.memory_space<vmem>>, vector<3x32xf32>
    %23 = arith.addf %22, %21 : vector<3x32xf32>
    %c2_22 = arith.constant 2 : index
    %c0_23 = arith.constant 0 : index
    %24 = vector.load %arg7[%c2_22, %c0_23] : memref<5x32xf32, #tpu.memory_space<vmem>>, vector<3x32xf32>
    tpu.vector_store %arg7[%c2_22, %c0_23], %23 {strides = array<i32>} : memref<5x32xf32, #tpu.memory_space<vmem>>, vector<3x32xf32>,
    %25 = vector.extract_strided_slice %1 {offsets = [0, 0], sizes = [4, 32], strides = [1, 1]} : vector<5x32xf32> to vector<4x32xf32>
    %c3_24 = arith.constant 3 : index
    %c0_25 = arith.constant 0 : index
    %c0_26 = arith.constant 0 : index
    %26 = vector.load %arg2[%c3_24, %c0_25, %c0_26] : memref<5x32x32xf32, #tpu.memory_space<vmem>>, vector<1x32x32xf32>
    %27 = vector.shape_cast %26 : vector<1x32x32xf32> to vector<32x32xf32>
    %cst_27 = arith.constant dense<0.000000e+00> : vector<4x32xf32>
    %28 = tpu.matmul %25, %27, %cst_27 {dimension_numbers = #tpu.dot_dimension_numbers<[1], [0], [0], [1], [0, 0, 1, 1], [], []>} : vector<4x32xf32>, vector<32x32xf32>, vector<4x32xf32> -> vector<4x32xf32>
    %c1_28 = arith.constant 1 : index
    %c0_29 = arith.constant 0 : index
    %29 = vector.load %arg7[%c1_28, %c0_29] : memref<5x32xf32, #tpu.memory_space<vmem>>, vector<4x32xf32>
    %30 = arith.addf %29, %28 : vector<4x32xf32>
    %c1_30 = arith.constant 1 : index
    %c0_31 = arith.constant 0 : index
    %31 = vector.load %arg7[%c1_30, %c0_31] : memref<5x32xf32, #tpu.memory_space<vmem>>, vector<4x32xf32>
    tpu.vector_store %arg7[%c1_30, %c0_31], %30 {strides = array<i32>} : memref<5x32xf32, #tpu.memory_space<vmem>>, vector<4x32xf32>,
    %c4_32 = arith.constant 4 : index
    %c0_33 = arith.constant 0 : index
    %c0_34 = arith.constant 0 : index
    %32 = vector.load %arg2[%c4_32, %c0_33, %c0_34] : memref<5x32x32xf32, #tpu.memory_space<vmem>>, vector<1x32x32xf32>
    %33 = vector.shape_cast %32 : vector<1x32x32xf32> to vector<32x32xf32>
    %cst_35 = arith.constant dense<0.000000e+00> : vector<5x32xf32>
    %34 = tpu.matmul %1, %33, %cst_35 {dimension_numbers = #tpu.dot_dimension_numbers<[1], [0], [0], [1], [0, 0, 1, 1], [], []>} : vector<5x32xf32>, vector<32x32xf32>, vector<5x32xf32> -> vector<5x32xf32>
    %c0_36 = arith.constant 0 : index
    %c0_37 = arith.constant 0 : index
    %35 = vector.load %arg7[%c0_36, %c0_37] : memref<5x32xf32, #tpu.memory_space<vmem>>, vector<5x32xf32>
    %36 = arith.addf %35, %34 : vector<5x32xf32>
    %c0_38 = arith.constant 0 : index
    %c0_39 = arith.constant 0 : index
    %37 = vector.load %arg7[%c0_38, %c0_39] : memref<5x32xf32, #tpu.memory_space<vmem>>, vector<5x32xf32>
    tpu.vector_store %arg7[%c0_38, %c0_39], %36 {strides = array<i32>} : memref<5x32xf32, #tpu.memory_space<vmem>>, vector<5x32xf32>,
    %c0_40 = arith.constant 0 : index
    %c0_41 = arith.constant 0 : index
    %38 = vector.load %arg7[%c0_40, %c0_41] : memref<5x32xf32, #tpu.memory_space<vmem>>, vector<5x32xf32>
    %c0_42 = arith.constant 0 : index
    %c0_43 = arith.constant 0 : index
    %39 = vector.load %arg3[%c0_42, %c0_43] : memref<1x32xf32, #tpu.memory_space<vmem>>, vector<1x32xf32>
    %40 = vector.broadcast %39 : vector<1x32xf32> to vector<5x32xf32>
    %41 = arith.addf %38, %40 : vector<5x32xf32>
    %42 = math.tanh %41 : vector<5x32xf32>
    %43 = arith.addf %42, %1 : vector<5x32xf32>
    %c0_44 = arith.constant 0 : index
    %c0_45 = arith.constant 0 : index
    %44 = vector.load %arg4[%c0_44, %c0_45] : memref<1x32xf32, #tpu.memory_space<vmem>>, vector<1x32xf32>
    %c0_46 = arith.constant 0 : index
    %c0_47 = arith.constant 0 : index
    %45 = vector.load %arg5[%c0_46, %c0_47] : memref<1x32xf32, #tpu.memory_space<vmem>>, vector<1x32xf32>
    %cst_48 = arith.constant dense<0.000000e+00> : vector<5xf32>
    %46 = vector.multi_reduction <add>, %43, %cst_48 [1] : vector<5x32xf32> to vector<5xf32>
    %47 = vector.shape_cast %46 : vector<5xf32> to vector<5x1xf32>
    %cst_49 = arith.constant 3.200000e+01 : f32
    %48 = vector.broadcast %cst_49 : f32 to vector<5x1xf32>
    %49 = arith.divf %47, %48 : vector<5x1xf32>
    %50 = vector.broadcast %49 : vector<5x1xf32> to vector<5x32xf32>
    %51 = arith.subf %43, %50 : vector<5x32xf32>
    %52 = arith.mulf %51, %51 : vector<5x32xf32>
    %cst_50 = arith.constant dense<0.000000e+00> : vector<5xf32>
    %53 = vector.multi_reduction <add>, %52, %cst_50 [1] : vector<5x32xf32> to vector<5xf32>
    %54 = vector.shape_cast %53 : vector<5xf32> to vector<5x1xf32>
    %cst_51 = arith.constant 3.200000e+01 : f32
    %55 = vector.broadcast %cst_51 : f32 to vector<5x1xf32>
    %56 = arith.divf %54, %55 : vector<5x1xf32>
    %cst_52 = arith.constant 9.99999974E-6 : f32
    %57 = vector.broadcast %cst_52 : f32 to vector<5x1xf32>
    %58 = arith.addf %56, %57 : vector<5x1xf32>
    %59 = math.rsqrt %58 : vector<5x1xf32>
    %60 = vector.broadcast %59 : vector<5x1xf32> to vector<5x32xf32>
    %61 = arith.mulf %51, %60 : vector<5x32xf32>
    %62 = vector.broadcast %44 : vector<1x32xf32> to vector<5x32xf32>
    %63 = arith.mulf %61, %62 : vector<5x32xf32>
    %64 = vector.broadcast %45 : vector<1x32xf32> to vector<5x32xf32>
    %65 = arith.addf %63, %64 : vector<5x32xf32>
    %c0_53 = arith.constant 0 : index
    %c0_54 = arith.constant 0 : index
    %c0_55 = arith.constant 0 : index
    %66 = vector.load %arg6[%c0_53, %c0_54, %c0_55] : memref<1x5x32xf32, #tpu.memory_space<vmem>>, vector<1x5x32xf32>
    %67 = vector.shape_cast %66 : vector<1x5x32xf32> to vector<5x32xf32>
    %68 = vector.shape_cast %65 : vector<5x32xf32> to vector<1x5x32xf32>
    tpu.vector_store %arg6[%c0_53, %c0_54, %c0_55], %68 {strides = array<i32>} : memref<1x5x32xf32, #tpu.memory_space<vmem>>, vector<1x5x32xf32>,
    return
  }
  func.func @transform_0(%arg0: i32) -> (i32, i32, i32) {
    %c0_i32 = arith.constant 0 : i32
    %c0_i32_0 = arith.constant 0 : i32
    %c0_i32_1 = arith.constant 0 : i32
    return %arg0, %c0_i32, %c0_i32_0 : i32, i32, i32
  }
  func.func @transform_1(%arg0: i32) -> (i32, i32, i32) {
    %c0_i32 = arith.constant 0 : i32
    %c0_i32_0 = arith.constant 0 : i32
    %c0_i32_1 = arith.constant 0 : i32
    %c0_i32_2 = arith.constant 0 : i32
    return %c0_i32, %c0_i32_0, %c0_i32_1 : i32, i32, i32
  }
  func.func @transform_2(%arg0: i32) -> (i32, i32) {
    %c0_i32 = arith.constant 0 : i32
    %c0_i32_0 = arith.constant 0 : i32
    %c0_i32_1 = arith.constant 0 : i32
    return %c0_i32, %c0_i32_0 : i32, i32
  }
  func.func @transform_3(%arg0: i32) -> (i32, i32) {
    %c0_i32 = arith.constant 0 : i32
    %c0_i32_0 = arith.constant 0 : i32
    %c0_i32_1 = arith.constant 0 : i32
    return %c0_i32, %c0_i32_0 : i32, i32
  }
  func.func @transform_4(%arg0: i32) -> (i32, i32) {
    %c0_i32 = arith.constant 0 : i32
    %c0_i32_0 = arith.constant 0 : i32
    %c0_i32_1 = arith.constant 0 : i32
    return %c0_i32, %c0_i32_0 : i32, i32
  }
  func.func @transform_5(%arg0: i32) -> (i32, i32, i32) {
    %c0_i32 = arith.constant 0 : i32
    %c0_i32_0 = arith.constant 0 : i32
    %c0_i32_1 = arith.constant 0 : i32
    return %arg0, %c0_i32, %c0_i32_0 : i32, i32, i32
  }
}

module attributes {stable_mosaic.version = 11 : i64} {
  func.func @_tap_matmul_kernel(%arg0: i32, %arg1: i32, %arg2: memref<1x16x32xf32, #tpu.memory_space<vmem>>, %arg3: memref<1x32x128xf32, #tpu.memory_space<vmem>>, %arg4: memref<1x128xf32, #tpu.memory_space<vmem>>, %arg5: memref<16x128xf32, #tpu.memory_space<vmem>>, %arg6: memref<16x128xf32, #tpu.memory_space<vmem>>) attributes {dimension_semantics = [#tpu.dimension_semantics<parallel>, #tpu.dimension_semantics<arbitrary>], iteration_bounds = array<i64: 1, 1>, scalar_prefetch = 0 : i64, scratch_operands = 1 : i64, tpu.core_type = #tpu.core_type<tc>, window_params = [{transform_indices = @transform_0, window_bounds = array<i64: 1, 16, 32>}, {transform_indices = @transform_1, window_bounds = array<i64: 1, 32, 128>}, {pipeline_mode = #tpu.pipeline_mode<synchronous>, transform_indices = @transform_2, window_bounds = array<i64: 1, 128>}, {transform_indices = @transform_3, window_bounds = array<i64: 16, 128>}]} {
    %c0_i32 = arith.constant 0 : i32
    %0 = arith.cmpi eq, %arg1, %c0_i32 : i32
    %1 = arith.extui %0 : i1 to i32
    %c0_i32_0 = arith.constant 0 : i32
    %2 = arith.cmpi ne, %1, %c0_i32_0 : i32
    scf.if %2 {
      %cst_12 = arith.constant 0.000000e+00 : f32
      %14 = vector.broadcast %cst_12 : f32 to vector<16x128xf32>
      %c0_13 = arith.constant 0 : index
      %c0_14 = arith.constant 0 : index
      %15 = vector.load %arg6[%c0_13, %c0_14] : memref<16x128xf32, #tpu.memory_space<vmem>>, vector<16x128xf32>
      tpu.vector_store %arg6[%c0_13, %c0_14], %14 {strides = array<i32>} : memref<16x128xf32, #tpu.memory_space<vmem>>, vector<16x128xf32>,
    } else {
    }
    %c0 = arith.constant 0 : index
    %c0_1 = arith.constant 0 : index
    %3 = vector.load %arg6[%c0, %c0_1] : memref<16x128xf32, #tpu.memory_space<vmem>>, vector<16x128xf32>
    %c0_2 = arith.constant 0 : index
    %c0_3 = arith.constant 0 : index
    %c0_4 = arith.constant 0 : index
    %4 = vector.load %arg2[%c0_2, %c0_3, %c0_4] : memref<1x16x32xf32, #tpu.memory_space<vmem>>, vector<1x16x32xf32>
    %5 = vector.shape_cast %4 : vector<1x16x32xf32> to vector<16x32xf32>
    %c0_5 = arith.constant 0 : index
    %c0_6 = arith.constant 0 : index
    %c0_7 = arith.constant 0 : index
    %6 = vector.load %arg3[%c0_5, %c0_6, %c0_7] : memref<1x32x128xf32, #tpu.memory_space<vmem>>, vector<1x32x128xf32>
    %7 = vector.shape_cast %6 : vector<1x32x128xf32> to vector<32x128xf32>
    %cst = arith.constant dense<0.000000e+00> : vector<16x128xf32>
    %8 = tpu.matmul %5, %7, %cst {dimension_numbers = #tpu.dot_dimension_numbers<[1], [0], [0], [1], [0, 0, 1, 1], [], []>} : vector<16x32xf32>, vector<32x128xf32>, vector<16x128xf32> -> vector<16x128xf32>
    %9 = arith.addf %3, %8 : vector<16x128xf32>
    %c0_8 = arith.constant 0 : index
    %c0_9 = arith.constant 0 : index
    %10 = vector.load %arg6[%c0_8, %c0_9] : memref<16x128xf32, #tpu.memory_space<vmem>>, vector<16x128xf32>
    tpu.vector_store %arg6[%c0_8, %c0_9], %9 {strides = array<i32>} : memref<16x128xf32, #tpu.memory_space<vmem>>, vector<16x128xf32>,
    %c0_i32_10 = arith.constant 0 : i32
    %11 = arith.cmpi eq, %arg1, %c0_i32_10 : i32
    %12 = arith.extui %11 : i1 to i32
    %c0_i32_11 = arith.constant 0 : i32
    %13 = arith.cmpi ne, %12, %c0_i32_11 : i32
    scf.if %13 {
      %c0_12 = arith.constant 0 : index
      %c0_13 = arith.constant 0 : index
      %14 = vector.load %arg6[%c0_12, %c0_13] : memref<16x128xf32, #tpu.memory_space<vmem>>, vector<16x128xf32>
      %c0_14 = arith.constant 0 : index
      %c0_15 = arith.constant 0 : index
      %15 = vector.load %arg4[%c0_14, %c0_15] : memref<1x128xf32, #tpu.memory_space<vmem>>, vector<1x128xf32>
      %16 = vector.broadcast %15 : vector<1x128xf32> to vector<16x128xf32>
      %17 = arith.addf %14, %16 : vector<16x128xf32>
      %18 = math.tanh %17 : vector<16x128xf32>
      %c0_16 = arith.constant 0 : index
      %c0_17 = arith.constant 0 : index
      %19 = vector.load %arg5[%c0_16, %c0_17] : memref<16x128xf32, #tpu.memory_space<vmem>>, vector<16x128xf32>
      tpu.vector_store %arg5[%c0_16, %c0_17], %18 {strides = array<i32>} : memref<16x128xf32, #tpu.memory_space<vmem>>, vector<16x128xf32>,
    } else {
    }
    return
  }
  func.func @transform_0(%arg0: i32, %arg1: i32) -> (i32, i32, i32) {
    %c0_i32 = arith.constant 0 : i32
    %c0_i32_0 = arith.constant 0 : i32
    return %arg1, %arg0, %c0_i32 : i32, i32, i32
  }
  func.func @transform_1(%arg0: i32, %arg1: i32) -> (i32, i32, i32) {
    %c0_i32 = arith.constant 0 : i32
    %c0_i32_0 = arith.constant 0 : i32
    %c0_i32_1 = arith.constant 0 : i32
    return %arg1, %c0_i32, %c0_i32_0 : i32, i32, i32
  }
  func.func @transform_2(%arg0: i32, %arg1: i32) -> (i32, i32) {
    %c0_i32 = arith.constant 0 : i32
    %c0_i32_0 = arith.constant 0 : i32
    %c0_i32_1 = arith.constant 0 : i32
    return %c0_i32, %c0_i32_0 : i32, i32
  }
  func.func @transform_3(%arg0: i32, %arg1: i32) -> (i32, i32) {
    %c0_i32 = arith.constant 0 : i32
    %c0_i32_0 = arith.constant 0 : i32
    return %arg0, %c0_i32 : i32, i32
  }
}

module attributes {stable_mosaic.version = 11 : i64} {
  func.func @_add_ln_kernel(%arg0: i32, %arg1: memref<32x32xf32, #tpu.memory_space<vmem>>, %arg2: memref<32x32xf32, #tpu.memory_space<vmem>>, %arg3: memref<1x32xf32, #tpu.memory_space<vmem>>, %arg4: memref<1x32xf32, #tpu.memory_space<vmem>>, %arg5: memref<32x32xf32, #tpu.memory_space<vmem>>) attributes {dimension_semantics = [#tpu.dimension_semantics<parallel>], iteration_bounds = array<i64: 1>, scalar_prefetch = 0 : i64, scratch_operands = 0 : i64, tpu.core_type = #tpu.core_type<tc>, window_params = [{transform_indices = @transform_0, window_bounds = array<i64: 32, 32>}, {transform_indices = @transform_1, window_bounds = array<i64: 32, 32>}, {pipeline_mode = #tpu.pipeline_mode<synchronous>, transform_indices = @transform_2, window_bounds = array<i64: 1, 32>}, {pipeline_mode = #tpu.pipeline_mode<synchronous>, transform_indices = @transform_3, window_bounds = array<i64: 1, 32>}, {transform_indices = @transform_4, window_bounds = array<i64: 32, 32>}]} {
    %c0 = arith.constant 0 : index
    %c0_0 = arith.constant 0 : index
    %0 = vector.load %arg1[%c0, %c0_0] : memref<32x32xf32, #tpu.memory_space<vmem>>, vector<32x32xf32>
    %c0_1 = arith.constant 0 : index
    %c0_2 = arith.constant 0 : index
    %1 = vector.load %arg2[%c0_1, %c0_2] : memref<32x32xf32, #tpu.memory_space<vmem>>, vector<32x32xf32>
    %2 = arith.addf %0, %1 : vector<32x32xf32>
    %c0_3 = arith.constant 0 : index
    %c0_4 = arith.constant 0 : index
    %3 = vector.load %arg3[%c0_3, %c0_4] : memref<1x32xf32, #tpu.memory_space<vmem>>, vector<1x32xf32>
    %c0_5 = arith.constant 0 : index
    %c0_6 = arith.constant 0 : index
    %4 = vector.load %arg4[%c0_5, %c0_6] : memref<1x32xf32, #tpu.memory_space<vmem>>, vector<1x32xf32>
    %cst = arith.constant dense<0.000000e+00> : vector<32xf32>
    %5 = vector.multi_reduction <add>, %2, %cst [1] : vector<32x32xf32> to vector<32xf32>
    %6 = vector.shape_cast %5 : vector<32xf32> to vector<32x1xf32>
    %cst_7 = arith.constant 3.200000e+01 : f32
    %7 = vector.broadcast %cst_7 : f32 to vector<32x1xf32>
    %8 = arith.divf %6, %7 : vector<32x1xf32>
    %9 = vector.broadcast %8 : vector<32x1xf32> to vector<32x32xf32>
    %10 = arith.subf %2, %9 : vector<32x32xf32>
    %11 = arith.mulf %10, %10 : vector<32x32xf32>
    %cst_8 = arith.constant dense<0.000000e+00> : vector<32xf32>
    %12 = vector.multi_reduction <add>, %11, %cst_8 [1] : vector<32x32xf32> to vector<32xf32>
    %13 = vector.shape_cast %12 : vector<32xf32> to vector<32x1xf32>
    %cst_9 = arith.constant 3.200000e+01 : f32
    %14 = vector.broadcast %cst_9 : f32 to vector<32x1xf32>
    %15 = arith.divf %13, %14 : vector<32x1xf32>
    %cst_10 = arith.constant 9.99999974E-6 : f32
    %16 = vector.broadcast %cst_10 : f32 to vector<32x1xf32>
    %17 = arith.addf %15, %16 : vector<32x1xf32>
    %18 = math.rsqrt %17 : vector<32x1xf32>
    %19 = vector.broadcast %18 : vector<32x1xf32> to vector<32x32xf32>
    %20 = arith.mulf %10, %19 : vector<32x32xf32>
    %21 = vector.broadcast %3 : vector<1x32xf32> to vector<32x32xf32>
    %22 = arith.mulf %20, %21 : vector<32x32xf32>
    %23 = vector.broadcast %4 : vector<1x32xf32> to vector<32x32xf32>
    %24 = arith.addf %22, %23 : vector<32x32xf32>
    %c0_11 = arith.constant 0 : index
    %c0_12 = arith.constant 0 : index
    %25 = vector.load %arg5[%c0_11, %c0_12] : memref<32x32xf32, #tpu.memory_space<vmem>>, vector<32x32xf32>
    tpu.vector_store %arg5[%c0_11, %c0_12], %24 {strides = array<i32>} : memref<32x32xf32, #tpu.memory_space<vmem>>, vector<32x32xf32>,
    return
  }
  func.func @transform_0(%arg0: i32) -> (i32, i32) {
    %c0_i32 = arith.constant 0 : i32
    %c0_i32_0 = arith.constant 0 : i32
    return %arg0, %c0_i32 : i32, i32
  }
  func.func @transform_1(%arg0: i32) -> (i32, i32) {
    %c0_i32 = arith.constant 0 : i32
    %c0_i32_0 = arith.constant 0 : i32
    return %arg0, %c0_i32 : i32, i32
  }
  func.func @transform_2(%arg0: i32) -> (i32, i32) {
    %c0_i32 = arith.constant 0 : i32
    %c0_i32_0 = arith.constant 0 : i32
    %c0_i32_1 = arith.constant 0 : i32
    return %c0_i32, %c0_i32_0 : i32, i32
  }
  func.func @transform_3(%arg0: i32) -> (i32, i32) {
    %c0_i32 = arith.constant 0 : i32
    %c0_i32_0 = arith.constant 0 : i32
    %c0_i32_1 = arith.constant 0 : i32
    return %c0_i32, %c0_i32_0 : i32, i32
  }
  func.func @transform_4(%arg0: i32) -> (i32, i32) {
    %c0_i32 = arith.constant 0 : i32
    %c0_i32_0 = arith.constant 0 : i32
    return %arg0, %c0_i32 : i32, i32
  }
}

module attributes {stable_mosaic.version = 11 : i64} {
  func.func @_decomp_kernel(%arg0: i32, %arg1: memref<1x18x32xf32, #tpu.memory_space<vmem>>, %arg2: memref<1x16x32xf32, #tpu.memory_space<vmem>>) attributes {dimension_semantics = [#tpu.dimension_semantics<parallel>], iteration_bounds = array<i64: 2>, scalar_prefetch = 0 : i64, scratch_operands = 0 : i64, tpu.core_type = #tpu.core_type<tc>, window_params = [{transform_indices = @transform_0, window_bounds = array<i64: 1, 18, 32>}, {transform_indices = @transform_1, window_bounds = array<i64: 1, 16, 32>}]} {
    %c0 = arith.constant 0 : index
    %c0_0 = arith.constant 0 : index
    %c0_1 = arith.constant 0 : index
    %0 = vector.load %arg1[%c0, %c0_0, %c0_1] : memref<1x18x32xf32, #tpu.memory_space<vmem>>, vector<1x18x32xf32>
    %1 = vector.shape_cast %0 : vector<1x18x32xf32> to vector<18x32xf32>
    %2 = vector.extract_strided_slice %1 {offsets = [0, 0], sizes = [16, 32], strides = [1, 1]} : vector<18x32xf32> to vector<16x32xf32>
    %3 = vector.extract_strided_slice %1 {offsets = [1, 0], sizes = [16, 32], strides = [1, 1]} : vector<18x32xf32> to vector<16x32xf32>
    %4 = arith.addf %2, %3 : vector<16x32xf32>
    %5 = vector.extract_strided_slice %1 {offsets = [2, 0], sizes = [16, 32], strides = [1, 1]} : vector<18x32xf32> to vector<16x32xf32>
    %6 = arith.addf %4, %5 : vector<16x32xf32>
    %7 = vector.extract_strided_slice %1 {offsets = [1, 0], sizes = [16, 32], strides = [1, 1]} : vector<18x32xf32> to vector<16x32xf32>
    %cst = arith.constant 0.333333343 : f32
    %8 = vector.broadcast %cst : f32 to vector<16x32xf32>
    %9 = arith.mulf %6, %8 : vector<16x32xf32>
    %10 = arith.subf %7, %9 : vector<16x32xf32>
    %c0_2 = arith.constant 0 : index
    %c0_3 = arith.constant 0 : index
    %c0_4 = arith.constant 0 : index
    %11 = vector.load %arg2[%c0_2, %c0_3, %c0_4] : memref<1x16x32xf32, #tpu.memory_space<vmem>>, vector<1x16x32xf32>
    %12 = vector.shape_cast %11 : vector<1x16x32xf32> to vector<16x32xf32>
    %13 = vector.shape_cast %10 : vector<16x32xf32> to vector<1x16x32xf32>
    tpu.vector_store %arg2[%c0_2, %c0_3, %c0_4], %13 {strides = array<i32>} : memref<1x16x32xf32, #tpu.memory_space<vmem>>, vector<1x16x32xf32>,
    return
  }
  func.func @transform_0(%arg0: i32) -> (i32, i32, i32) {
    %c0_i32 = arith.constant 0 : i32
    %c0_i32_0 = arith.constant 0 : i32
    %c0_i32_1 = arith.constant 0 : i32
    return %arg0, %c0_i32, %c0_i32_0 : i32, i32, i32
  }
  func.func @transform_1(%arg0: i32) -> (i32, i32, i32) {
    %c0_i32 = arith.constant 0 : i32
    %c0_i32_0 = arith.constant 0 : i32
    %c0_i32_1 = arith.constant 0 : i32
    return %arg0, %c0_i32, %c0_i32_0 : i32, i32, i32
  }
}

module attributes {stable_mosaic.version = 11 : i64} {
  func.func @_tap_matmul_kernel(%arg0: i32, %arg1: i32, %arg2: memref<1x24x32xf32, #tpu.memory_space<vmem>>, %arg3: memref<1x32x32xf32, #tpu.memory_space<vmem>>, %arg4: memref<1x32xf32, #tpu.memory_space<vmem>>, %arg5: memref<24x32xf32, #tpu.memory_space<vmem>>, %arg6: memref<24x32xf32, #tpu.memory_space<vmem>>) attributes {dimension_semantics = [#tpu.dimension_semantics<parallel>, #tpu.dimension_semantics<arbitrary>], iteration_bounds = array<i64: 1, 2>, scalar_prefetch = 0 : i64, scratch_operands = 1 : i64, tpu.core_type = #tpu.core_type<tc>, window_params = [{transform_indices = @transform_0, window_bounds = array<i64: 1, 24, 32>}, {transform_indices = @transform_1, window_bounds = array<i64: 1, 32, 32>}, {pipeline_mode = #tpu.pipeline_mode<synchronous>, transform_indices = @transform_2, window_bounds = array<i64: 1, 32>}, {transform_indices = @transform_3, window_bounds = array<i64: 24, 32>}]} {
    %c0_i32 = arith.constant 0 : i32
    %0 = arith.cmpi eq, %arg1, %c0_i32 : i32
    %1 = arith.extui %0 : i1 to i32
    %c0_i32_0 = arith.constant 0 : i32
    %2 = arith.cmpi ne, %1, %c0_i32_0 : i32
    scf.if %2 {
      %cst_11 = arith.constant 0.000000e+00 : f32
      %14 = vector.broadcast %cst_11 : f32 to vector<24x32xf32>
      %c0_12 = arith.constant 0 : index
      %c0_13 = arith.constant 0 : index
      %15 = vector.load %arg6[%c0_12, %c0_13] : memref<24x32xf32, #tpu.memory_space<vmem>>, vector<24x32xf32>
      tpu.vector_store %arg6[%c0_12, %c0_13], %14 {strides = array<i32>} : memref<24x32xf32, #tpu.memory_space<vmem>>, vector<24x32xf32>,
    } else {
    }
    %c0 = arith.constant 0 : index
    %c0_1 = arith.constant 0 : index
    %3 = vector.load %arg6[%c0, %c0_1] : memref<24x32xf32, #tpu.memory_space<vmem>>, vector<24x32xf32>
    %c0_2 = arith.constant 0 : index
    %c0_3 = arith.constant 0 : index
    %c0_4 = arith.constant 0 : index
    %4 = vector.load %arg2[%c0_2, %c0_3, %c0_4] : memref<1x24x32xf32, #tpu.memory_space<vmem>>, vector<1x24x32xf32>
    %5 = vector.shape_cast %4 : vector<1x24x32xf32> to vector<24x32xf32>
    %c0_5 = arith.constant 0 : index
    %c0_6 = arith.constant 0 : index
    %c0_7 = arith.constant 0 : index
    %6 = vector.load %arg3[%c0_5, %c0_6, %c0_7] : memref<1x32x32xf32, #tpu.memory_space<vmem>>, vector<1x32x32xf32>
    %7 = vector.shape_cast %6 : vector<1x32x32xf32> to vector<32x32xf32>
    %cst = arith.constant dense<0.000000e+00> : vector<24x32xf32>
    %8 = tpu.matmul %5, %7, %cst {dimension_numbers = #tpu.dot_dimension_numbers<[1], [0], [0], [1], [0, 0, 1, 1], [], []>} : vector<24x32xf32>, vector<32x32xf32>, vector<24x32xf32> -> vector<24x32xf32>
    %9 = arith.addf %3, %8 : vector<24x32xf32>
    %c0_8 = arith.constant 0 : index
    %c0_9 = arith.constant 0 : index
    %10 = vector.load %arg6[%c0_8, %c0_9] : memref<24x32xf32, #tpu.memory_space<vmem>>, vector<24x32xf32>
    tpu.vector_store %arg6[%c0_8, %c0_9], %9 {strides = array<i32>} : memref<24x32xf32, #tpu.memory_space<vmem>>, vector<24x32xf32>,
    %c1_i32 = arith.constant 1 : i32
    %11 = arith.cmpi eq, %arg1, %c1_i32 : i32
    %12 = arith.extui %11 : i1 to i32
    %c0_i32_10 = arith.constant 0 : i32
    %13 = arith.cmpi ne, %12, %c0_i32_10 : i32
    scf.if %13 {
      %c0_11 = arith.constant 0 : index
      %c0_12 = arith.constant 0 : index
      %14 = vector.load %arg6[%c0_11, %c0_12] : memref<24x32xf32, #tpu.memory_space<vmem>>, vector<24x32xf32>
      %c0_13 = arith.constant 0 : index
      %c0_14 = arith.constant 0 : index
      %15 = vector.load %arg4[%c0_13, %c0_14] : memref<1x32xf32, #tpu.memory_space<vmem>>, vector<1x32xf32>
      %16 = vector.broadcast %15 : vector<1x32xf32> to vector<24x32xf32>
      %17 = arith.addf %14, %16 : vector<24x32xf32>
      %18 = math.tanh %17 : vector<24x32xf32>
      %c0_15 = arith.constant 0 : index
      %c0_16 = arith.constant 0 : index
      %19 = vector.load %arg5[%c0_15, %c0_16] : memref<24x32xf32, #tpu.memory_space<vmem>>, vector<24x32xf32>
      tpu.vector_store %arg5[%c0_15, %c0_16], %18 {strides = array<i32>} : memref<24x32xf32, #tpu.memory_space<vmem>>, vector<24x32xf32>,
    } else {
    }
    return
  }
  func.func @transform_0(%arg0: i32, %arg1: i32) -> (i32, i32, i32) {
    %c0_i32 = arith.constant 0 : i32
    %c0_i32_0 = arith.constant 0 : i32
    return %arg1, %arg0, %c0_i32 : i32, i32, i32
  }
  func.func @transform_1(%arg0: i32, %arg1: i32) -> (i32, i32, i32) {
    %c0_i32 = arith.constant 0 : i32
    %c0_i32_0 = arith.constant 0 : i32
    %c0_i32_1 = arith.constant 0 : i32
    return %arg1, %c0_i32, %c0_i32_0 : i32, i32, i32
  }
  func.func @transform_2(%arg0: i32, %arg1: i32) -> (i32, i32) {
    %c0_i32 = arith.constant 0 : i32
    %c0_i32_0 = arith.constant 0 : i32
    %c0_i32_1 = arith.constant 0 : i32
    return %c0_i32, %c0_i32_0 : i32, i32
  }
  func.func @transform_3(%arg0: i32, %arg1: i32) -> (i32, i32) {
    %c0_i32 = arith.constant 0 : i32
    %c0_i32_0 = arith.constant 0 : i32
    return %arg0, %c0_i32 : i32, i32
  }
}

module attributes {stable_mosaic.version = 11 : i64} {
  func.func @_isometric_kernel(%arg0: i32, %arg1: memref<1x9x32xf32, #tpu.memory_space<vmem>>, %arg2: memref<9x32x32xf32, #tpu.memory_space<vmem>>, %arg3: memref<1x32xf32, #tpu.memory_space<vmem>>, %arg4: memref<1x32xf32, #tpu.memory_space<vmem>>, %arg5: memref<1x32xf32, #tpu.memory_space<vmem>>, %arg6: memref<1x9x32xf32, #tpu.memory_space<vmem>>, %arg7: memref<9x32xf32, #tpu.memory_space<vmem>>) attributes {dimension_semantics = [#tpu.dimension_semantics<parallel>], iteration_bounds = array<i64: 2>, scalar_prefetch = 0 : i64, scratch_operands = 1 : i64, tpu.core_type = #tpu.core_type<tc>, window_params = [{transform_indices = @transform_0, window_bounds = array<i64: 1, 9, 32>}, {pipeline_mode = #tpu.pipeline_mode<synchronous>, transform_indices = @transform_1, window_bounds = array<i64: 9, 32, 32>}, {pipeline_mode = #tpu.pipeline_mode<synchronous>, transform_indices = @transform_2, window_bounds = array<i64: 1, 32>}, {pipeline_mode = #tpu.pipeline_mode<synchronous>, transform_indices = @transform_3, window_bounds = array<i64: 1, 32>}, {pipeline_mode = #tpu.pipeline_mode<synchronous>, transform_indices = @transform_4, window_bounds = array<i64: 1, 32>}, {transform_indices = @transform_5, window_bounds = array<i64: 1, 9, 32>}]} {
    %c0 = arith.constant 0 : index
    %c0_0 = arith.constant 0 : index
    %c0_1 = arith.constant 0 : index
    %0 = vector.load %arg1[%c0, %c0_0, %c0_1] : memref<1x9x32xf32, #tpu.memory_space<vmem>>, vector<1x9x32xf32>
    %1 = vector.shape_cast %0 : vector<1x9x32xf32> to vector<9x32xf32>
    %cst = arith.constant 0.000000e+00 : f32
    %2 = vector.broadcast %cst : f32 to vector<9x32xf32>
    %c0_2 = arith.constant 0 : index
    %c0_3 = arith.constant 0 : index
    %3 = vector.load %arg7[%c0_2, %c0_3] : memref<9x32xf32, #tpu.memory_space<vmem>>, vector<9x32xf32>
    tpu.vector_store %arg7[%c0_2, %c0_3], %2 {strides = array<i32>} : memref<9x32xf32, #tpu.memory_space<vmem>>, vector<9x32xf32>,
    %4 = vector.extract_strided_slice %1 {offsets = [0, 0], sizes = [1, 32], strides = [1, 1]} : vector<9x32xf32> to vector<1x32xf32>
    %c0_4 = arith.constant 0 : index
    %c0_5 = arith.constant 0 : index
    %c0_6 = arith.constant 0 : index
    %5 = vector.load %arg2[%c0_4, %c0_5, %c0_6] : memref<9x32x32xf32, #tpu.memory_space<vmem>>, vector<1x32x32xf32>
    %6 = vector.shape_cast %5 : vector<1x32x32xf32> to vector<32x32xf32>
    %cst_7 = arith.constant dense<0.000000e+00> : vector<1x32xf32>
    %7 = tpu.matmul %4, %6, %cst_7 {dimension_numbers = #tpu.dot_dimension_numbers<[1], [0], [0], [1], [0, 0, 1, 1], [], []>} : vector<1x32xf32>, vector<32x32xf32>, vector<1x32xf32> -> vector<1x32xf32>
    %c8 = arith.constant 8 : index
    %c0_8 = arith.constant 0 : index
    %8 = vector.load %arg7[%c8, %c0_8] : memref<9x32xf32, #tpu.memory_space<vmem>>, vector<1x32xf32>
    %9 = arith.addf %8, %7 : vector<1x32xf32>
    %c8_9 = arith.constant 8 : index
    %c0_10 = arith.constant 0 : index
    %10 = vector.load %arg7[%c8_9, %c0_10] : memref<9x32xf32, #tpu.memory_space<vmem>>, vector<1x32xf32>
    tpu.vector_store %arg7[%c8_9, %c0_10], %9 {strides = array<i32>} : memref<9x32xf32, #tpu.memory_space<vmem>>, vector<1x32xf32>,
    %11 = vector.extract_strided_slice %1 {offsets = [0, 0], sizes = [2, 32], strides = [1, 1]} : vector<9x32xf32> to vector<2x32xf32>
    %c1 = arith.constant 1 : index
    %c0_11 = arith.constant 0 : index
    %c0_12 = arith.constant 0 : index
    %12 = vector.load %arg2[%c1, %c0_11, %c0_12] : memref<9x32x32xf32, #tpu.memory_space<vmem>>, vector<1x32x32xf32>
    %13 = vector.shape_cast %12 : vector<1x32x32xf32> to vector<32x32xf32>
    %cst_13 = arith.constant dense<0.000000e+00> : vector<2x32xf32>
    %14 = tpu.matmul %11, %13, %cst_13 {dimension_numbers = #tpu.dot_dimension_numbers<[1], [0], [0], [1], [0, 0, 1, 1], [], []>} : vector<2x32xf32>, vector<32x32xf32>, vector<2x32xf32> -> vector<2x32xf32>
    %c7 = arith.constant 7 : index
    %c0_14 = arith.constant 0 : index
    %15 = vector.load %arg7[%c7, %c0_14] : memref<9x32xf32, #tpu.memory_space<vmem>>, vector<2x32xf32>
    %16 = arith.addf %15, %14 : vector<2x32xf32>
    %c7_15 = arith.constant 7 : index
    %c0_16 = arith.constant 0 : index
    %17 = vector.load %arg7[%c7_15, %c0_16] : memref<9x32xf32, #tpu.memory_space<vmem>>, vector<2x32xf32>
    tpu.vector_store %arg7[%c7_15, %c0_16], %16 {strides = array<i32>} : memref<9x32xf32, #tpu.memory_space<vmem>>, vector<2x32xf32>,
    %18 = vector.extract_strided_slice %1 {offsets = [0, 0], sizes = [3, 32], strides = [1, 1]} : vector<9x32xf32> to vector<3x32xf32>
    %c2 = arith.constant 2 : index
    %c0_17 = arith.constant 0 : index
    %c0_18 = arith.constant 0 : index
    %19 = vector.load %arg2[%c2, %c0_17, %c0_18] : memref<9x32x32xf32, #tpu.memory_space<vmem>>, vector<1x32x32xf32>
    %20 = vector.shape_cast %19 : vector<1x32x32xf32> to vector<32x32xf32>
    %cst_19 = arith.constant dense<0.000000e+00> : vector<3x32xf32>
    %21 = tpu.matmul %18, %20, %cst_19 {dimension_numbers = #tpu.dot_dimension_numbers<[1], [0], [0], [1], [0, 0, 1, 1], [], []>} : vector<3x32xf32>, vector<32x32xf32>, vector<3x32xf32> -> vector<3x32xf32>
    %c6 = arith.constant 6 : index
    %c0_20 = arith.constant 0 : index
    %22 = vector.load %arg7[%c6, %c0_20] : memref<9x32xf32, #tpu.memory_space<vmem>>, vector<3x32xf32>
    %23 = arith.addf %22, %21 : vector<3x32xf32>
    %c6_21 = arith.constant 6 : index
    %c0_22 = arith.constant 0 : index
    %24 = vector.load %arg7[%c6_21, %c0_22] : memref<9x32xf32, #tpu.memory_space<vmem>>, vector<3x32xf32>
    tpu.vector_store %arg7[%c6_21, %c0_22], %23 {strides = array<i32>} : memref<9x32xf32, #tpu.memory_space<vmem>>, vector<3x32xf32>,
    %25 = vector.extract_strided_slice %1 {offsets = [0, 0], sizes = [4, 32], strides = [1, 1]} : vector<9x32xf32> to vector<4x32xf32>
    %c3 = arith.constant 3 : index
    %c0_23 = arith.constant 0 : index
    %c0_24 = arith.constant 0 : index
    %26 = vector.load %arg2[%c3, %c0_23, %c0_24] : memref<9x32x32xf32, #tpu.memory_space<vmem>>, vector<1x32x32xf32>
    %27 = vector.shape_cast %26 : vector<1x32x32xf32> to vector<32x32xf32>
    %cst_25 = arith.constant dense<0.000000e+00> : vector<4x32xf32>
    %28 = tpu.matmul %25, %27, %cst_25 {dimension_numbers = #tpu.dot_dimension_numbers<[1], [0], [0], [1], [0, 0, 1, 1], [], []>} : vector<4x32xf32>, vector<32x32xf32>, vector<4x32xf32> -> vector<4x32xf32>
    %c5 = arith.constant 5 : index
    %c0_26 = arith.constant 0 : index
    %29 = vector.load %arg7[%c5, %c0_26] : memref<9x32xf32, #tpu.memory_space<vmem>>, vector<4x32xf32>
    %30 = arith.addf %29, %28 : vector<4x32xf32>
    %c5_27 = arith.constant 5 : index
    %c0_28 = arith.constant 0 : index
    %31 = vector.load %arg7[%c5_27, %c0_28] : memref<9x32xf32, #tpu.memory_space<vmem>>, vector<4x32xf32>
    tpu.vector_store %arg7[%c5_27, %c0_28], %30 {strides = array<i32>} : memref<9x32xf32, #tpu.memory_space<vmem>>, vector<4x32xf32>,
    %32 = vector.extract_strided_slice %1 {offsets = [0, 0], sizes = [5, 32], strides = [1, 1]} : vector<9x32xf32> to vector<5x32xf32>
    %c4 = arith.constant 4 : index
    %c0_29 = arith.constant 0 : index
    %c0_30 = arith.constant 0 : index
    %33 = vector.load %arg2[%c4, %c0_29, %c0_30] : memref<9x32x32xf32, #tpu.memory_space<vmem>>, vector<1x32x32xf32>
    %34 = vector.shape_cast %33 : vector<1x32x32xf32> to vector<32x32xf32>
    %cst_31 = arith.constant dense<0.000000e+00> : vector<5x32xf32>
    %35 = tpu.matmul %32, %34, %cst_31 {dimension_numbers = #tpu.dot_dimension_numbers<[1], [0], [0], [1], [0, 0, 1, 1], [], []>} : vector<5x32xf32>, vector<32x32xf32>, vector<5x32xf32> -> vector<5x32xf32>
    %c4_32 = arith.constant 4 : index
    %c0_33 = arith.constant 0 : index
    %36 = vector.load %arg7[%c4_32, %c0_33] : memref<9x32xf32, #tpu.memory_space<vmem>>, vector<5x32xf32>
    %37 = arith.addf %36, %35 : vector<5x32xf32>
    %c4_34 = arith.constant 4 : index
    %c0_35 = arith.constant 0 : index
    %38 = vector.load %arg7[%c4_34, %c0_35] : memref<9x32xf32, #tpu.memory_space<vmem>>, vector<5x32xf32>
    tpu.vector_store %arg7[%c4_34, %c0_35], %37 {strides = array<i32>} : memref<9x32xf32, #tpu.memory_space<vmem>>, vector<5x32xf32>,
    %39 = vector.extract_strided_slice %1 {offsets = [0, 0], sizes = [6, 32], strides = [1, 1]} : vector<9x32xf32> to vector<6x32xf32>
    %c5_36 = arith.constant 5 : index
    %c0_37 = arith.constant 0 : index
    %c0_38 = arith.constant 0 : index
    %40 = vector.load %arg2[%c5_36, %c0_37, %c0_38] : memref<9x32x32xf32, #tpu.memory_space<vmem>>, vector<1x32x32xf32>
    %41 = vector.shape_cast %40 : vector<1x32x32xf32> to vector<32x32xf32>
    %cst_39 = arith.constant dense<0.000000e+00> : vector<6x32xf32>
    %42 = tpu.matmul %39, %41, %cst_39 {dimension_numbers = #tpu.dot_dimension_numbers<[1], [0], [0], [1], [0, 0, 1, 1], [], []>} : vector<6x32xf32>, vector<32x32xf32>, vector<6x32xf32> -> vector<6x32xf32>
    %c3_40 = arith.constant 3 : index
    %c0_41 = arith.constant 0 : index
    %43 = vector.load %arg7[%c3_40, %c0_41] : memref<9x32xf32, #tpu.memory_space<vmem>>, vector<6x32xf32>
    %44 = arith.addf %43, %42 : vector<6x32xf32>
    %c3_42 = arith.constant 3 : index
    %c0_43 = arith.constant 0 : index
    %45 = vector.load %arg7[%c3_42, %c0_43] : memref<9x32xf32, #tpu.memory_space<vmem>>, vector<6x32xf32>
    tpu.vector_store %arg7[%c3_42, %c0_43], %44 {strides = array<i32>} : memref<9x32xf32, #tpu.memory_space<vmem>>, vector<6x32xf32>,
    %46 = vector.extract_strided_slice %1 {offsets = [0, 0], sizes = [7, 32], strides = [1, 1]} : vector<9x32xf32> to vector<7x32xf32>
    %c6_44 = arith.constant 6 : index
    %c0_45 = arith.constant 0 : index
    %c0_46 = arith.constant 0 : index
    %47 = vector.load %arg2[%c6_44, %c0_45, %c0_46] : memref<9x32x32xf32, #tpu.memory_space<vmem>>, vector<1x32x32xf32>
    %48 = vector.shape_cast %47 : vector<1x32x32xf32> to vector<32x32xf32>
    %cst_47 = arith.constant dense<0.000000e+00> : vector<7x32xf32>
    %49 = tpu.matmul %46, %48, %cst_47 {dimension_numbers = #tpu.dot_dimension_numbers<[1], [0], [0], [1], [0, 0, 1, 1], [], []>} : vector<7x32xf32>, vector<32x32xf32>, vector<7x32xf32> -> vector<7x32xf32>
    %c2_48 = arith.constant 2 : index
    %c0_49 = arith.constant 0 : index
    %50 = vector.load %arg7[%c2_48, %c0_49] : memref<9x32xf32, #tpu.memory_space<vmem>>, vector<7x32xf32>
    %51 = arith.addf %50, %49 : vector<7x32xf32>
    %c2_50 = arith.constant 2 : index
    %c0_51 = arith.constant 0 : index
    %52 = vector.load %arg7[%c2_50, %c0_51] : memref<9x32xf32, #tpu.memory_space<vmem>>, vector<7x32xf32>
    tpu.vector_store %arg7[%c2_50, %c0_51], %51 {strides = array<i32>} : memref<9x32xf32, #tpu.memory_space<vmem>>, vector<7x32xf32>,
    %53 = vector.extract_strided_slice %1 {offsets = [0, 0], sizes = [8, 32], strides = [1, 1]} : vector<9x32xf32> to vector<8x32xf32>
    %c7_52 = arith.constant 7 : index
    %c0_53 = arith.constant 0 : index
    %c0_54 = arith.constant 0 : index
    %54 = vector.load %arg2[%c7_52, %c0_53, %c0_54] : memref<9x32x32xf32, #tpu.memory_space<vmem>>, vector<1x32x32xf32>
    %55 = vector.shape_cast %54 : vector<1x32x32xf32> to vector<32x32xf32>
    %cst_55 = arith.constant dense<0.000000e+00> : vector<8x32xf32>
    %56 = tpu.matmul %53, %55, %cst_55 {dimension_numbers = #tpu.dot_dimension_numbers<[1], [0], [0], [1], [0, 0, 1, 1], [], []>} : vector<8x32xf32>, vector<32x32xf32>, vector<8x32xf32> -> vector<8x32xf32>
    %c1_56 = arith.constant 1 : index
    %c0_57 = arith.constant 0 : index
    %57 = vector.load %arg7[%c1_56, %c0_57] : memref<9x32xf32, #tpu.memory_space<vmem>>, vector<8x32xf32>
    %58 = arith.addf %57, %56 : vector<8x32xf32>
    %c1_58 = arith.constant 1 : index
    %c0_59 = arith.constant 0 : index
    %59 = vector.load %arg7[%c1_58, %c0_59] : memref<9x32xf32, #tpu.memory_space<vmem>>, vector<8x32xf32>
    tpu.vector_store %arg7[%c1_58, %c0_59], %58 {strides = array<i32>} : memref<9x32xf32, #tpu.memory_space<vmem>>, vector<8x32xf32>,
    %c8_60 = arith.constant 8 : index
    %c0_61 = arith.constant 0 : index
    %c0_62 = arith.constant 0 : index
    %60 = vector.load %arg2[%c8_60, %c0_61, %c0_62] : memref<9x32x32xf32, #tpu.memory_space<vmem>>, vector<1x32x32xf32>
    %61 = vector.shape_cast %60 : vector<1x32x32xf32> to vector<32x32xf32>
    %cst_63 = arith.constant dense<0.000000e+00> : vector<9x32xf32>
    %62 = tpu.matmul %1, %61, %cst_63 {dimension_numbers = #tpu.dot_dimension_numbers<[1], [0], [0], [1], [0, 0, 1, 1], [], []>} : vector<9x32xf32>, vector<32x32xf32>, vector<9x32xf32> -> vector<9x32xf32>
    %c0_64 = arith.constant 0 : index
    %c0_65 = arith.constant 0 : index
    %63 = vector.load %arg7[%c0_64, %c0_65] : memref<9x32xf32, #tpu.memory_space<vmem>>, vector<9x32xf32>
    %64 = arith.addf %63, %62 : vector<9x32xf32>
    %c0_66 = arith.constant 0 : index
    %c0_67 = arith.constant 0 : index
    %65 = vector.load %arg7[%c0_66, %c0_67] : memref<9x32xf32, #tpu.memory_space<vmem>>, vector<9x32xf32>
    tpu.vector_store %arg7[%c0_66, %c0_67], %64 {strides = array<i32>} : memref<9x32xf32, #tpu.memory_space<vmem>>, vector<9x32xf32>,
    %c0_68 = arith.constant 0 : index
    %c0_69 = arith.constant 0 : index
    %66 = vector.load %arg7[%c0_68, %c0_69] : memref<9x32xf32, #tpu.memory_space<vmem>>, vector<9x32xf32>
    %c0_70 = arith.constant 0 : index
    %c0_71 = arith.constant 0 : index
    %67 = vector.load %arg3[%c0_70, %c0_71] : memref<1x32xf32, #tpu.memory_space<vmem>>, vector<1x32xf32>
    %68 = vector.broadcast %67 : vector<1x32xf32> to vector<9x32xf32>
    %69 = arith.addf %66, %68 : vector<9x32xf32>
    %70 = math.tanh %69 : vector<9x32xf32>
    %71 = arith.addf %70, %1 : vector<9x32xf32>
    %c0_72 = arith.constant 0 : index
    %c0_73 = arith.constant 0 : index
    %72 = vector.load %arg4[%c0_72, %c0_73] : memref<1x32xf32, #tpu.memory_space<vmem>>, vector<1x32xf32>
    %c0_74 = arith.constant 0 : index
    %c0_75 = arith.constant 0 : index
    %73 = vector.load %arg5[%c0_74, %c0_75] : memref<1x32xf32, #tpu.memory_space<vmem>>, vector<1x32xf32>
    %cst_76 = arith.constant dense<0.000000e+00> : vector<9xf32>
    %74 = vector.multi_reduction <add>, %71, %cst_76 [1] : vector<9x32xf32> to vector<9xf32>
    %75 = vector.shape_cast %74 : vector<9xf32> to vector<9x1xf32>
    %cst_77 = arith.constant 3.200000e+01 : f32
    %76 = vector.broadcast %cst_77 : f32 to vector<9x1xf32>
    %77 = arith.divf %75, %76 : vector<9x1xf32>
    %78 = vector.broadcast %77 : vector<9x1xf32> to vector<9x32xf32>
    %79 = arith.subf %71, %78 : vector<9x32xf32>
    %80 = arith.mulf %79, %79 : vector<9x32xf32>
    %cst_78 = arith.constant dense<0.000000e+00> : vector<9xf32>
    %81 = vector.multi_reduction <add>, %80, %cst_78 [1] : vector<9x32xf32> to vector<9xf32>
    %82 = vector.shape_cast %81 : vector<9xf32> to vector<9x1xf32>
    %cst_79 = arith.constant 3.200000e+01 : f32
    %83 = vector.broadcast %cst_79 : f32 to vector<9x1xf32>
    %84 = arith.divf %82, %83 : vector<9x1xf32>
    %cst_80 = arith.constant 9.99999974E-6 : f32
    %85 = vector.broadcast %cst_80 : f32 to vector<9x1xf32>
    %86 = arith.addf %84, %85 : vector<9x1xf32>
    %87 = math.rsqrt %86 : vector<9x1xf32>
    %88 = vector.broadcast %87 : vector<9x1xf32> to vector<9x32xf32>
    %89 = arith.mulf %79, %88 : vector<9x32xf32>
    %90 = vector.broadcast %72 : vector<1x32xf32> to vector<9x32xf32>
    %91 = arith.mulf %89, %90 : vector<9x32xf32>
    %92 = vector.broadcast %73 : vector<1x32xf32> to vector<9x32xf32>
    %93 = arith.addf %91, %92 : vector<9x32xf32>
    %c0_81 = arith.constant 0 : index
    %c0_82 = arith.constant 0 : index
    %c0_83 = arith.constant 0 : index
    %94 = vector.load %arg6[%c0_81, %c0_82, %c0_83] : memref<1x9x32xf32, #tpu.memory_space<vmem>>, vector<1x9x32xf32>
    %95 = vector.shape_cast %94 : vector<1x9x32xf32> to vector<9x32xf32>
    %96 = vector.shape_cast %93 : vector<9x32xf32> to vector<1x9x32xf32>
    tpu.vector_store %arg6[%c0_81, %c0_82, %c0_83], %96 {strides = array<i32>} : memref<1x9x32xf32, #tpu.memory_space<vmem>>, vector<1x9x32xf32>,
    return
  }
  func.func @transform_0(%arg0: i32) -> (i32, i32, i32) {
    %c0_i32 = arith.constant 0 : i32
    %c0_i32_0 = arith.constant 0 : i32
    %c0_i32_1 = arith.constant 0 : i32
    return %arg0, %c0_i32, %c0_i32_0 : i32, i32, i32
  }
  func.func @transform_1(%arg0: i32) -> (i32, i32, i32) {
    %c0_i32 = arith.constant 0 : i32
    %c0_i32_0 = arith.constant 0 : i32
    %c0_i32_1 = arith.constant 0 : i32
    %c0_i32_2 = arith.constant 0 : i32
    return %c0_i32, %c0_i32_0, %c0_i32_1 : i32, i32, i32
  }
  func.func @transform_2(%arg0: i32) -> (i32, i32) {
    %c0_i32 = arith.constant 0 : i32
    %c0_i32_0 = arith.constant 0 : i32
    %c0_i32_1 = arith.constant 0 : i32
    return %c0_i32, %c0_i32_0 : i32, i32
  }
  func.func @transform_3(%arg0: i32) -> (i32, i32) {
    %c0_i32 = arith.constant 0 : i32
    %c0_i32_0 = arith.constant 0 : i32
    %c0_i32_1 = arith.constant 0 : i32
    return %c0_i32, %c0_i32_0 : i32, i32
  }
  func.func @transform_4(%arg0: i32) -> (i32, i32) {
    %c0_i32 = arith.constant 0 : i32
    %c0_i32_0 = arith.constant 0 : i32
    %c0_i32_1 = arith.constant 0 : i32
    return %c0_i32, %c0_i32_0 : i32, i32
  }
  func.func @transform_5(%arg0: i32) -> (i32, i32, i32) {
    %c0_i32 = arith.constant 0 : i32
    %c0_i32_0 = arith.constant 0 : i32
    %c0_i32_1 = arith.constant 0 : i32
    return %arg0, %c0_i32, %c0_i32_0 : i32, i32, i32
  }
}

module attributes {stable_mosaic.version = 11 : i64} {
  func.func @_tap_matmul_kernel(%arg0: i32, %arg1: i32, %arg2: memref<1x24x32xf32, #tpu.memory_space<vmem>>, %arg3: memref<1x32x64xf32, #tpu.memory_space<vmem>>, %arg4: memref<1x64xf32, #tpu.memory_space<vmem>>, %arg5: memref<24x64xf32, #tpu.memory_space<vmem>>, %arg6: memref<24x64xf32, #tpu.memory_space<vmem>>) attributes {dimension_semantics = [#tpu.dimension_semantics<parallel>, #tpu.dimension_semantics<arbitrary>], iteration_bounds = array<i64: 1, 1>, scalar_prefetch = 0 : i64, scratch_operands = 1 : i64, tpu.core_type = #tpu.core_type<tc>, window_params = [{transform_indices = @transform_0, window_bounds = array<i64: 1, 24, 32>}, {transform_indices = @transform_1, window_bounds = array<i64: 1, 32, 64>}, {pipeline_mode = #tpu.pipeline_mode<synchronous>, transform_indices = @transform_2, window_bounds = array<i64: 1, 64>}, {transform_indices = @transform_3, window_bounds = array<i64: 24, 64>}]} {
    %c0_i32 = arith.constant 0 : i32
    %0 = arith.cmpi eq, %arg1, %c0_i32 : i32
    %1 = arith.extui %0 : i1 to i32
    %c0_i32_0 = arith.constant 0 : i32
    %2 = arith.cmpi ne, %1, %c0_i32_0 : i32
    scf.if %2 {
      %cst_12 = arith.constant 0.000000e+00 : f32
      %14 = vector.broadcast %cst_12 : f32 to vector<24x64xf32>
      %c0_13 = arith.constant 0 : index
      %c0_14 = arith.constant 0 : index
      %15 = vector.load %arg6[%c0_13, %c0_14] : memref<24x64xf32, #tpu.memory_space<vmem>>, vector<24x64xf32>
      tpu.vector_store %arg6[%c0_13, %c0_14], %14 {strides = array<i32>} : memref<24x64xf32, #tpu.memory_space<vmem>>, vector<24x64xf32>,
    } else {
    }
    %c0 = arith.constant 0 : index
    %c0_1 = arith.constant 0 : index
    %3 = vector.load %arg6[%c0, %c0_1] : memref<24x64xf32, #tpu.memory_space<vmem>>, vector<24x64xf32>
    %c0_2 = arith.constant 0 : index
    %c0_3 = arith.constant 0 : index
    %c0_4 = arith.constant 0 : index
    %4 = vector.load %arg2[%c0_2, %c0_3, %c0_4] : memref<1x24x32xf32, #tpu.memory_space<vmem>>, vector<1x24x32xf32>
    %5 = vector.shape_cast %4 : vector<1x24x32xf32> to vector<24x32xf32>
    %c0_5 = arith.constant 0 : index
    %c0_6 = arith.constant 0 : index
    %c0_7 = arith.constant 0 : index
    %6 = vector.load %arg3[%c0_5, %c0_6, %c0_7] : memref<1x32x64xf32, #tpu.memory_space<vmem>>, vector<1x32x64xf32>
    %7 = vector.shape_cast %6 : vector<1x32x64xf32> to vector<32x64xf32>
    %cst = arith.constant dense<0.000000e+00> : vector<24x64xf32>
    %8 = tpu.matmul %5, %7, %cst {dimension_numbers = #tpu.dot_dimension_numbers<[1], [0], [0], [1], [0, 0, 1, 1], [], []>} : vector<24x32xf32>, vector<32x64xf32>, vector<24x64xf32> -> vector<24x64xf32>
    %9 = arith.addf %3, %8 : vector<24x64xf32>
    %c0_8 = arith.constant 0 : index
    %c0_9 = arith.constant 0 : index
    %10 = vector.load %arg6[%c0_8, %c0_9] : memref<24x64xf32, #tpu.memory_space<vmem>>, vector<24x64xf32>
    tpu.vector_store %arg6[%c0_8, %c0_9], %9 {strides = array<i32>} : memref<24x64xf32, #tpu.memory_space<vmem>>, vector<24x64xf32>,
    %c0_i32_10 = arith.constant 0 : i32
    %11 = arith.cmpi eq, %arg1, %c0_i32_10 : i32
    %12 = arith.extui %11 : i1 to i32
    %c0_i32_11 = arith.constant 0 : i32
    %13 = arith.cmpi ne, %12, %c0_i32_11 : i32
    scf.if %13 {
      %c0_12 = arith.constant 0 : index
      %c0_13 = arith.constant 0 : index
      %14 = vector.load %arg6[%c0_12, %c0_13] : memref<24x64xf32, #tpu.memory_space<vmem>>, vector<24x64xf32>
      %c0_14 = arith.constant 0 : index
      %c0_15 = arith.constant 0 : index
      %15 = vector.load %arg4[%c0_14, %c0_15] : memref<1x64xf32, #tpu.memory_space<vmem>>, vector<1x64xf32>
      %16 = vector.broadcast %15 : vector<1x64xf32> to vector<24x64xf32>
      %17 = arith.addf %14, %16 : vector<24x64xf32>
      %18 = math.tanh %17 : vector<24x64xf32>
      %c0_16 = arith.constant 0 : index
      %c0_17 = arith.constant 0 : index
      %19 = vector.load %arg5[%c0_16, %c0_17] : memref<24x64xf32, #tpu.memory_space<vmem>>, vector<24x64xf32>
      tpu.vector_store %arg5[%c0_16, %c0_17], %18 {strides = array<i32>} : memref<24x64xf32, #tpu.memory_space<vmem>>, vector<24x64xf32>,
    } else {
    }
    return
  }
  func.func @transform_0(%arg0: i32, %arg1: i32) -> (i32, i32, i32) {
    %c0_i32 = arith.constant 0 : i32
    %c0_i32_0 = arith.constant 0 : i32
    return %arg1, %arg0, %c0_i32 : i32, i32, i32
  }
  func.func @transform_1(%arg0: i32, %arg1: i32) -> (i32, i32, i32) {
    %c0_i32 = arith.constant 0 : i32
    %c0_i32_0 = arith.constant 0 : i32
    %c0_i32_1 = arith.constant 0 : i32
    return %arg1, %c0_i32, %c0_i32_0 : i32, i32, i32
  }
  func.func @transform_2(%arg0: i32, %arg1: i32) -> (i32, i32) {
    %c0_i32 = arith.constant 0 : i32
    %c0_i32_0 = arith.constant 0 : i32
    %c0_i32_1 = arith.constant 0 : i32
    return %c0_i32, %c0_i32_0 : i32, i32
  }
  func.func @transform_3(%arg0: i32, %arg1: i32) -> (i32, i32) {
    %c0_i32 = arith.constant 0 : i32
    %c0_i32_0 = arith.constant 0 : i32
    return %arg0, %c0_i32 : i32, i32
  }
}

module attributes {stable_mosaic.version = 11 : i64} {
  func.func @_ffn_kernel(%arg0: i32, %arg1: memref<32x32xf32, #tpu.memory_space<vmem>>, %arg2: memref<1x32xf32, #tpu.memory_space<vmem>>, %arg3: memref<1x32xf32, #tpu.memory_space<vmem>>, %arg4: memref<32x128xf32, #tpu.memory_space<vmem>>, %arg5: memref<1x128xf32, #tpu.memory_space<vmem>>, %arg6: memref<128x32xf32, #tpu.memory_space<vmem>>, %arg7: memref<1x32xf32, #tpu.memory_space<vmem>>, %arg8: memref<1x32xf32, #tpu.memory_space<vmem>>, %arg9: memref<1x32xf32, #tpu.memory_space<vmem>>, %arg10: memref<32x32xf32, #tpu.memory_space<vmem>>) attributes {dimension_semantics = [#tpu.dimension_semantics<parallel>], iteration_bounds = array<i64: 1>, scalar_prefetch = 0 : i64, scratch_operands = 0 : i64, tpu.core_type = #tpu.core_type<tc>, window_params = [{transform_indices = @transform_0, window_bounds = array<i64: 32, 32>}, {pipeline_mode = #tpu.pipeline_mode<synchronous>, transform_indices = @transform_1, window_bounds = array<i64: 1, 32>}, {pipeline_mode = #tpu.pipeline_mode<synchronous>, transform_indices = @transform_2, window_bounds = array<i64: 1, 32>}, {pipeline_mode = #tpu.pipeline_mode<synchronous>, transform_indices = @transform_3, window_bounds = array<i64: 32, 128>}, {pipeline_mode = #tpu.pipeline_mode<synchronous>, transform_indices = @transform_4, window_bounds = array<i64: 1, 128>}, {pipeline_mode = #tpu.pipeline_mode<synchronous>, transform_indices = @transform_5, window_bounds = array<i64: 128, 32>}, {pipeline_mode = #tpu.pipeline_mode<synchronous>, transform_indices = @transform_6, window_bounds = array<i64: 1, 32>}, {pipeline_mode = #tpu.pipeline_mode<synchronous>, transform_indices = @transform_7, window_bounds = array<i64: 1, 32>}, {pipeline_mode = #tpu.pipeline_mode<synchronous>, transform_indices = @transform_8, window_bounds = array<i64: 1, 32>}, {transform_indices = @transform_9, window_bounds = array<i64: 32, 32>}]} {
    %c0 = arith.constant 0 : index
    %c0_0 = arith.constant 0 : index
    %0 = vector.load %arg1[%c0, %c0_0] : memref<32x32xf32, #tpu.memory_space<vmem>>, vector<32x32xf32>
    %c0_1 = arith.constant 0 : index
    %c0_2 = arith.constant 0 : index
    %1 = vector.load %arg2[%c0_1, %c0_2] : memref<1x32xf32, #tpu.memory_space<vmem>>, vector<1x32xf32>
    %c0_3 = arith.constant 0 : index
    %c0_4 = arith.constant 0 : index
    %2 = vector.load %arg3[%c0_3, %c0_4] : memref<1x32xf32, #tpu.memory_space<vmem>>, vector<1x32xf32>
    %cst = arith.constant dense<0.000000e+00> : vector<32xf32>
    %3 = vector.multi_reduction <add>, %0, %cst [1] : vector<32x32xf32> to vector<32xf32>
    %4 = vector.shape_cast %3 : vector<32xf32> to vector<32x1xf32>
    %cst_5 = arith.constant 3.200000e+01 : f32
    %5 = vector.broadcast %cst_5 : f32 to vector<32x1xf32>
    %6 = arith.divf %4, %5 : vector<32x1xf32>
    %7 = vector.broadcast %6 : vector<32x1xf32> to vector<32x32xf32>
    %8 = arith.subf %0, %7 : vector<32x32xf32>
    %9 = arith.mulf %8, %8 : vector<32x32xf32>
    %cst_6 = arith.constant dense<0.000000e+00> : vector<32xf32>
    %10 = vector.multi_reduction <add>, %9, %cst_6 [1] : vector<32x32xf32> to vector<32xf32>
    %11 = vector.shape_cast %10 : vector<32xf32> to vector<32x1xf32>
    %cst_7 = arith.constant 3.200000e+01 : f32
    %12 = vector.broadcast %cst_7 : f32 to vector<32x1xf32>
    %13 = arith.divf %11, %12 : vector<32x1xf32>
    %cst_8 = arith.constant 9.99999974E-6 : f32
    %14 = vector.broadcast %cst_8 : f32 to vector<32x1xf32>
    %15 = arith.addf %13, %14 : vector<32x1xf32>
    %16 = math.rsqrt %15 : vector<32x1xf32>
    %17 = vector.broadcast %16 : vector<32x1xf32> to vector<32x32xf32>
    %18 = arith.mulf %8, %17 : vector<32x32xf32>
    %19 = vector.broadcast %1 : vector<1x32xf32> to vector<32x32xf32>
    %20 = arith.mulf %18, %19 : vector<32x32xf32>
    %21 = vector.broadcast %2 : vector<1x32xf32> to vector<32x32xf32>
    %22 = arith.addf %20, %21 : vector<32x32xf32>
    %c0_9 = arith.constant 0 : index
    %c0_10 = arith.constant 0 : index
    %23 = vector.load %arg4[%c0_9, %c0_10] : memref<32x128xf32, #tpu.memory_space<vmem>>, vector<32x128xf32>
    %cst_11 = arith.constant dense<0.000000e+00> : vector<32x128xf32>
    %24 = tpu.matmul %22, %23, %cst_11 {dimension_numbers = #tpu.dot_dimension_numbers<[1], [0], [0], [1], [0, 0, 1, 1], [], []>} : vector<32x32xf32>, vector<32x128xf32>, vector<32x128xf32> -> vector<32x128xf32>
    %c0_12 = arith.constant 0 : index
    %c0_13 = arith.constant 0 : index
    %25 = vector.load %arg5[%c0_12, %c0_13] : memref<1x128xf32, #tpu.memory_space<vmem>>, vector<1x128xf32>
    %26 = vector.broadcast %25 : vector<1x128xf32> to vector<32x128xf32>
    %27 = arith.addf %24, %26 : vector<32x128xf32>
    %c0_14 = arith.constant 0 : index
    %c0_15 = arith.constant 0 : index
    %28 = vector.load %arg6[%c0_14, %c0_15] : memref<128x32xf32, #tpu.memory_space<vmem>>, vector<128x32xf32>
    %cst_16 = arith.constant dense<0.000000e+00> : vector<32x32xf32>
    %29 = tpu.matmul %27, %28, %cst_16 {dimension_numbers = #tpu.dot_dimension_numbers<[1], [0], [0], [1], [0, 0, 1, 1], [], []>} : vector<32x128xf32>, vector<128x32xf32>, vector<32x32xf32> -> vector<32x32xf32>
    %c0_17 = arith.constant 0 : index
    %c0_18 = arith.constant 0 : index
    %30 = vector.load %arg7[%c0_17, %c0_18] : memref<1x32xf32, #tpu.memory_space<vmem>>, vector<1x32xf32>
    %31 = vector.broadcast %30 : vector<1x32xf32> to vector<32x32xf32>
    %32 = arith.addf %29, %31 : vector<32x32xf32>
    %33 = arith.addf %0, %32 : vector<32x32xf32>
    %c0_19 = arith.constant 0 : index
    %c0_20 = arith.constant 0 : index
    %34 = vector.load %arg8[%c0_19, %c0_20] : memref<1x32xf32, #tpu.memory_space<vmem>>, vector<1x32xf32>
    %c0_21 = arith.constant 0 : index
    %c0_22 = arith.constant 0 : index
    %35 = vector.load %arg9[%c0_21, %c0_22] : memref<1x32xf32, #tpu.memory_space<vmem>>, vector<1x32xf32>
    %cst_23 = arith.constant dense<0.000000e+00> : vector<32xf32>
    %36 = vector.multi_reduction <add>, %33, %cst_23 [1] : vector<32x32xf32> to vector<32xf32>
    %37 = vector.shape_cast %36 : vector<32xf32> to vector<32x1xf32>
    %cst_24 = arith.constant 3.200000e+01 : f32
    %38 = vector.broadcast %cst_24 : f32 to vector<32x1xf32>
    %39 = arith.divf %37, %38 : vector<32x1xf32>
    %40 = vector.broadcast %39 : vector<32x1xf32> to vector<32x32xf32>
    %41 = arith.subf %33, %40 : vector<32x32xf32>
    %42 = arith.mulf %41, %41 : vector<32x32xf32>
    %cst_25 = arith.constant dense<0.000000e+00> : vector<32xf32>
    %43 = vector.multi_reduction <add>, %42, %cst_25 [1] : vector<32x32xf32> to vector<32xf32>
    %44 = vector.shape_cast %43 : vector<32xf32> to vector<32x1xf32>
    %cst_26 = arith.constant 3.200000e+01 : f32
    %45 = vector.broadcast %cst_26 : f32 to vector<32x1xf32>
    %46 = arith.divf %44, %45 : vector<32x1xf32>
    %cst_27 = arith.constant 9.99999974E-6 : f32
    %47 = vector.broadcast %cst_27 : f32 to vector<32x1xf32>
    %48 = arith.addf %46, %47 : vector<32x1xf32>
    %49 = math.rsqrt %48 : vector<32x1xf32>
    %50 = vector.broadcast %49 : vector<32x1xf32> to vector<32x32xf32>
    %51 = arith.mulf %41, %50 : vector<32x32xf32>
    %52 = vector.broadcast %34 : vector<1x32xf32> to vector<32x32xf32>
    %53 = arith.mulf %51, %52 : vector<32x32xf32>
    %54 = vector.broadcast %35 : vector<1x32xf32> to vector<32x32xf32>
    %55 = arith.addf %53, %54 : vector<32x32xf32>
    %c0_28 = arith.constant 0 : index
    %c0_29 = arith.constant 0 : index
    %56 = vector.load %arg10[%c0_28, %c0_29] : memref<32x32xf32, #tpu.memory_space<vmem>>, vector<32x32xf32>
    tpu.vector_store %arg10[%c0_28, %c0_29], %55 {strides = array<i32>} : memref<32x32xf32, #tpu.memory_space<vmem>>, vector<32x32xf32>,
    return
  }
  func.func @transform_0(%arg0: i32) -> (i32, i32) {
    %c0_i32 = arith.constant 0 : i32
    %c0_i32_0 = arith.constant 0 : i32
    return %arg0, %c0_i32 : i32, i32
  }
  func.func @transform_1(%arg0: i32) -> (i32, i32) {
    %c0_i32 = arith.constant 0 : i32
    %c0_i32_0 = arith.constant 0 : i32
    %c0_i32_1 = arith.constant 0 : i32
    return %c0_i32, %c0_i32_0 : i32, i32
  }
  func.func @transform_2(%arg0: i32) -> (i32, i32) {
    %c0_i32 = arith.constant 0 : i32
    %c0_i32_0 = arith.constant 0 : i32
    %c0_i32_1 = arith.constant 0 : i32
    return %c0_i32, %c0_i32_0 : i32, i32
  }
  func.func @transform_3(%arg0: i32) -> (i32, i32) {
    %c0_i32 = arith.constant 0 : i32
    %c0_i32_0 = arith.constant 0 : i32
    %c0_i32_1 = arith.constant 0 : i32
    return %c0_i32, %c0_i32_0 : i32, i32
  }
  func.func @transform_4(%arg0: i32) -> (i32, i32) {
    %c0_i32 = arith.constant 0 : i32
    %c0_i32_0 = arith.constant 0 : i32
    %c0_i32_1 = arith.constant 0 : i32
    return %c0_i32, %c0_i32_0 : i32, i32
  }
  func.func @transform_5(%arg0: i32) -> (i32, i32) {
    %c0_i32 = arith.constant 0 : i32
    %c0_i32_0 = arith.constant 0 : i32
    %c0_i32_1 = arith.constant 0 : i32
    return %c0_i32, %c0_i32_0 : i32, i32
  }
  func.func @transform_6(%arg0: i32) -> (i32, i32) {
    %c0_i32 = arith.constant 0 : i32
    %c0_i32_0 = arith.constant 0 : i32
    %c0_i32_1 = arith.constant 0 : i32
    return %c0_i32, %c0_i32_0 : i32, i32
  }
  func.func @transform_7(%arg0: i32) -> (i32, i32) {
    %c0_i32 = arith.constant 0 : i32
    %c0_i32_0 = arith.constant 0 : i32
    %c0_i32_1 = arith.constant 0 : i32
    return %c0_i32, %c0_i32_0 : i32, i32
  }
  func.func @transform_8(%arg0: i32) -> (i32, i32) {
    %c0_i32 = arith.constant 0 : i32
    %c0_i32_0 = arith.constant 0 : i32
    %c0_i32_1 = arith.constant 0 : i32
    return %c0_i32, %c0_i32_0 : i32, i32
  }
  func.func @transform_9(%arg0: i32) -> (i32, i32) {
    %c0_i32 = arith.constant 0 : i32
    %c0_i32_0 = arith.constant 0 : i32
    return %arg0, %c0_i32 : i32, i32
  }
}

module attributes {stable_mosaic.version = 11 : i64} {
  func.func @_tap_matmul_kernel(%arg0: i32, %arg1: i32, %arg2: memref<1x32x32xf32, #tpu.memory_space<vmem>>, %arg3: memref<1x32x32xf32, #tpu.memory_space<vmem>>, %arg4: memref<1x32xf32, #tpu.memory_space<vmem>>, %arg5: memref<32x32xf32, #tpu.memory_space<vmem>>, %arg6: memref<32x32xf32, #tpu.memory_space<vmem>>) attributes {dimension_semantics = [#tpu.dimension_semantics<parallel>, #tpu.dimension_semantics<arbitrary>], iteration_bounds = array<i64: 1, 2>, scalar_prefetch = 0 : i64, scratch_operands = 1 : i64, tpu.core_type = #tpu.core_type<tc>, window_params = [{transform_indices = @transform_0, window_bounds = array<i64: 1, 32, 32>}, {transform_indices = @transform_1, window_bounds = array<i64: 1, 32, 32>}, {pipeline_mode = #tpu.pipeline_mode<synchronous>, transform_indices = @transform_2, window_bounds = array<i64: 1, 32>}, {transform_indices = @transform_3, window_bounds = array<i64: 32, 32>}]} {
    %c0_i32 = arith.constant 0 : i32
    %0 = arith.cmpi eq, %arg1, %c0_i32 : i32
    %1 = arith.extui %0 : i1 to i32
    %c0_i32_0 = arith.constant 0 : i32
    %2 = arith.cmpi ne, %1, %c0_i32_0 : i32
    scf.if %2 {
      %cst_11 = arith.constant 0.000000e+00 : f32
      %14 = vector.broadcast %cst_11 : f32 to vector<32x32xf32>
      %c0_12 = arith.constant 0 : index
      %c0_13 = arith.constant 0 : index
      %15 = vector.load %arg6[%c0_12, %c0_13] : memref<32x32xf32, #tpu.memory_space<vmem>>, vector<32x32xf32>
      tpu.vector_store %arg6[%c0_12, %c0_13], %14 {strides = array<i32>} : memref<32x32xf32, #tpu.memory_space<vmem>>, vector<32x32xf32>,
    } else {
    }
    %c0 = arith.constant 0 : index
    %c0_1 = arith.constant 0 : index
    %3 = vector.load %arg6[%c0, %c0_1] : memref<32x32xf32, #tpu.memory_space<vmem>>, vector<32x32xf32>
    %c0_2 = arith.constant 0 : index
    %c0_3 = arith.constant 0 : index
    %c0_4 = arith.constant 0 : index
    %4 = vector.load %arg2[%c0_2, %c0_3, %c0_4] : memref<1x32x32xf32, #tpu.memory_space<vmem>>, vector<1x32x32xf32>
    %5 = vector.shape_cast %4 : vector<1x32x32xf32> to vector<32x32xf32>
    %c0_5 = arith.constant 0 : index
    %c0_6 = arith.constant 0 : index
    %c0_7 = arith.constant 0 : index
    %6 = vector.load %arg3[%c0_5, %c0_6, %c0_7] : memref<1x32x32xf32, #tpu.memory_space<vmem>>, vector<1x32x32xf32>
    %7 = vector.shape_cast %6 : vector<1x32x32xf32> to vector<32x32xf32>
    %cst = arith.constant dense<0.000000e+00> : vector<32x32xf32>
    %8 = tpu.matmul %5, %7, %cst {dimension_numbers = #tpu.dot_dimension_numbers<[1], [0], [0], [1], [0, 0, 1, 1], [], []>} : vector<32x32xf32>, vector<32x32xf32>, vector<32x32xf32> -> vector<32x32xf32>
    %9 = arith.addf %3, %8 : vector<32x32xf32>
    %c0_8 = arith.constant 0 : index
    %c0_9 = arith.constant 0 : index
    %10 = vector.load %arg6[%c0_8, %c0_9] : memref<32x32xf32, #tpu.memory_space<vmem>>, vector<32x32xf32>
    tpu.vector_store %arg6[%c0_8, %c0_9], %9 {strides = array<i32>} : memref<32x32xf32, #tpu.memory_space<vmem>>, vector<32x32xf32>,
    %c1_i32 = arith.constant 1 : i32
    %11 = arith.cmpi eq, %arg1, %c1_i32 : i32
    %12 = arith.extui %11 : i1 to i32
    %c0_i32_10 = arith.constant 0 : i32
    %13 = arith.cmpi ne, %12, %c0_i32_10 : i32
    scf.if %13 {
      %c0_11 = arith.constant 0 : index
      %c0_12 = arith.constant 0 : index
      %14 = vector.load %arg6[%c0_11, %c0_12] : memref<32x32xf32, #tpu.memory_space<vmem>>, vector<32x32xf32>
      %c0_13 = arith.constant 0 : index
      %c0_14 = arith.constant 0 : index
      %15 = vector.load %arg4[%c0_13, %c0_14] : memref<1x32xf32, #tpu.memory_space<vmem>>, vector<1x32xf32>
      %16 = vector.broadcast %15 : vector<1x32xf32> to vector<32x32xf32>
      %17 = arith.addf %14, %16 : vector<32x32xf32>
      %c0_15 = arith.constant 0 : index
      %c0_16 = arith.constant 0 : index
      %18 = vector.load %arg5[%c0_15, %c0_16] : memref<32x32xf32, #tpu.memory_space<vmem>>, vector<32x32xf32>
      tpu.vector_store %arg5[%c0_15, %c0_16], %17 {strides = array<i32>} : memref<32x32xf32, #tpu.memory_space<vmem>>, vector<32x32xf32>,
    } else {
    }
    return
  }
  func.func @transform_0(%arg0: i32, %arg1: i32) -> (i32, i32, i32) {
    %c0_i32 = arith.constant 0 : i32
    %c0_i32_0 = arith.constant 0 : i32
    return %arg1, %arg0, %c0_i32 : i32, i32, i32
  }
  func.func @transform_1(%arg0: i32, %arg1: i32) -> (i32, i32, i32) {
    %c0_i32 = arith.constant 0 : i32
    %c0_i32_0 = arith.constant 0 : i32
    %c0_i32_1 = arith.constant 0 : i32
    return %arg1, %c0_i32, %c0_i32_0 : i32, i32, i32
  }
  func.func @transform_2(%arg0: i32, %arg1: i32) -> (i32, i32) {
    %c0_i32 = arith.constant 0 : i32
    %c0_i32_0 = arith.constant 0 : i32
    %c0_i32_1 = arith.constant 0 : i32
    return %c0_i32, %c0_i32_0 : i32, i32
  }
  func.func @transform_3(%arg0: i32, %arg1: i32) -> (i32, i32) {
    %c0_i32 = arith.constant 0 : i32
    %c0_i32_0 = arith.constant 0 : i32
    return %arg0, %c0_i32 : i32, i32
  }
}

module attributes {stable_mosaic.version = 11 : i64} {
  func.func @_tap_matmul_kernel(%arg0: i32, %arg1: i32, %arg2: memref<1x32x32xf32, #tpu.memory_space<vmem>>, %arg3: memref<1x32x128xf32, #tpu.memory_space<vmem>>, %arg4: memref<1x128xf32, #tpu.memory_space<vmem>>, %arg5: memref<32x128xf32, #tpu.memory_space<vmem>>, %arg6: memref<32x128xf32, #tpu.memory_space<vmem>>) attributes {dimension_semantics = [#tpu.dimension_semantics<parallel>, #tpu.dimension_semantics<arbitrary>], iteration_bounds = array<i64: 1, 1>, scalar_prefetch = 0 : i64, scratch_operands = 1 : i64, tpu.core_type = #tpu.core_type<tc>, window_params = [{transform_indices = @transform_0, window_bounds = array<i64: 1, 32, 32>}, {transform_indices = @transform_1, window_bounds = array<i64: 1, 32, 128>}, {pipeline_mode = #tpu.pipeline_mode<synchronous>, transform_indices = @transform_2, window_bounds = array<i64: 1, 128>}, {transform_indices = @transform_3, window_bounds = array<i64: 32, 128>}]} {
    %c0_i32 = arith.constant 0 : i32
    %0 = arith.cmpi eq, %arg1, %c0_i32 : i32
    %1 = arith.extui %0 : i1 to i32
    %c0_i32_0 = arith.constant 0 : i32
    %2 = arith.cmpi ne, %1, %c0_i32_0 : i32
    scf.if %2 {
      %cst_12 = arith.constant 0.000000e+00 : f32
      %14 = vector.broadcast %cst_12 : f32 to vector<32x128xf32>
      %c0_13 = arith.constant 0 : index
      %c0_14 = arith.constant 0 : index
      %15 = vector.load %arg6[%c0_13, %c0_14] : memref<32x128xf32, #tpu.memory_space<vmem>>, vector<32x128xf32>
      tpu.vector_store %arg6[%c0_13, %c0_14], %14 {strides = array<i32>} : memref<32x128xf32, #tpu.memory_space<vmem>>, vector<32x128xf32>,
    } else {
    }
    %c0 = arith.constant 0 : index
    %c0_1 = arith.constant 0 : index
    %3 = vector.load %arg6[%c0, %c0_1] : memref<32x128xf32, #tpu.memory_space<vmem>>, vector<32x128xf32>
    %c0_2 = arith.constant 0 : index
    %c0_3 = arith.constant 0 : index
    %c0_4 = arith.constant 0 : index
    %4 = vector.load %arg2[%c0_2, %c0_3, %c0_4] : memref<1x32x32xf32, #tpu.memory_space<vmem>>, vector<1x32x32xf32>
    %5 = vector.shape_cast %4 : vector<1x32x32xf32> to vector<32x32xf32>
    %c0_5 = arith.constant 0 : index
    %c0_6 = arith.constant 0 : index
    %c0_7 = arith.constant 0 : index
    %6 = vector.load %arg3[%c0_5, %c0_6, %c0_7] : memref<1x32x128xf32, #tpu.memory_space<vmem>>, vector<1x32x128xf32>
    %7 = vector.shape_cast %6 : vector<1x32x128xf32> to vector<32x128xf32>
    %cst = arith.constant dense<0.000000e+00> : vector<32x128xf32>
    %8 = tpu.matmul %5, %7, %cst {dimension_numbers = #tpu.dot_dimension_numbers<[1], [0], [0], [1], [0, 0, 1, 1], [], []>} : vector<32x32xf32>, vector<32x128xf32>, vector<32x128xf32> -> vector<32x128xf32>
    %9 = arith.addf %3, %8 : vector<32x128xf32>
    %c0_8 = arith.constant 0 : index
    %c0_9 = arith.constant 0 : index
    %10 = vector.load %arg6[%c0_8, %c0_9] : memref<32x128xf32, #tpu.memory_space<vmem>>, vector<32x128xf32>
    tpu.vector_store %arg6[%c0_8, %c0_9], %9 {strides = array<i32>} : memref<32x128xf32, #tpu.memory_space<vmem>>, vector<32x128xf32>,
    %c0_i32_10 = arith.constant 0 : i32
    %11 = arith.cmpi eq, %arg1, %c0_i32_10 : i32
    %12 = arith.extui %11 : i1 to i32
    %c0_i32_11 = arith.constant 0 : i32
    %13 = arith.cmpi ne, %12, %c0_i32_11 : i32
    scf.if %13 {
      %c0_12 = arith.constant 0 : index
      %c0_13 = arith.constant 0 : index
      %14 = vector.load %arg6[%c0_12, %c0_13] : memref<32x128xf32, #tpu.memory_space<vmem>>, vector<32x128xf32>
      %c0_14 = arith.constant 0 : index
      %c0_15 = arith.constant 0 : index
      %15 = vector.load %arg4[%c0_14, %c0_15] : memref<1x128xf32, #tpu.memory_space<vmem>>, vector<1x128xf32>
      %16 = vector.broadcast %15 : vector<1x128xf32> to vector<32x128xf32>
      %17 = arith.addf %14, %16 : vector<32x128xf32>
      %c0_16 = arith.constant 0 : index
      %c0_17 = arith.constant 0 : index
      %18 = vector.load %arg5[%c0_16, %c0_17] : memref<32x128xf32, #tpu.memory_space<vmem>>, vector<32x128xf32>
      tpu.vector_store %arg5[%c0_16, %c0_17], %17 {strides = array<i32>} : memref<32x128xf32, #tpu.memory_space<vmem>>, vector<32x128xf32>,
    } else {
    }
    return
  }
  func.func @transform_0(%arg0: i32, %arg1: i32) -> (i32, i32, i32) {
    %c0_i32 = arith.constant 0 : i32
    %c0_i32_0 = arith.constant 0 : i32
    return %arg1, %arg0, %c0_i32 : i32, i32, i32
  }
  func.func @transform_1(%arg0: i32, %arg1: i32) -> (i32, i32, i32) {
    %c0_i32 = arith.constant 0 : i32
    %c0_i32_0 = arith.constant 0 : i32
    %c0_i32_1 = arith.constant 0 : i32
    return %arg1, %c0_i32, %c0_i32_0 : i32, i32, i32
  }
  func.func @transform_2(%arg0: i32, %arg1: i32) -> (i32, i32) {
    %c0_i32 = arith.constant 0 : i32
    %c0_i32_0 = arith.constant 0 : i32
    %c0_i32_1 = arith.constant 0 : i32
    return %c0_i32, %c0_i32_0 : i32, i32
  }
  func.func @transform_3(%arg0: i32, %arg1: i32) -> (i32, i32) {
    %c0_i32 = arith.constant 0 : i32
    %c0_i32_0 = arith.constant 0 : i32
    return %arg0, %c0_i32 : i32, i32
  }
}

</mosaic_0001>

<llo_original>
// kernel: tile.14
$region0: #{tile.14}
  #allocation0 [shape = 's32[1]{0}', space=sflag, size = 0x4, scoped, tag = 'scoped memory for tile.14']
  %s0 = inlined_call_operand.vmem [shape: f32[32], index: 0, kind: input, shape index: {}]
  %s1 = inlined_call_operand.vmem [shape: f32[4,32], index: 1, kind: output, shape index: {}]
  // Predicated region
  $region2: #{tile.14} parent=0 // pred_check
    _
  $region3: #{tile.14} parent=0 // pred_check_branch
    %3 = sbr.rel (0) target = $region5
  $region4: #{tile.14} parent=0 // pred_region
    _
  $region5: #{tile.14} parent=0 // pred_fallthru
    _
  %v4 = vld [vmem:[%s0] ss:$0 sm:$0xff]
  %5 = vst [vmem:[%s1] sm:$0xf] %v4

// kernel: tile.15
$region0: #{tile.15}
  %s0 = inlined_call_operand.vmem [shape: f32[4,32], index: 0, kind: input, shape index: {}]
  %s1 = inlined_call_operand.vmem [shape: f32[1,128], index: 1, kind: output, shape index: {}]
  $region1: #{tile.15} parent=0
    #allocation0 [shape = 'u8[4096]{0}', space=vmem, size = 0x1000, scoped, tag = 'scoped mem for output reshape']
    #allocation1 [shape = 'u8[4096]{0}', space=vmem, size = 0x1000, scoped, tag = 'scoped mem for input reshape']
    %s3 = sshll.u32 1, 4
    %s4 = ssub.s32 %s3, 1
    %v5 = vld [vmem:[%s0] sm:%s4]
    %6 = vst [vmem:[#allocation1] sm:%s4] %v5
    %v7 = vld [vmem:[#allocation1] sm:$0x1]
    %vm8 = vcmask 261120
    %9 = vst.msk [vmem:[#allocation0] sm:$0x1] %vm8, %v7
    %s10 = scalar_lea.vmem [#allocation1], 3
    %v11 = vld [vmem:[%s10] sm:$0x1]
    %12 = vrot.lane.b32.xlu0 %v11, 96
    %v13 = vpop.permute.xlu0 %12
    %vm14 = vcmask 1048320
    %15 = vst.msk [vmem:[#allocation0] sm:$0x1] %vm14, %v13
    %s16 = scalar_lea.vmem [#allocation1], 2
    %v17 = vld [vmem:[%s16] sm:$0x1]
    %18 = vrot.lane.b32.xlu0 %v17, 64
    %v19 = vpop.permute.xlu0 %18
    %vm20 = vcmask 785920
    %21 = vst.msk [vmem:[#allocation0] sm:$0x1] %vm20, %v19
    %s22 = scalar_lea.vmem [#allocation1], 1
    %v23 = vld [vmem:[%s22] sm:$0x1]
    %24 = vrot.lane.b32.xlu0 %v23, 32
    %v25 = vpop.permute.xlu0 %24
    %vm26 = vcmask 523520
    %27 = vst.msk [vmem:[#allocation0] sm:$0x1] %vm26, %v25
    %s29 = sshll.u32 1, 1
    %s30 = ssub.s32 %s29, 1
    %v32 = vld [vmem:[#allocation0] sm:%s30]
    %s33 = sshll.u32 1, 1
    %s34 = ssub.s32 %s33, 1
    %35 = vst [vmem:[%s1] sm:%s34] %v32

// kernel: _lambda_.18
$region0: #{_lambda_.18}
  #allocation0 [shape = 'u32[]', space=smem, size = 0x4, offset = 0x4, fixed_abs, tag = 'smem constant byte address 0x4 - core index']
  #allocation1 [shape = 'u32[144,128]{1,0:T(1,128)}', space=vmem, size = 0x12000, scoped, tag = 'internal scratch']
  %s0 = inlined_call_operand.vmem [shape: f32[2,20,32], index: 0, kind: input, shape index: {}]
  %s1 = inlined_call_operand.vmem [shape: f32[2,16,32], index: 1, kind: output, shape index: {}]
  %s2 = sld [smem:[#allocation0]]
  $region37: #{_lambda_.18} parent=0
    _
  %s4 = ssub.s32 1, %s2
  %s5 = scalar_select 0, %s4, %s2
  loop: start=0, step=1, limit=4
  $region2: #{_lambda_.18} parent=0 // loop_pre_header
    _
  $region3: #{_lambda_.18} parent=0 // loop_header
    %s7 = sphi 0, %s11
    %p8 = scmp.ge.s32.totalorder %s7, 4
    %s17 = sphi 0, %s19
    %s20 = sphi 0, %s17
    %s21 = sphi 0, %s20
    %s37 = sphi 0, %s21
    %s43 = sphi 0, %s45
    %s46 = sphi 0, %s43
    %s47 = sphi 0, %s46
    %s63 = sphi 0, %s47
  $region4: #{_lambda_.18} parent=0 // loop_header_branch
    %10 = sbr.rel (%p8) target = $region8
  $region5: #{_lambda_.18} parent=0 // loop_body
    %s12 = ssub.s32 %s7, 1
    %s13 = ssub.s32 %s7, 2
    %s14 = sadd.s32 %s7, 1
    %s15 = ssub.s32 %s7, %s14
    %p16 = scmp.eq.s32.totalorder %s15, 0
    %s18 = sadd.s32 %s17, 1
    %s19 = scalar_select %p16, %s17, %s18
    %p22 = pneg %p16
    %p23 = scmp.eq.s32.totalorder %s7, 1
    %p24 = por %p22, %p23
    %p25 = scmp.ne.s32.totalorder %s17, %s20
    %p26 = scmp.eq.s32.totalorder %s7, 0
    %p27 = por %p25, %p26
    %p28 = scmp.ne.s32.totalorder %s17, %s20
    %p29 = scmp.eq.s32.totalorder %s12, 1
    %p30 = por %p28, %p29
    %p31 = scmp.ne.s32.totalorder %s20, %s21
    %p32 = scmp.eq.s32.totalorder %s12, 0
    %p33 = por %p31, %p32
    %p34 = scmp.ne.s32.totalorder %s20, %s21
    %p35 = scmp.eq.s32.totalorder %s13, 1
    %p36 = por %p34, %p35
    %p38 = scmp.ne.s32.totalorder %s21, %s37
    %p39 = scmp.eq.s32.totalorder %s13, 0
    %p40 = por %p38, %p39
    %s41 = ssub.s32 %s7, %s14
    %p42 = scmp.eq.s32.totalorder %s41, 0
    %s44 = sadd.s32 %s43, 1
    %s45 = scalar_select %p42, %s43, %s44
    %p48 = pneg %p42
    %p49 = scmp.eq.s32.totalorder %s7, 1
    %p50 = por %p48, %p49
    %p51 = scmp.ne.s32.totalorder %s43, %s46
    %p52 = scmp.eq.s32.totalorder %s7, 0
    %p53 = por %p51, %p52
    %p54 = scmp.ne.s32.totalorder %s43, %s46
    %p55 = scmp.eq.s32.totalorder %s12, 1
    %p56 = por %p54, %p55
    %p57 = scmp.ne.s32.totalorder %s46, %s47
    %p58 = scmp.eq.s32.totalorder %s12, 0
    %p59 = por %p57, %p58
    %p60 = scmp.ne.s32.totalorder %s46, %s47
    %p61 = scmp.eq.s32.totalorder %s13, 1
    %p62 = por %p60, %p61
    %p64 = scmp.ne.s32.totalorder %s47, %s63
    %p65 = scmp.eq.s32.totalorder %s13, 0
    %p66 = por %p64, %p65
    %p67 = scmp.le.s32.totalorder 1, %s7
    %p68 = scmp.lt.s32.totalorder %s7, 3
    %p69 = pnand %p67, %p68
    %p70 = pneg %p69
    // Predicated region
    $region9: #{_lambda_.18} parent=5 // pred_check
      _
    $region10: #{_lambda_.18} parent=5 // pred_check_branch
      %72 = sbr.rel (%p69) target = $region12
    $region11: #{_lambda_.18} parent=5 // pred_region
      %s73 = ssub.s32 %s7, 1
    $region12: #{_lambda_.18} parent=5 // pred_fallthru
      _
    %p74 = scmp.lt.s32.totalorder %s7, 2
    // Predicated region
    $region13: #{_lambda_.18} parent=5 // pred_check
      %p75 = pneg %p74
    $region14: #{_lambda_.18} parent=5 // pred_check_branch
      %77 = sbr.rel (%p75) target = $region16
    $region15: #{_lambda_.18} parent=5 // pred_region
      // Predicated region
      $region17: #{_lambda_.18} parent=15 // pred_check
        %p78 = pneg %p27
      $region18: #{_lambda_.18} parent=15 // pred_check_branch
        %80 = sbr.rel (%p78) target = $region20
      $region19: #{_lambda_.18} parent=15 // pred_region
        %p81 = scmp.lt.s32.totalorder %s7, 1
        %s82 = scalar_select %p81, %s7, 1
        %s83 = smul.addr %s82, 3
        %s84 = smul.addr %s83, 8
        %s85 = scalar_lea.vmem %s0, %s84
      $region20: #{_lambda_.18} parent=15 // pred_fallthru
        _
    $region16: #{_lambda_.18} parent=5 // pred_fallthru
      _
    %p86 = scmp.le.s32.totalorder 1, %s7
    %p87 = scmp.lt.s32.totalorder %s7, 3
    %p88 = pnand %p86, %p87
    %p89 = pneg %p88
    // Predicated region
    $region21: #{_lambda_.18} parent=5 // pred_check
      _
    $region22: #{_lambda_.18} parent=5 // pred_check_branch
      %91 = sbr.rel (%p88) target = $region24
    $region23: #{_lambda_.18} parent=5 // pred_region
      %s92 = ssub.s32 %s7, 1
      %p93 = scmp.lt.s32.totalorder %s12, 1
      %s94 = scalar_select %p93, %s12, 1
      %s95 = smul.addr %s94, 3
      %s96 = smul.addr %s95, 8
      %s97 = scalar_lea.vmem %s0, %s96
      %p98 = pneg %p33
      %p99 = pneg %p30
      %p100 = pneg %p59
      %p101 = pneg %p56
      %p102 = scmp.lt.s32.totalorder %s12, 1
      %s103 = scalar_select %p102, %s12, 1
      %s104 = smul.addr %s103, 2
      %s105 = smul.addr %s104, 8
      %s106 = scalar_lea.vmem %s1, %s105
      %p107 = scmp.lt.s32.totalorder %s12, 1
      %s108 = scalar_select %p107, %s12, 1
      %s109 = smul.addr %s108, 3
      %s110 = smul.addr %s109, 8
      %s111 = scalar_lea.vmem %s0, %s110
      %p112 = scmp.lt.s32.totalorder %s12, 1
      %s113 = scalar_select %p112, %s12, 1
      %s114 = smul.addr %s113, 2
      %s115 = smul.addr %s114, 8
      %s116 = scalar_lea.vmem %s1, %s115
      %v117 = vld [vmem:[%s111] sm:$0xff]
      %v118 = vld [vmem:[%s111 + $0x8] sm:$0xff]
      %v119 = vld [vmem:[%s111 + $0x10] sm:$0xf]
      %vm123 = vcmask 1046528
      %v124 = vrot.slane %v117, 1
      %v125 = vrot.slane %v118, 1
      %v126 = vsel %vm123, %v124, %v125
      %v127 = vrot.slane %v119, 1
      %v128 = vsel %vm123, %v125, %v127
      %v131 = vadd.f32 %v117, %v126
      %v132 = vadd.f32 %v118, %v128
      %vm133 = vcmask 1045504
      %v134 = vrot.slane %v117, 2
      %v135 = vrot.slane %v118, 2
      %v136 = vsel %vm133, %v134, %v135
      %v137 = vrot.slane %v119, 2
      %v138 = vsel %vm133, %v135, %v137
      %v141 = vadd.f32 %v131, %v136
      %v142 = vadd.f32 %v132, %v138
      %vm143 = vcmask 1044480
      %v144 = vrot.slane %v117, 3
      %v145 = vrot.slane %v118, 3
      %v146 = vsel %vm143, %v144, %v145
      %v147 = vrot.slane %v119, 3
      %v148 = vsel %vm143, %v145, %v147
      %v151 = vadd.f32 %v141, %v146
      %v152 = vadd.f32 %v142, %v148
      %vm153 = vcmask 1043456
      %v154 = vrot.slane %v117, 4
      %v155 = vrot.slane %v118, 4
      %v156 = vsel %vm153, %v154, %v155
      %v157 = vrot.slane %v119, 4
      %v158 = vsel %vm153, %v155, %v157
      %v161 = vadd.f32 %v151, %v156
      %v162 = vadd.f32 %v152, %v158
      %v163 = vmul.f32 %v161, 0.2
      %v164 = vmul.f32 %v162, 0.2
      %vm167 = vcmask 1041408
      %v168 = vrot.slane %v163, 6
      %v169 = vrot.slane %v164, 6
      %v170 = vsel %vm167, %v168, %v169
      %v174 = vsub.f32 %v117, %v168
      %v175 = vsub.f32 %v118, %v170
      %v176 = vsub.f32 %v119, %v169
      %vm177 = vcmask 261122
      %178 = vst.msk [vmem:[%s116 - $0x2] sm:$0xfc] %vm177, %v174
      %vm179 = vcmask 261120
      %180 = vst.msk [vmem:[%s116 + $0x6] sm:$0xff] %vm179, %v175
      %vm181 = vcmask 254976
      %182 = vst.msk [vmem:[%s116 + $0xe] sm:$0x3] %vm181, %v176
      %p183 = scmp.lt.s32.totalorder %s12, 1
      %s184 = scalar_select %p183, %s12, 1
      %s185 = smul.addr %s184, 2
      %s186 = smul.addr %s185, 8
      %s187 = scalar_lea.vmem %s1, %s186
      // Predicated region
      $region25: #{_lambda_.18} parent=23 // pred_check
        %p188 = pneg %p56
      $region26: #{_lambda_.18} parent=23 // pred_check_branch
        %190 = sbr.rel (%p188) target = $region28
      $region27: #{_lambda_.18} parent=23 // pred_region
        _
      $region28: #{_lambda_.18} parent=23 // pred_fallthru
        _
    $region24: #{_lambda_.18} parent=5 // pred_fallthru
      _
    %p191 = scmp.le.s32.totalorder 2, %s7
    // Predicated region
    $region29: #{_lambda_.18} parent=5 // pred_check
      %p192 = pneg %p191
    $region30: #{_lambda_.18} parent=5 // pred_check_branch
      %194 = sbr.rel (%p192) target = $region32
    $region31: #{_lambda_.18} parent=5 // pred_region
      %s195 = ssub.s32 %s7, 2
      // Predicated region
      $region33: #{_lambda_.18} parent=31 // pred_check
        %p196 = pneg %p62
      $region34: #{_lambda_.18} parent=31 // pred_check_branch
        %198 = sbr.rel (%p196) target = $region36
      $region35: #{_lambda_.18} parent=31 // pred_region
        %p199 = scmp.lt.s32.totalorder %s13, 1
        %s200 = scalar_select %p199, %s13, 1
        %s201 = smul.addr %s200, 2
        %s202 = smul.addr %s201, 8
        %s203 = scalar_lea.vmem %s1, %s202
      $region36: #{_lambda_.18} parent=31 // pred_fallthru
        _
    $region32: #{_lambda_.18} parent=5 // pred_fallthru
      _
  $region6: #{_lambda_.18} parent=0 // loop_footer
    %s11 = sadd.s32 1, %s7
  $region7: #{_lambda_.18} parent=0 // loop_footer_branch
    %6 = sbr.rel target = $region3
  $region8: #{_lambda_.18} parent=0 // loop_exit
    _

// kernel: _lambda_.19
$region0: #{_lambda_.19}
  #allocation0 [shape = 'u32[]', space=smem, size = 0x4, offset = 0x4, fixed_abs, tag = 'smem constant byte address 0x4 - core index']
  #allocation1 [shape = 'u32[144,128]{1,0:T(1,128)}', space=vmem, size = 0x12000, scoped, tag = 'internal scratch']
  #allocation2 [shape = 'f32[16,32]{1,0:T(8,128)}', space=vmem, size = 0x2000, scoped, tag = 'scratch operand']
  %s0 = inlined_call_operand.vmem [shape: f32[4,16,32], index: 0, kind: input, shape index: {}]
  %s1 = inlined_call_operand.vmem [shape: f32[4,32,32], index: 1, kind: input, shape index: {}]
  %s2 = inlined_call_operand.vmem [shape: f32[1,32], index: 2, kind: input, shape index: {}]
  %s3 = inlined_call_operand.vmem [shape: f32[16,32], index: 3, kind: output, shape index: {}]
  %s4 = sld [smem:[#allocation0]]
  $region53: #{_lambda_.19} parent=0
    _
  %s6 = ssub.s32 1, %s4
  %s7 = scalar_select 0, %s6, %s4
  loop: start=0, step=1, limit=6
  $region2: #{_lambda_.19} parent=0 // loop_pre_header
    _
  $region3: #{_lambda_.19} parent=0 // loop_header
    %s9 = sphi 0, %s13
    %p10 = scmp.ge.s32.totalorder %s9, 6
    %s16 = sphi 0, %s28
    %s17 = sphi 0, %s24
    %s18 = sphi 0, %s16
    %s19 = sphi 0, %s17
    %s20 = sphi 0, %s18
    %s21 = sphi 0, %s19
    %s33 = sphi 0, %s35
    %s36 = sphi 0, %s33
    %s37 = sphi 0, %s36
    %s53 = sphi 0, %s37
    %s59 = sphi 0, %s61
    %s62 = sphi 0, %s59
    %s63 = sphi 0, %s62
    %s79 = sphi 0, %s63
    %s83 = sphi 0, %s83
    %s85 = sphi 0, %s83
    %s86 = sphi 0, %s85
    %s100 = sphi 0, %s86
    %s106 = sphi 0, %s108
    %s109 = sphi 0, %s106
    %s110 = sphi 0, %s109
    %s126 = sphi 0, %s110
  $region4: #{_lambda_.19} parent=0 // loop_header_branch
    %12 = sbr.rel (%p10) target = $region8
  $region5: #{_lambda_.19} parent=0 // loop_body
    %s14 = ssub.s32 %s9, 1
    %s15 = ssub.s32 %s9, 2
    %s22 = sadd.s32 1, %s17
    %p23 = scmp.ge.s32.totalorder %s22, 4
    %s24 = scalar_select %p23, 0, %s22
    %s25 = sadd.s32 1, %s16
    %s26 = scalar_select %p23, %s25, %s16
    %p27 = scmp.ge.s32.totalorder %s26, 1
    %s28 = scalar_select %p27, 0, %s26
    %s29 = ssub.s32 %s17, %s24
    %s30 = ssub.s32 %s16, %s28
    %s31 = sor.u32 %s29, %s30
    %p32 = scmp.eq.s32.totalorder %s31, 0
    %s34 = sadd.s32 %s33, 1
    %s35 = scalar_select %p32, %s33, %s34
    %p38 = pneg %p32
    %p39 = scmp.eq.s32.totalorder %s9, 3
    %p40 = por %p38, %p39
    %p41 = scmp.ne.s32.totalorder %s33, %s36
    %p42 = scmp.eq.s32.totalorder %s9, 0
    %p43 = por %p41, %p42
    %p44 = scmp.ne.s32.totalorder %s33, %s36
    %p45 = scmp.eq.s32.totalorder %s14, 3
    %p46 = por %p44, %p45
    %p47 = scmp.ne.s32.totalorder %s36, %s37
    %p48 = scmp.eq.s32.totalorder %s14, 0
    %p49 = por %p47, %p48
    %p50 = scmp.ne.s32.totalorder %s36, %s37
    %p51 = scmp.eq.s32.totalorder %s15, 3
    %p52 = por %p50, %p51
    %p54 = scmp.ne.s32.totalorder %s37, %s53
    %p55 = scmp.eq.s32.totalorder %s15, 0
    %p56 = por %p54, %p55
    %s57 = ssub.s32 %s17, %s24
    %p58 = scmp.eq.s32.totalorder %s57, 0
    %s60 = sadd.s32 %s59, 1
    %s61 = scalar_select %p58, %s59, %s60
    %p64 = pneg %p58
    %p65 = scmp.eq.s32.totalorder %s9, 3
    %p66 = por %p64, %p65
    %p67 = scmp.ne.s32.totalorder %s59, %s62
    %p68 = scmp.eq.s32.totalorder %s9, 0
    %p69 = por %p67, %p68
    %p70 = scmp.ne.s32.totalorder %s59, %s62
    %p71 = scmp.eq.s32.totalorder %s14, 3
    %p72 = por %p70, %p71
    %p73 = scmp.ne.s32.totalorder %s62, %s63
    %p74 = scmp.eq.s32.totalorder %s14, 0
    %p75 = por %p73, %p74
    %p76 = scmp.ne.s32.totalorder %s62, %s63
    %p77 = scmp.eq.s32.totalorder %s15, 3
    %p78 = por %p76, %p77
    %p80 = scmp.ne.s32.totalorder %s63, %s79
    %p81 = scmp.eq.s32.totalorder %s15, 0
    %p82 = por %p80, %p81
    %s84 = sadd.s32 %s83, 1
    %p87 = scmp.eq.s32.totalorder %s9, 3
    %p88 = scmp.ne.s32.totalorder %s83, %s85
    %p89 = scmp.eq.s32.totalorder %s9, 0
    %p90 = por %p88, %p89
    %p91 = scmp.ne.s32.totalorder %s83, %s85
    %p92 = scmp.eq.s32.totalorder %s14, 3
    %p93 = por %p91, %p92
    %p94 = scmp.ne.s32.totalorder %s85, %s86
    %p95 = scmp.eq.s32.totalorder %s14, 0
    %p96 = por %p94, %p95
    %p97 = scmp.ne.s32.totalorder %s85, %s86
    %p98 = scmp.eq.s32.totalorder %s15, 3
    %p99 = por %p97, %p98
    %p101 = scmp.ne.s32.totalorder %s86, %s100
    %p102 = scmp.eq.s32.totalorder %s15, 0
    %p103 = por %p101, %p102
    %s104 = ssub.s32 %s16, %s28
    %p105 = scmp.eq.s32.totalorder %s104, 0
    %s107 = sadd.s32 %s106, 1
    %s108 = scalar_select %p105, %s106, %s107
    %p111 = pneg %p105
    %p112 = scmp.eq.s32.totalorder %s9, 3
    %p113 = por %p111, %p112
    %p114 = scmp.ne.s32.totalorder %s106, %s109
    %p115 = scmp.eq.s32.totalorder %s9, 0
    %p116 = por %p114, %p115
    %p117 = scmp.ne.s32.totalorder %s106, %s109
    %p118 = scmp.eq.s32.totalorder %s14, 3
    %p119 = por %p117, %p118
    %p120 = scmp.ne.s32.totalorder %s109, %s110
    %p121 = scmp.eq.s32.totalorder %s14, 0
    %p122 = por %p120, %p121
    %p123 = scmp.ne.s32.totalorder %s109, %s110
    %p124 = scmp.eq.s32.totalorder %s15, 3
    %p125 = por %p123, %p124
    %p127 = scmp.ne.s32.totalorder %s110, %s126
    %p128 = scmp.eq.s32.totalorder %s15, 0
    %p129 = por %p127, %p128
    %p130 = scmp.le.s32.totalorder 1, %s9
    %p131 = scmp.lt.s32.totalorder %s9, 5
    %p132 = pnand %p130, %p131
    %p133 = pneg %p132
    // Predicated region
    $region9: #{_lambda_.19} parent=5 // pred_check
      _
    $region10: #{_lambda_.19} parent=5 // pred_check_branch
      %135 = sbr.rel (%p132) target = $region12
    $region11: #{_lambda_.19} parent=5 // pred_region
      %s136 = ssub.s32 %s9, 1
      // Predicated region
      $region13: #{_lambda_.19} parent=11 // pred_check
        %p137 = pneg %p96
      $region14: #{_lambda_.19} parent=11 // pred_check_branch
        %139 = sbr.rel (%p137) target = $region16
      $region15: #{_lambda_.19} parent=11 // pred_region
        _
      $region16: #{_lambda_.19} parent=11 // pred_fallthru
        _
    $region12: #{_lambda_.19} parent=5 // pred_fallthru
      _
    %p140 = scmp.lt.s32.totalorder %s9, 4
    // Predicated region
    $region17: #{_lambda_.19} parent=5 // pred_check
      %p141 = pneg %p140
    $region18: #{_lambda_.19} parent=5 // pred_check_branch
      %143 = sbr.rel (%p141) target = $region20
    $region19: #{_lambda_.19} parent=5 // pred_region
      // Predicated region
      $region21: #{_lambda_.19} parent=19 // pred_check
        %p144 = pneg %p43
      $region22: #{_lambda_.19} parent=19 // pred_check_branch
        %146 = sbr.rel (%p144) target = $region24
      $region23: #{_lambda_.19} parent=19 // pred_region
        %s147 = smul.u32 2, %s16
        %p148 = scmp.lt.s32.totalorder %s17, 3
        %s149 = scalar_select %p148, %s17, 3
        %p150 = scmp.lt.s32.totalorder %s147, 1
        %s151 = scalar_select %p150, %s147, 1
        %s152 = smul.addr %s149, 2
        %s153 = sadd.s32 %s151, %s152
        %s154 = smul.addr %s153, 8
        %s155 = scalar_lea.vmem %s0, %s154
        %s156 = smul.u32 2, %s16
      $region24: #{_lambda_.19} parent=19 // pred_fallthru
        _
      // Predicated region
      $region25: #{_lambda_.19} parent=19 // pred_check
        %p157 = pneg %p69
      $region26: #{_lambda_.19} parent=19 // pred_check_branch
        %159 = sbr.rel (%p157) target = $region28
      $region27: #{_lambda_.19} parent=19 // pred_region
        %p160 = scmp.lt.s32.totalorder %s17, 3
        %s161 = scalar_select %p160, %s17, 3
        %s162 = smul.addr %s161, 4
        %s163 = smul.addr %s162, 8
        %s164 = scalar_lea.vmem %s1, %s163
      $region28: #{_lambda_.19} parent=19 // pred_fallthru
        _
    $region20: #{_lambda_.19} parent=5 // pred_fallthru
      _
    %p165 = scmp.le.s32.totalorder 1, %s9
    %p166 = scmp.lt.s32.totalorder %s9, 5
    %p167 = pnand %p165, %p166
    %p168 = pneg %p167
    // Predicated region
    $region29: #{_lambda_.19} parent=5 // pred_check
      _
    $region30: #{_lambda_.19} parent=5 // pred_check_branch
      %170 = sbr.rel (%p167) target = $region32
    $region31: #{_lambda_.19} parent=5 // pred_region
      %s171 = ssub.s32 %s9, 1
      %s172 = smul.u32 2, %s18
      %p173 = scmp.lt.s32.totalorder %s19, 3
      %s174 = scalar_select %p173, %s19, 3
      %p175 = scmp.lt.s32.totalorder %s172, 1
      %s176 = scalar_select %p175, %s172, 1
      %s177 = smul.addr %s174, 2
      %s178 = sadd.s32 %s176, %s177
      %s179 = smul.addr %s178, 8
      %s180 = scalar_lea.vmem %s0, %s179
      %p181 = pneg %p49
      %p182 = pneg %p46
      %p183 = scmp.lt.s32.totalorder %s19, 3
      %s184 = scalar_select %p183, %s19, 3
      %s185 = smul.addr %s184, 4
      %s186 = smul.addr %s185, 8
      %s187 = scalar_lea.vmem %s1, %s186
      %p188 = pneg %p75
      %p189 = pneg %p72
      %p190 = pneg %p96
      %p191 = pneg %p93
      %p192 = pneg %p122
      %p193 = pneg %p119
      %s194 = smul.u32 2, %s18
      %p195 = scmp.lt.s32.totalorder %s194, 1
      %s196 = scalar_select %p195, %s194, 1
      %s197 = smul.addr %s196, 8
      %s198 = scalar_lea.vmem %s3, %s197
      %s199 = smul.u32 2, %s18
      %p200 = scmp.lt.s32.totalorder %s19, 3
      %s201 = scalar_select %p200, %s19, 3
      %p202 = scmp.lt.s32.totalorder %s199, 1
      %s203 = scalar_select %p202, %s199, 1
      %s204 = smul.addr %s201, 2
      %s205 = sadd.s32 %s203, %s204
      %s206 = smul.addr %s205, 8
      %s207 = scalar_lea.vmem %s0, %s206
      %s208 = smul.u32 2, %s18
      %p209 = scmp.lt.s32.totalorder %s19, 3
      %s210 = scalar_select %p209, %s19, 3
      %s211 = smul.addr %s210, 4
      %s212 = smul.addr %s211, 8
      %s213 = scalar_lea.vmem %s1, %s212
      %s214 = smul.u32 2, %s18
      %p215 = scmp.lt.s32.totalorder %s214, 1
      %s216 = scalar_select %p215, %s214, 1
      %s217 = smul.addr %s216, 8
      %s218 = scalar_lea.vmem %s3, %s217
      %s219 = smul.u32 2, %s18
      %p220 = scmp.eq.s32.totalorder %s19, 0
      // Predicated region
      $region33: #{_lambda_.19} parent=31 // pred_check
        %p221 = pneg %p220
      $region34: #{_lambda_.19} parent=31 // pred_check_branch
        %223 = sbr.rel (%p221) target = $region36
      $region35: #{_lambda_.19} parent=31 // pred_region
        %vm224 = vcmask 261120
        %225 = vst.msk [vmem:[#allocation2] sm:$0xff] %vm224, 0.0
        %226 = vst.msk [vmem:[#allocation2 + $0x8] sm:$0xff] %vm224, 0.0
      $region36: #{_lambda_.19} parent=31 // pred_fallthru
        _
      %v227 = vld [vmem:[#allocation2] sm:$0xff]
      %v228 = vld [vmem:[#allocation2 + $0x8] sm:$0xff]
      %v229 = vld [vmem:[%s207] sm:$0xff]
      %v230 = vld [vmem:[%s207 + $0x8] sm:$0xff]
      %v231 = vld [vmem:[%s213] sm:$0xff]
      %v232 = vld [vmem:[%s213 + $0x8] sm:$0xff]
      %v233 = vld [vmem:[%s213 + $0x10] sm:$0xff]
      %v234 = vld [vmem:[%s213 + $0x18] sm:$0xff]
      %vm235 = vcmask 261120
      %v237 = vsel %vm235, %v229, 0
      %v240 = vsel %vm235, %v230, 0
      %242 = vmatprep.subr.mxu0 0.0
      %243 = vmatpush1.msra.mxu0 0.0
      %244 = vmatprep.subr.mxu0 0.0
      %245 = vmatpush1.msra.mxu0 0.0
      %246 = vmatprep.subr.mxu0 0.0
      %247 = vmatpush1.msra.mxu0 0.0
      %248 = vmatprep.subr.mxu0 0.0
      %249 = vmatpush1.msra.mxu0 0.0
      %250 = vmatprep.subr.mxu0 0.0
      %251 = vmatpush1.msra.mxu0 0.0
      %252 = vmatprep.subr.mxu0 0.0
      %253 = vmatpush1.msra.mxu0 0.0
      %254 = vmatprep.subr.mxu0 0.0
      %255 = vmatpush1.msra.mxu0 0.0
      %256 = vmatprep.subr.mxu0 0.0
      %257 = vmatpush1.msra.mxu0 0.0
      %258 = vmatprep.subr.mxu0 0.0
      %259 = vmatpush1.msra.mxu0 0.0
      %260 = vmatprep.subr.mxu0 0.0
      %261 = vmatpush1.msra.mxu0 0.0
      %262 = vmatprep.subr.mxu0 0.0
      %263 = vmatpush1.msra.mxu0 0.0
      %264 = vmatprep.subr.mxu0 0.0
      %265 = vmatpush1.msra.mxu0 0.0
      %266 = vmatprep.subr.mxu0 0.0
      %267 = vmatpush1.msra.mxu0 %v234
      %268 = vmatprep.subr.mxu0 0.0
      %269 = vmatpush1.msra.mxu0 %v233
      %270 = vmatprep.subr.mxu0 0.0
      %271 = vmatpush1.msra.mxu0 %v232
      %272 = vmatprep.subr.mxu0 0.0
      %273 = vmatpush1.msra.mxu0 %v231
      %274 = vmatprep.subr.mxu0 0.0
      %275 = vmatpush2.msra.mxu0 0.0
      %276 = vmatprep.subr.mxu0 0.0
      %277 = vmatpush2.msra.mxu0 0.0
      %278 = vmatprep.subr.mxu0 0.0
      %279 = vmatpush2.msra.mxu0 0.0
      %280 = vmatprep.subr.mxu0 0.0
      %281 = vmatpush2.msra.mxu0 0.0
      %282 = vmatprep.subr.mxu0 0.0
      %283 = vmatpush2.msra.mxu0 0.0
      %284 = vmatprep.subr.mxu0 0.0
      %285 = vmatpush2.msra.mxu0 0.0
      %286 = vmatprep.subr.mxu0 0.0
      %287 = vmatpush2.msra.mxu0 0.0
      %288 = vmatprep.subr.mxu0 0.0
      %289 = vmatpush2.msra.mxu0 0.0
      %290 = vmatprep.subr.mxu0 0.0
      %291 = vmatpush2.msra.mxu0 0.0
      %292 = vmatprep.subr.mxu0 0.0
      %293 = vmatpush2.msra.mxu0 0.0
      %294 = vmatprep.subr.mxu0 0.0
      %295 = vmatpush2.msra.mxu0 0.0
      %296 = vmatprep.subr.mxu0 0.0
      %297 = vmatpush2.msra.mxu0 0.0
      %298 = vmatprep.subr.mxu0 0.0
      %299 = vmatpush2.msra.mxu0 0.0
      %300 = vmatprep.subr.mxu0 0.0
      %301 = vmatpush2.msra.mxu0 0.0
      %302 = vmatprep.subr.mxu0 0.0
      %303 = vmatpush2.msra.mxu0 0.0
      %304 = vmatprep.subr.mxu0 0.0
      %305 = vmatpush2.msra.mxu0 0.0
      %306 = vmatprep.mubr.f32.mxu0 0.0
      %307 = vmatmul.mubr.f32.gmra.mxu0 %v237
      %v308 = vpop.f32.mrf.mxu0
      %v309 = vadd.f32 0.0, %v308
      %v310 = vpop.f32.mrf.mxu0
      %311 = vmatprep.mubr.f32.mxu0 0.0
      %312 = vmatmul.mubr.f32.gmra.mxu0 %v240
      %v313 = vpop.f32.mrf.mxu0
      %v314 = vadd.f32 0.0, %v313
      %v315 = vpop.f32.mrf.mxu0
      %316 = vdwg.mxu0
      %v317 = vadd.f32 %v227, %v309
      %v318 = vadd.f32 %v228, %v314
      %319 = vst.msk [vmem:[#allocation2] sm:$0xff] %vm235, %v317
      %320 = vst.msk [vmem:[#allocation2 + $0x8] sm:$0xff] %vm235, %v318
      %p321 = scmp.eq.s32.totalorder %s19, 3
      // Predicated region
      $region37: #{_lambda_.19} parent=31 // pred_check
        %p322 = pneg %p321
      $region38: #{_lambda_.19} parent=31 // pred_check_branch
        %324 = sbr.rel (%p322) target = $region40
      $region39: #{_lambda_.19} parent=31 // pred_region
        %v325 = vld [vmem:[#allocation2] sm:$0xff]
        %v326 = vld [vmem:[#allocation2 + $0x8] sm:$0xff]
        %v327 = vld [vmem:[%s2] sm:$0x1]
        %v329 = vlaneseq
        %v330 = vshrl.u32 %v329, 7
        %v331 = vsub.s32 0, %v330
        %v332 = vrot.slane %v327, %v331
        %v334 = vadd.f32 %v325, %v332
        %v335 = vadd.f32 %v326, %v332
        %v336 = vtanh.pop %v334
        %v337 = vtanh.pop %v335
        %338 = vst.msk [vmem:[%s218] sm:$0xff] %vm235, %v336
        %339 = vst.msk [vmem:[%s218 + $0x8] sm:$0xff] %vm235, %v337
      $region40: #{_lambda_.19} parent=31 // pred_fallthru
        _
      %s340 = smul.u32 2, %s18
      %p341 = scmp.lt.s32.totalorder %s340, 1
      %s342 = scalar_select %p341, %s340, 1
      %s343 = smul.addr %s342, 8
      %s344 = scalar_lea.vmem %s3, %s343
      // Predicated region
      $region41: #{_lambda_.19} parent=31 // pred_check
        %p345 = pneg %p119
      $region42: #{_lambda_.19} parent=31 // pred_check_branch
        %347 = sbr.rel (%p345) target = $region44
      $region43: #{_lambda_.19} parent=31 // pred_region
        %s348 = smul.u32 2, %s18
      $region44: #{_lambda_.19} parent=31 // pred_fallthru
        _
      // Predicated region
      $region45: #{_lambda_.19} parent=31 // pred_check
        %p349 = pneg %p119
      $region46: #{_lambda_.19} parent=31 // pred_check_branch
        %351 = sbr.rel (%p349) target = $region48
      $region47: #{_lambda_.19} parent=31 // pred_region
        %s352 = smul.u32 2, %s18
        %p353 = scmp.lt.s32.totalorder %s352, 1
        %s354 = scalar_select %p353, %s352, 1
        %s355 = smul.addr %s354, 8
        %s356 = scalar_lea.vmem %s3, %s355
      $region48: #{_lambda_.19} parent=31 // pred_fallthru
        _
    $region32: #{_lambda_.19} parent=5 // pred_fallthru
      _
    %p357 = scmp.le.s32.totalorder 2, %s9
    // Predicated region
    $region49: #{_lambda_.19} parent=5 // pred_check
      %p358 = pneg %p357
    $region50: #{_lambda_.19} parent=5 // pred_check_branch
      %360 = sbr.rel (%p358) target = $region52
    $region51: #{_lambda_.19} parent=5 // pred_region
      %s361 = ssub.s32 %s9, 2
    $region52: #{_lambda_.19} parent=5 // pred_fallthru
      _
  $region6: #{_lambda_.19} parent=0 // loop_footer
    %s13 = sadd.s32 1, %s9
  $region7: #{_lambda_.19} parent=0 // loop_footer_branch
    %8 = sbr.rel target = $region3
  $region8: #{_lambda_.19} parent=0 // loop_exit
    _

// kernel: _lambda_.21
$region0: #{_lambda_.21}
  #allocation0 [shape = 'u32[]', space=smem, size = 0x4, offset = 0x4, fixed_abs, tag = 'smem constant byte address 0x4 - core index']
  #allocation1 [shape = 'u32[144,128]{1,0:T(1,128)}', space=vmem, size = 0x12000, scoped, tag = 'internal scratch']
  #allocation2 [shape = 'f32[16,128]{1,0:T(8,128)}', space=vmem, size = 0x2000, scoped, tag = 'scratch operand']
  %s0 = inlined_call_operand.vmem [shape: f32[1,16,32], index: 0, kind: input, shape index: {}]
  %s1 = inlined_call_operand.vmem [shape: f32[1,32,128], index: 1, kind: input, shape index: {}]
  %s2 = inlined_call_operand.vmem [shape: f32[1,128], index: 2, kind: input, shape index: {}]
  %s3 = inlined_call_operand.vmem [shape: f32[16,128], index: 3, kind: output, shape index: {}]
  %s4 = sld [smem:[#allocation0]]
  $region30: #{_lambda_.21} parent=0
    _
  %s6 = ssub.s32 1, %s4
  %s7 = scalar_select 0, %s6, %s4
  // Predicated region
  $region2: #{_lambda_.21} parent=0 // pred_check
    _
  $region3: #{_lambda_.21} parent=0 // pred_check_branch
    %9 = sbr.rel (0) target = $region5
  $region4: #{_lambda_.21} parent=0 // pred_region
    _
  $region5: #{_lambda_.21} parent=0 // pred_fallthru
    _
  // Predicated region
  $region6: #{_lambda_.21} parent=0 // pred_check
    _
  $region7: #{_lambda_.21} parent=0 // pred_check_branch
    %11 = sbr.rel (0) target = $region9
  $region8: #{_lambda_.21} parent=0 // pred_region
    _
  $region9: #{_lambda_.21} parent=0 // pred_fallthru
    _
  // Predicated region
  $region10: #{_lambda_.21} parent=0 // pred_check
    _
  $region11: #{_lambda_.21} parent=0 // pred_check_branch
    %13 = sbr.rel (0) target = $region13
  $region12: #{_lambda_.21} parent=0 // pred_region
    _
  $region13: #{_lambda_.21} parent=0 // pred_fallthru
    _
  %p14 = scmp.eq.s32.totalorder 0, 0
  // Predicated region
  $region14: #{_lambda_.21} parent=0 // pred_check
    %p15 = pneg %p14
  $region15: #{_lambda_.21} parent=0 // pred_check_branch
    %17 = sbr.rel (%p15) target = $region17
  $region16: #{_lambda_.21} parent=0 // pred_region
    %18 = vst [vmem:[#allocation2] sm:$0xff] 0.0
    %19 = vst [vmem:[#allocation2 + $0x8] sm:$0xff] 0.0
  $region17: #{_lambda_.21} parent=0 // pred_fallthru
    _
  %v20 = vld [vmem:[#allocation2] sm:$0xff]
  %v21 = vld [vmem:[#allocation2 + $0x8] sm:$0xff]
  %v22 = vld [vmem:[%s0] sm:$0xff]
  %v23 = vld [vmem:[%s0 + $0x8] sm:$0xff]
  %v24 = vld [vmem:[%s1] sm:$0xff]
  %v25 = vld [vmem:[%s1 + $0x8] sm:$0xff]
  %v26 = vld [vmem:[%s1 + $0x10] sm:$0xff]
  %v27 = vld [vmem:[%s1 + $0x18] sm:$0xff]
  %vm28 = vcmask 261120
  %v30 = vsel %vm28, %v22, 0
  %v33 = vsel %vm28, %v23, 0
  %35 = vmatprep.subr.mxu0 0.0
  %36 = vmatpush1.msra.mxu0 0.0
  %37 = vmatprep.subr.mxu0 0.0
  %38 = vmatpush1.msra.mxu0 0.0
  %39 = vmatprep.subr.mxu0 0.0
  %40 = vmatpush1.msra.mxu0 0.0
  %41 = vmatprep.subr.mxu0 0.0
  %42 = vmatpush1.msra.mxu0 0.0
  %43 = vmatprep.subr.mxu0 0.0
  %44 = vmatpush1.msra.mxu0 0.0
  %45 = vmatprep.subr.mxu0 0.0
  %46 = vmatpush1.msra.mxu0 0.0
  %47 = vmatprep.subr.mxu0 0.0
  %48 = vmatpush1.msra.mxu0 0.0
  %49 = vmatprep.subr.mxu0 0.0
  %50 = vmatpush1.msra.mxu0 0.0
  %51 = vmatprep.subr.mxu0 0.0
  %52 = vmatpush1.msra.mxu0 0.0
  %53 = vmatprep.subr.mxu0 0.0
  %54 = vmatpush1.msra.mxu0 0.0
  %55 = vmatprep.subr.mxu0 0.0
  %56 = vmatpush1.msra.mxu0 0.0
  %57 = vmatprep.subr.mxu0 0.0
  %58 = vmatpush1.msra.mxu0 0.0
  %59 = vmatprep.subr.mxu0 0.0
  %60 = vmatpush1.msra.mxu0 %v27
  %61 = vmatprep.subr.mxu0 0.0
  %62 = vmatpush1.msra.mxu0 %v26
  %63 = vmatprep.subr.mxu0 0.0
  %64 = vmatpush1.msra.mxu0 %v25
  %65 = vmatprep.subr.mxu0 0.0
  %66 = vmatpush1.msra.mxu0 %v24
  %67 = vmatprep.subr.mxu0 0.0
  %68 = vmatpush2.msra.mxu0 0.0
  %69 = vmatprep.subr.mxu0 0.0
  %70 = vmatpush2.msra.mxu0 0.0
  %71 = vmatprep.subr.mxu0 0.0
  %72 = vmatpush2.msra.mxu0 0.0
  %73 = vmatprep.subr.mxu0 0.0
  %74 = vmatpush2.msra.mxu0 0.0
  %75 = vmatprep.subr.mxu0 0.0
  %76 = vmatpush2.msra.mxu0 0.0
  %77 = vmatprep.subr.mxu0 0.0
  %78 = vmatpush2.msra.mxu0 0.0
  %79 = vmatprep.subr.mxu0 0.0
  %80 = vmatpush2.msra.mxu0 0.0
  %81 = vmatprep.subr.mxu0 0.0
  %82 = vmatpush2.msra.mxu0 0.0
  %83 = vmatprep.subr.mxu0 0.0
  %84 = vmatpush2.msra.mxu0 0.0
  %85 = vmatprep.subr.mxu0 0.0
  %86 = vmatpush2.msra.mxu0 0.0
  %87 = vmatprep.subr.mxu0 0.0
  %88 = vmatpush2.msra.mxu0 0.0
  %89 = vmatprep.subr.mxu0 0.0
  %90 = vmatpush2.msra.mxu0 0.0
  %91 = vmatprep.subr.mxu0 0.0
  %92 = vmatpush2.msra.mxu0 0.0
  %93 = vmatprep.subr.mxu0 0.0
  %94 = vmatpush2.msra.mxu0 0.0
  %95 = vmatprep.subr.mxu0 0.0
  %96 = vmatpush2.msra.mxu0 0.0
  %97 = vmatprep.subr.mxu0 0.0
  %98 = vmatpush2.msra.mxu0 0.0
  %99 = vmatprep.mubr.f32.mxu0 0.0
  %100 = vmatmul.mubr.f32.gmra.mxu0 %v30
  %v101 = vpop.f32.mrf.mxu0
  %v102 = vadd.f32 0.0, %v101
  %v103 = vpop.f32.mrf.mxu0
  %104 = vmatprep.mubr.f32.mxu0 0.0
  %105 = vmatmul.mubr.f32.gmra.mxu0 %v33
  %v106 = vpop.f32.mrf.mxu0
  %v107 = vadd.f32 0.0, %v106
  %v108 = vpop.f32.mrf.mxu0
  %109 = vdwg.mxu0
  %v110 = vadd.f32 %v20, %v102
  %v111 = vadd.f32 %v21, %v107
  %112 = vst [vmem:[#allocation2] sm:$0xff] %v110
  %113 = vst [vmem:[#allocation2 + $0x8] sm:$0xff] %v111
  // Predicated region
  $region18: #{_lambda_.21} parent=0 // pred_check
    %p114 = pneg %p14
  $region19: #{_lambda_.21} parent=0 // pred_check_branch
    %116 = sbr.rel (%p114) target = $region21
  $region20: #{_lambda_.21} parent=0 // pred_region
    %v117 = vld [vmem:[#allocation2] sm:$0xff]
    %v118 = vld [vmem:[#allocation2 + $0x8] sm:$0xff]
    %v119 = vld [vmem:[%s2] sm:$0x1]
    %v121 = vlaneseq
    %v122 = vshrl.u32 %v121, 7
    %v123 = vsub.s32 0, %v122
    %v124 = vrot.slane %v119, %v123
    %v126 = vadd.f32 %v117, %v124
    %v127 = vadd.f32 %v118, %v124
    %v128 = vtanh.pop %v126
    %v129 = vtanh.pop %v127
    %130 = vst [vmem:[%s3] sm:$0xff] %v128
    %131 = vst [vmem:[%s3 + $0x8] sm:$0xff] %v129
  $region21: #{_lambda_.21} parent=0 // pred_fallthru
    _
  // Predicated region
  $region22: #{_lambda_.21} parent=0 // pred_check
    _
  $region23: #{_lambda_.21} parent=0 // pred_check_branch
    %133 = sbr.rel (0) target = $region25
  $region24: #{_lambda_.21} parent=0 // pred_region
    _
  $region25: #{_lambda_.21} parent=0 // pred_fallthru
    _
  // Predicated region
  $region26: #{_lambda_.21} parent=0 // pred_check
    _
  $region27: #{_lambda_.21} parent=0 // pred_check_branch
    %135 = sbr.rel (0) target = $region29
  $region28: #{_lambda_.21} parent=0 // pred_region
    _
  $region29: #{_lambda_.21} parent=0 // pred_fallthru
    _

// kernel: _lambda_.22
$region0: #{_lambda_.22}
  #allocation0 [shape = 'u32[]', space=smem, size = 0x4, offset = 0x4, fixed_abs, tag = 'smem constant byte address 0x4 - core index']
  #allocation1 [shape = 'u32[144,128]{1,0:T(1,128)}', space=vmem, size = 0x12000, scoped, tag = 'internal scratch']
  %s0 = inlined_call_operand.vmem [shape: f32[32,32], index: 0, kind: input, shape index: {}]
  %s1 = inlined_call_operand.vmem [shape: f32[32,32], index: 1, kind: input, shape index: {}]
  %s2 = inlined_call_operand.vmem [shape: f32[1,32], index: 2, kind: input, shape index: {}]
  %s3 = inlined_call_operand.vmem [shape: f32[1,32], index: 3, kind: input, shape index: {}]
  %s4 = inlined_call_operand.vmem [shape: f32[32,32], index: 4, kind: output, shape index: {}]
  %s5 = sld [smem:[#allocation0]]
  $region26: #{_lambda_.22} parent=0
    _
  %s7 = ssub.s32 1, %s5
  %s8 = scalar_select 0, %s7, %s5
  // Predicated region
  $region2: #{_lambda_.22} parent=0 // pred_check
    _
  $region3: #{_lambda_.22} parent=0 // pred_check_branch
    %10 = sbr.rel (0) target = $region5
  $region4: #{_lambda_.22} parent=0 // pred_region
    _
  $region5: #{_lambda_.22} parent=0 // pred_fallthru
    _
  // Predicated region
  $region6: #{_lambda_.22} parent=0 // pred_check
    _
  $region7: #{_lambda_.22} parent=0 // pred_check_branch
    %12 = sbr.rel (0) target = $region9
  $region8: #{_lambda_.22} parent=0 // pred_region
    _
  $region9: #{_lambda_.22} parent=0 // pred_fallthru
    _
  // Predicated region
  $region10: #{_lambda_.22} parent=0 // pred_check
    _
  $region11: #{_lambda_.22} parent=0 // pred_check_branch
    %14 = sbr.rel (0) target = $region13
  $region12: #{_lambda_.22} parent=0 // pred_region
    _
  $region13: #{_lambda_.22} parent=0 // pred_fallthru
    _
  // Predicated region
  $region14: #{_lambda_.22} parent=0 // pred_check
    _
  $region15: #{_lambda_.22} parent=0 // pred_check_branch
    %16 = sbr.rel (0) target = $region17
  $region16: #{_lambda_.22} parent=0 // pred_region
    _
  $region17: #{_lambda_.22} parent=0 // pred_fallthru
    _
  %v17 = vld [vmem:[%s0] sm:$0xff]
  %v18 = vld [vmem:[%s0 + $0x8] sm:$0xff]
  %v19 = vld [vmem:[%s0 + $0x10] sm:$0xff]
  %v20 = vld [vmem:[%s0 + $0x18] sm:$0xff]
  %v21 = vld [vmem:[%s1] sm:$0xff]
  %v22 = vld [vmem:[%s1 + $0x8] sm:$0xff]
  %v23 = vld [vmem:[%s1 + $0x10] sm:$0xff]
  %v24 = vld [vmem:[%s1 + $0x18] sm:$0xff]
  %v25 = vadd.f32 %v17, %v21
  %v26 = vadd.f32 %v18, %v22
  %v27 = vadd.f32 %v19, %v23
  %v28 = vadd.f32 %v20, %v24
  %v29 = vld [vmem:[%s2] sm:$0x1]
  %v30 = vld [vmem:[%s3] sm:$0x1]
  %vm31 = vcmask 261120
  %v32 = vsel %vm31, %v25, 0.0
  %33 = vadd.xlane.f32.xlu0 %v32
  %v34 = vpop.xlane.xlu0 %33
  %v35 = vsel %vm31, %v26, 0.0
  %36 = vadd.xlane.f32.xlu0 %v35
  %v37 = vpop.xlane.xlu0 %36
  %v38 = vsel %vm31, %v27, 0.0
  %39 = vadd.xlane.f32.xlu0 %v38
  %v40 = vpop.xlane.xlu0 %39
  %v41 = vsel %vm31, %v28, 0.0
  %42 = vadd.xlane.f32.xlu0 %v41
  %v43 = vpop.xlane.xlu0 %42
  %v44 = vrcp.pop 32.0
  %v45 = vmul.f32 %v34, %v44
  %v46 = vmul.f32 %v37, %v44
  %v47 = vmul.f32 %v40, %v44
  %v48 = vmul.f32 %v43, %v44
  %v49 = vsub.f32 %v25, %v45
  %v50 = vsub.f32 %v26, %v46
  %v51 = vsub.f32 %v27, %v47
  %v52 = vsub.f32 %v28, %v48
  %v53 = vmul.f32 %v49, %v49
  %v54 = vmul.f32 %v50, %v50
  %v55 = vmul.f32 %v51, %v51
  %v56 = vmul.f32 %v52, %v52
  %v57 = vsel %vm31, %v53, 0.0
  %58 = vadd.xlane.f32.xlu0 %v57
  %v59 = vpop.xlane.xlu0 %58
  %v60 = vsel %vm31, %v54, 0.0
  %61 = vadd.xlane.f32.xlu0 %v60
  %v62 = vpop.xlane.xlu0 %61
  %v63 = vsel %vm31, %v55, 0.0
  %64 = vadd.xlane.f32.xlu0 %v63
  %v65 = vpop.xlane.xlu0 %64
  %v66 = vsel %vm31, %v56, 0.0
  %67 = vadd.xlane.f32.xlu0 %v66
  %v68 = vpop.xlane.xlu0 %67
  %v69 = vmul.f32 %v59, %v44
  %v70 = vmul.f32 %v62, %v44
  %v71 = vmul.f32 %v65, %v44
  %v72 = vmul.f32 %v68, %v44
  %v73 = vadd.f32 %v69, 1e-05
  %v74 = vadd.f32 %v70, 1e-05
  %v75 = vadd.f32 %v71, 1e-05
  %v76 = vadd.f32 %v72, 1e-05
  %v77 = vrsqrt.pop %v73
  %v78 = vrsqrt.pop %v74
  %v79 = vrsqrt.pop %v75
  %v80 = vrsqrt.pop %v76
  %v81 = vmul.f32 %v49, %v77
  %v82 = vmul.f32 %v50, %v78
  %v83 = vmul.f32 %v51, %v79
  %v84 = vmul.f32 %v52, %v80
  %v86 = vlaneseq
  %v87 = vshrl.u32 %v86, 7
  %v88 = vsub.s32 0, %v87
  %v89 = vrot.slane %v29, %v88
  %v91 = vmul.f32 %v81, %v89
  %v92 = vmul.f32 %v82, %v89
  %v93 = vmul.f32 %v83, %v89
  %v94 = vmul.f32 %v84, %v89
  %v96 = vlaneseq
  %v97 = vshrl.u32 %v96, 7
  %v98 = vsub.s32 0, %v97
  %v99 = vrot.slane %v30, %v98
  %v101 = vadd.f32 %v91, %v99
  %v102 = vadd.f32 %v92, %v99
  %v103 = vadd.f32 %v93, %v99
  %v104 = vadd.f32 %v94, %v99
  %105 = vst.msk [vmem:[%s4] sm:$0xff] %vm31, %v101
  %106 = vst.msk [vmem:[%s4 + $0x8] sm:$0xff] %vm31, %v102
  %107 = vst.msk [vmem:[%s4 + $0x10] sm:$0xff] %vm31, %v103
  %108 = vst.msk [vmem:[%s4 + $0x18] sm:$0xff] %vm31, %v104
  // Predicated region
  $region18: #{_lambda_.22} parent=0 // pred_check
    _
  $region19: #{_lambda_.22} parent=0 // pred_check_branch
    %110 = sbr.rel (0) target = $region21
  $region20: #{_lambda_.22} parent=0 // pred_region
    _
  $region21: #{_lambda_.22} parent=0 // pred_fallthru
    _
  // Predicated region
  $region22: #{_lambda_.22} parent=0 // pred_check
    _
  $region23: #{_lambda_.22} parent=0 // pred_check_branch
    %112 = sbr.rel (0) target = $region25
  $region24: #{_lambda_.22} parent=0 // pred_region
    _
  $region25: #{_lambda_.22} parent=0 // pred_fallthru
    _

// kernel: _lambda_.20
$region0: #{_lambda_.20}
  #allocation0 [shape = 'u32[]', space=smem, size = 0x4, offset = 0x4, fixed_abs, tag = 'smem constant byte address 0x4 - core index']
  #allocation1 [shape = 'u32[144,128]{1,0:T(1,128)}', space=vmem, size = 0x12000, scoped, tag = 'internal scratch']
  #allocation2 [shape = 'f32[5,32]{1,0:T(8,128)}', space=vmem, size = 0x1000, scoped, tag = 'scratch operand']
  %s0 = inlined_call_operand.vmem [shape: f32[2,5,32], index: 0, kind: input, shape index: {}]
  %s1 = inlined_call_operand.vmem [shape: f32[5,32,32], index: 1, kind: input, shape index: {}]
  %s2 = inlined_call_operand.vmem [shape: f32[1,32], index: 2, kind: input, shape index: {}]
  %s3 = inlined_call_operand.vmem [shape: f32[1,32], index: 3, kind: input, shape index: {}]
  %s4 = inlined_call_operand.vmem [shape: f32[1,32], index: 4, kind: input, shape index: {}]
  %s5 = inlined_call_operand.vmem [shape: f32[2,5,32], index: 5, kind: output, shape index: {}]
  %s6 = sld [smem:[#allocation0]]
  $region53: #{_lambda_.20} parent=0
    _
  %s8 = ssub.s32 1, %s6
  %s9 = scalar_select 0, %s8, %s6
  loop: start=0, step=1, limit=4
  $region2: #{_lambda_.20} parent=0 // loop_pre_header
    _
  $region3: #{_lambda_.20} parent=0 // loop_header
    %s11 = sphi 0, %s15
    %p12 = scmp.ge.s32.totalorder %s11, 4
    %s21 = sphi 0, %s23
    %s24 = sphi 0, %s21
    %s25 = sphi 0, %s24
    %s41 = sphi 0, %s25
    %s45 = sphi 0, %s45
    %s47 = sphi 0, %s45
    %s48 = sphi 0, %s47
    %s62 = sphi 0, %s48
    %s66 = sphi 0, %s66
    %s68 = sphi 0, %s66
    %s69 = sphi 0, %s68
    %s83 = sphi 0, %s69
    %s87 = sphi 0, %s87
    %s89 = sphi 0, %s87
    %s90 = sphi 0, %s89
    %s104 = sphi 0, %s90
    %s108 = sphi 0, %s108
    %s110 = sphi 0, %s108
    %s111 = sphi 0, %s110
    %s125 = sphi 0, %s111
    %s131 = sphi 0, %s133
    %s134 = sphi 0, %s131
    %s135 = sphi 0, %s134
    %s151 = sphi 0, %s135
  $region4: #{_lambda_.20} parent=0 // loop_header_branch
    %14 = sbr.rel (%p12) target = $region8
  $region5: #{_lambda_.20} parent=0 // loop_body
    %s16 = ssub.s32 %s11, 1
    %s17 = ssub.s32 %s11, 2
    %s18 = sadd.s32 %s11, 1
    %s19 = ssub.s32 %s11, %s18
    %p20 = scmp.eq.s32.totalorder %s19, 0
    %s22 = sadd.s32 %s21, 1
    %s23 = scalar_select %p20, %s21, %s22
    %p26 = pneg %p20
    %p27 = scmp.eq.s32.totalorder %s11, 1
    %p28 = por %p26, %p27
    %p29 = scmp.ne.s32.totalorder %s21, %s24
    %p30 = scmp.eq.s32.totalorder %s11, 0
    %p31 = por %p29, %p30
    %p32 = scmp.ne.s32.totalorder %s21, %s24
    %p33 = scmp.eq.s32.totalorder %s16, 1
    %p34 = por %p32, %p33
    %p35 = scmp.ne.s32.totalorder %s24, %s25
    %p36 = scmp.eq.s32.totalorder %s16, 0
    %p37 = por %p35, %p36
    %p38 = scmp.ne.s32.totalorder %s24, %s25
    %p39 = scmp.eq.s32.totalorder %s17, 1
    %p40 = por %p38, %p39
    %p42 = scmp.ne.s32.totalorder %s25, %s41
    %p43 = scmp.eq.s32.totalorder %s17, 0
    %p44 = por %p42, %p43
    %s46 = sadd.s32 %s45, 1
    %p49 = scmp.eq.s32.totalorder %s11, 1
    %p50 = scmp.ne.s32.totalorder %s45, %s47
    %p51 = scmp.eq.s32.totalorder %s11, 0
    %p52 = por %p50, %p51
    %p53 = scmp.ne.s32.totalorder %s45, %s47
    %p54 = scmp.eq.s32.totalorder %s16, 1
    %p55 = por %p53, %p54
    %p56 = scmp.ne.s32.totalorder %s47, %s48
    %p57 = scmp.eq.s32.totalorder %s16, 0
    %p58 = por %p56, %p57
    %p59 = scmp.ne.s32.totalorder %s47, %s48
    %p60 = scmp.eq.s32.totalorder %s17, 1
    %p61 = por %p59, %p60
    %p63 = scmp.ne.s32.totalorder %s48, %s62
    %p64 = scmp.eq.s32.totalorder %s17, 0
    %p65 = por %p63, %p64
    %s67 = sadd.s32 %s66, 1
    %p70 = scmp.eq.s32.totalorder %s11, 1
    %p71 = scmp.ne.s32.totalorder %s66, %s68
    %p72 = scmp.eq.s32.totalorder %s11, 0
    %p73 = por %p71, %p72
    %p74 = scmp.ne.s32.totalorder %s66, %s68
    %p75 = scmp.eq.s32.totalorder %s16, 1
    %p76 = por %p74, %p75
    %p77 = scmp.ne.s32.totalorder %s68, %s69
    %p78 = scmp.eq.s32.totalorder %s16, 0
    %p79 = por %p77, %p78
    %p80 = scmp.ne.s32.totalorder %s68, %s69
    %p81 = scmp.eq.s32.totalorder %s17, 1
    %p82 = por %p80, %p81
    %p84 = scmp.ne.s32.totalorder %s69, %s83
    %p85 = scmp.eq.s32.totalorder %s17, 0
    %p86 = por %p84, %p85
    %s88 = sadd.s32 %s87, 1
    %p91 = scmp.eq.s32.totalorder %s11, 1
    %p92 = scmp.ne.s32.totalorder %s87, %s89
    %p93 = scmp.eq.s32.totalorder %s11, 0
    %p94 = por %p92, %p93
    %p95 = scmp.ne.s32.totalorder %s87, %s89
    %p96 = scmp.eq.s32.totalorder %s16, 1
    %p97 = por %p95, %p96
    %p98 = scmp.ne.s32.totalorder %s89, %s90
    %p99 = scmp.eq.s32.totalorder %s16, 0
    %p100 = por %p98, %p99
    %p101 = scmp.ne.s32.totalorder %s89, %s90
    %p102 = scmp.eq.s32.totalorder %s17, 1
    %p103 = por %p101, %p102
    %p105 = scmp.ne.s32.totalorder %s90, %s104
    %p106 = scmp.eq.s32.totalorder %s17, 0
    %p107 = por %p105, %p106
    %s109 = sadd.s32 %s108, 1
    %p112 = scmp.eq.s32.totalorder %s11, 1
    %p113 = scmp.ne.s32.totalorder %s108, %s110
    %p114 = scmp.eq.s32.totalorder %s11, 0
    %p115 = por %p113, %p114
    %p116 = scmp.ne.s32.totalorder %s108, %s110
    %p117 = scmp.eq.s32.totalorder %s16, 1
    %p118 = por %p116, %p117
    %p119 = scmp.ne.s32.totalorder %s110, %s111
    %p120 = scmp.eq.s32.totalorder %s16, 0
    %p121 = por %p119, %p120
    %p122 = scmp.ne.s32.totalorder %s110, %s111
    %p123 = scmp.eq.s32.totalorder %s17, 1
    %p124 = por %p122, %p123
    %p126 = scmp.ne.s32.totalorder %s111, %s125
    %p127 = scmp.eq.s32.totalorder %s17, 0
    %p128 = por %p126, %p127
    %s129 = ssub.s32 %s11, %s18
    %p130 = scmp.eq.s32.totalorder %s129, 0
    %s132 = sadd.s32 %s131, 1
    %s133 = scalar_select %p130, %s131, %s132
    %p136 = pneg %p130
    %p137 = scmp.eq.s32.totalorder %s11, 1
    %p138 = por %p136, %p137
    %p139 = scmp.ne.s32.totalorder %s131, %s134
    %p140 = scmp.eq.s32.totalorder %s11, 0
    %p141 = por %p139, %p140
    %p142 = scmp.ne.s32.totalorder %s131, %s134
    %p143 = scmp.eq.s32.totalorder %s16, 1
    %p144 = por %p142, %p143
    %p145 = scmp.ne.s32.totalorder %s134, %s135
    %p146 = scmp.eq.s32.totalorder %s16, 0
    %p147 = por %p145, %p146
    %p148 = scmp.ne.s32.totalorder %s134, %s135
    %p149 = scmp.eq.s32.totalorder %s17, 1
    %p150 = por %p148, %p149
    %p152 = scmp.ne.s32.totalorder %s135, %s151
    %p153 = scmp.eq.s32.totalorder %s17, 0
    %p154 = por %p152, %p153
    %p155 = scmp.le.s32.totalorder 1, %s11
    %p156 = scmp.lt.s32.totalorder %s11, 3
    %p157 = pnand %p155, %p156
    %p158 = pneg %p157
    // Predicated region
    $region9: #{_lambda_.20} parent=5 // pred_check
      _
    $region10: #{_lambda_.20} parent=5 // pred_check_branch
      %160 = sbr.rel (%p157) target = $region12
    $region11: #{_lambda_.20} parent=5 // pred_region
      %s161 = ssub.s32 %s11, 1
      // Predicated region
      $region13: #{_lambda_.20} parent=11 // pred_check
        %p162 = pneg %p58
      $region14: #{_lambda_.20} parent=11 // pred_check_branch
        %164 = sbr.rel (%p162) target = $region16
      $region15: #{_lambda_.20} parent=11 // pred_region
        _
      $region16: #{_lambda_.20} parent=11 // pred_fallthru
        _
      // Predicated region
      $region17: #{_lambda_.20} parent=11 // pred_check
        %p165 = pneg %p79
      $region18: #{_lambda_.20} parent=11 // pred_check_branch
        %167 = sbr.rel (%p165) target = $region20
      $region19: #{_lambda_.20} parent=11 // pred_region
        _
      $region20: #{_lambda_.20} parent=11 // pred_fallthru
        _
      // Predicated region
      $region21: #{_lambda_.20} parent=11 // pred_check
        %p168 = pneg %p100
      $region22: #{_lambda_.20} parent=11 // pred_check_branch
        %170 = sbr.rel (%p168) target = $region24
      $region23: #{_lambda_.20} parent=11 // pred_region
        _
      $region24: #{_lambda_.20} parent=11 // pred_fallthru
        _
      // Predicated region
      $region25: #{_lambda_.20} parent=11 // pred_check
        %p171 = pneg %p121
      $region26: #{_lambda_.20} parent=11 // pred_check_branch
        %173 = sbr.rel (%p171) target = $region28
      $region27: #{_lambda_.20} parent=11 // pred_region
        _
      $region28: #{_lambda_.20} parent=11 // pred_fallthru
        _
    $region12: #{_lambda_.20} parent=5 // pred_fallthru
      _
    %p174 = scmp.lt.s32.totalorder %s11, 2
    // Predicated region
    $region29: #{_lambda_.20} parent=5 // pred_check
      %p175 = pneg %p174
    $region30: #{_lambda_.20} parent=5 // pred_check_branch
      %177 = sbr.rel (%p175) target = $region32
    $region31: #{_lambda_.20} parent=5 // pred_region
      // Predicated region
      $region33: #{_lambda_.20} parent=31 // pred_check
        %p178 = pneg %p31
      $region34: #{_lambda_.20} parent=31 // pred_check_branch
        %180 = sbr.rel (%p178) target = $region36
      $region35: #{_lambda_.20} parent=31 // pred_region
        %p181 = scmp.lt.s32.totalorder %s11, 1
        %s182 = scalar_select %p181, %s11, 1
        %s183 = smul.addr %s182, 8
        %s184 = scalar_lea.vmem %s0, %s183
      $region36: #{_lambda_.20} parent=31 // pred_fallthru
        _
    $region32: #{_lambda_.20} parent=5 // pred_fallthru
      _
    %p185 = scmp.le.s32.totalorder 1, %s11
    %p186 = scmp.lt.s32.totalorder %s11, 3
    %p187 = pnand %p185, %p186
    %p188 = pneg %p187
    // Predicated region
    $region37: #{_lambda_.20} parent=5 // pred_check
      _
    $region38: #{_lambda_.20} parent=5 // pred_check_branch
      %190 = sbr.rel (%p187) target = $region40
    $region39: #{_lambda_.20} parent=5 // pred_region
      %s191 = ssub.s32 %s11, 1
      %p192 = scmp.lt.s32.totalorder %s16, 1
      %s193 = scalar_select %p192, %s16, 1
      %s194 = smul.addr %s193, 8
      %s195 = scalar_lea.vmem %s0, %s194
      %p196 = pneg %p37
      %p197 = pneg %p34
      %p198 = pneg %p58
      %p199 = pneg %p55
      %p200 = pneg %p79
      %p201 = pneg %p76
      %p202 = pneg %p100
      %p203 = pneg %p97
      %p204 = pneg %p121
      %p205 = pneg %p118
      %p206 = pneg %p147
      %p207 = pneg %p144
      %p208 = scmp.lt.s32.totalorder %s16, 1
      %s209 = scalar_select %p208, %s16, 1
      %s210 = smul.addr %s209, 8
      %s211 = scalar_lea.vmem %s5, %s210
      %p212 = scmp.lt.s32.totalorder %s16, 1
      %s213 = scalar_select %p212, %s16, 1
      %s214 = smul.addr %s213, 8
      %s215 = scalar_lea.vmem %s0, %s214
      %p216 = scmp.lt.s32.totalorder %s16, 1
      %s217 = scalar_select %p216, %s16, 1
      %s218 = smul.addr %s217, 8
      %s219 = scalar_lea.vmem %s5, %s218
      %v220 = vld [vmem:[%s215] sm:$0x1f]
      %vm221 = vcmask 258048
      %222 = vst.msk [vmem:[#allocation2] sm:$0x1f] %vm221, 0.0
      %v223 = vld [vmem:[%s1] sm:$0xff]
      %v224 = vld [vmem:[%s1 + $0x8] sm:$0xff]
      %v225 = vld [vmem:[%s1 + $0x10] sm:$0xff]
      %v226 = vld [vmem:[%s1 + $0x18] sm:$0xff]
      %vm227 = vcmask 261120
      %v229 = vsel %vm227, %v220, 0
      %231 = vmatprep.subr.mxu0 0.0
      %232 = vmatpush1.msra.mxu0 0.0
      %233 = vmatprep.subr.mxu0 0.0
      %234 = vmatpush1.msra.mxu0 0.0
      %235 = vmatprep.subr.mxu0 0.0
      %236 = vmatpush1.msra.mxu0 0.0
      %237 = vmatprep.subr.mxu0 0.0
      %238 = vmatpush1.msra.mxu0 0.0
      %239 = vmatprep.subr.mxu0 0.0
      %240 = vmatpush1.msra.mxu0 0.0
      %241 = vmatprep.subr.mxu0 0.0
      %242 = vmatpush1.msra.mxu0 0.0
      %243 = vmatprep.subr.mxu0 0.0
      %244 = vmatpush1.msra.mxu0 0.0
      %245 = vmatprep.subr.mxu0 0.0
      %246 = vmatpush1.msra.mxu0 0.0
      %247 = vmatprep.subr.mxu0 0.0
      %248 = vmatpush1.msra.mxu0 0.0
      %249 = vmatprep.subr.mxu0 0.0
      %250 = vmatpush1.msra.mxu0 0.0
      %251 = vmatprep.subr.mxu0 0.0
      %252 = vmatpush1.msra.mxu0 0.0
      %253 = vmatprep.subr.mxu0 0.0
      %254 = vmatpush1.msra.mxu0 0.0
      %255 = vmatprep.subr.mxu0 0.0
      %256 = vmatpush1.msra.mxu0 %v226
      %257 = vmatprep.subr.mxu0 0.0
      %258 = vmatpush1.msra.mxu0 %v225
      %259 = vmatprep.subr.mxu0 0.0
      %260 = vmatpush1.msra.mxu0 %v224
      %261 = vmatprep.subr.mxu0 0.0
      %262 = vmatpush1.msra.mxu0 %v223
      %263 = vmatprep.subr.mxu0 0.0
      %264 = vmatpush2.msra.mxu0 0.0
      %265 = vmatprep.subr.mxu0 0.0
      %266 = vmatpush2.msra.mxu0 0.0
      %267 = vmatprep.subr.mxu0 0.0
      %268 = vmatpush2.msra.mxu0 0.0
      %269 = vmatprep.subr.mxu0 0.0
      %270 = vmatpush2.msra.mxu0 0.0
      %271 = vmatprep.subr.mxu0 0.0
      %272 = vmatpush2.msra.mxu0 0.0
      %273 = vmatprep.subr.mxu0 0.0
      %274 = vmatpush2.msra.mxu0 0.0
      %275 = vmatprep.subr.mxu0 0.0
      %276 = vmatpush2.msra.mxu0 0.0
      %277 = vmatprep.subr.mxu0 0.0
      %278 = vmatpush2.msra.mxu0 0.0
      %279 = vmatprep.subr.mxu0 0.0
      %280 = vmatpush2.msra.mxu0 0.0
      %281 = vmatprep.subr.mxu0 0.0
      %282 = vmatpush2.msra.mxu0 0.0
      %283 = vmatprep.subr.mxu0 0.0
      %284 = vmatpush2.msra.mxu0 0.0
      %285 = vmatprep.subr.mxu0 0.0
      %286 = vmatpush2.msra.mxu0 0.0
      %287 = vmatprep.subr.mxu0 0.0
      %288 = vmatpush2.msra.mxu0 0.0
      %289 = vmatprep.subr.mxu0 0.0
      %290 = vmatpush2.msra.mxu0 0.0
      %291 = vmatprep.subr.mxu0 0.0
      %292 = vmatpush2.msra.mxu0 0.0
      %293 = vmatprep.subr.mxu0 0.0
      %294 = vmatpush2.msra.mxu0 0.0
      %295 = vmatprep.mubr.f32.mxu0 0.0
      %296 = vmatmul.mubr.f32.gmra.mxu0 %v229
      %v297 = vpop.f32.mrf.mxu0
      %v298 = vadd.f32 0.0, %v297
      %v299 = vpop.f32.mrf.mxu0
      %300 = vdwg.mxu0
      %v301 = vld [vmem:[#allocation2 + $0x4] sm:$0x1]
      %v302 = vadd.f32 %v301, %v298
      %vm303 = vcmask 253952
      %304 = vst.msk [vmem:[#allocation2 + $0x4] sm:$0x1] %vm303, %v302
      %s305 = scalar_lea.vmem %s1, 32
      %v306 = vld [vmem:[%s305] sm:$0xff]
      %v307 = vld [vmem:[%s305 + $0x8] sm:$0xff]
      %v308 = vld [vmem:[%s305 + $0x10] sm:$0xff]
      %v309 = vld [vmem:[%s305 + $0x18] sm:$0xff]
      %310 = vmatprep.subr.mxu0 0.0
      %311 = vmatpush1.msra.mxu0 0.0
      %312 = vmatprep.subr.mxu0 0.0
      %313 = vmatpush1.msra.mxu0 0.0
      %314 = vmatprep.subr.mxu0 0.0
      %315 = vmatpush1.msra.mxu0 0.0
      %316 = vmatprep.subr.mxu0 0.0
      %317 = vmatpush1.msra.mxu0 0.0
      %318 = vmatprep.subr.mxu0 0.0
      %319 = vmatpush1.msra.mxu0 0.0
      %320 = vmatprep.subr.mxu0 0.0
      %321 = vmatpush1.msra.mxu0 0.0
      %322 = vmatprep.subr.mxu0 0.0
      %323 = vmatpush1.msra.mxu0 0.0
      %324 = vmatprep.subr.mxu0 0.0
      %325 = vmatpush1.msra.mxu0 0.0
      %326 = vmatprep.subr.mxu0 0.0
      %327 = vmatpush1.msra.mxu0 0.0
      %328 = vmatprep.subr.mxu0 0.0
      %329 = vmatpush1.msra.mxu0 0.0
      %330 = vmatprep.subr.mxu0 0.0
      %331 = vmatpush1.msra.mxu0 0.0
      %332 = vmatprep.subr.mxu0 0.0
      %333 = vmatpush1.msra.mxu0 0.0
      %334 = vmatprep.subr.mxu0 0.0
      %335 = vmatpush1.msra.mxu0 %v309
      %336 = vmatprep.subr.mxu0 0.0
      %337 = vmatpush1.msra.mxu0 %v308
      %338 = vmatprep.subr.mxu0 0.0
      %339 = vmatpush1.msra.mxu0 %v307
      %340 = vmatprep.subr.mxu0 0.0
      %341 = vmatpush1.msra.mxu0 %v306
      %342 = vmatprep.subr.mxu0 0.0
      %343 = vmatpush2.msra.mxu0 0.0
      %344 = vmatprep.subr.mxu0 0.0
      %345 = vmatpush2.msra.mxu0 0.0
      %346 = vmatprep.subr.mxu0 0.0
      %347 = vmatpush2.msra.mxu0 0.0
      %348 = vmatprep.subr.mxu0 0.0
      %349 = vmatpush2.msra.mxu0 0.0
      %350 = vmatprep.subr.mxu0 0.0
      %351 = vmatpush2.msra.mxu0 0.0
      %352 = vmatprep.subr.mxu0 0.0
      %353 = vmatpush2.msra.mxu0 0.0
      %354 = vmatprep.subr.mxu0 0.0
      %355 = vmatpush2.msra.mxu0 0.0
      %356 = vmatprep.subr.mxu0 0.0
      %357 = vmatpush2.msra.mxu0 0.0
      %358 = vmatprep.subr.mxu0 0.0
      %359 = vmatpush2.msra.mxu0 0.0
      %360 = vmatprep.subr.mxu0 0.0
      %361 = vmatpush2.msra.mxu0 0.0
      %362 = vmatprep.subr.mxu0 0.0
      %363 = vmatpush2.msra.mxu0 0.0
      %364 = vmatprep.subr.mxu0 0.0
      %365 = vmatpush2.msra.mxu0 0.0
      %366 = vmatprep.subr.mxu0 0.0
      %367 = vmatpush2.msra.mxu0 0.0
      %368 = vmatprep.subr.mxu0 0.0
      %369 = vmatpush2.msra.mxu0 0.0
      %370 = vmatprep.subr.mxu0 0.0
      %371 = vmatpush2.msra.mxu0 0.0
      %372 = vmatprep.subr.mxu0 0.0
      %373 = vmatpush2.msra.mxu0 0.0
      %374 = vmatprep.mubr.f32.mxu0 0.0
      %375 = vmatmul.mubr.f32.gmra.mxu0 %v229
      %v376 = vpop.f32.mrf.mxu0
      %v377 = vadd.f32 0.0, %v376
      %v378 = vpop.f32.mrf.mxu0
      %379 = vdwg.mxu0
      %v380 = vld [vmem:[#allocation2 + $0x3] sm:$0x3]
      %v381 = vadd.f32 %v380, %v377
      %vm382 = vcmask 254976
      %383 = vst.msk [vmem:[#allocation2 + $0x3] sm:$0x3] %vm382, %v381
      %s384 = scalar_lea.vmem %s1, 64
      %v385 = vld [vmem:[%s384] sm:$0xff]
      %v386 = vld [vmem:[%s384 + $0x8] sm:$0xff]
      %v387 = vld [vmem:[%s384 + $0x10] sm:$0xff]
      %v388 = vld [vmem:[%s384 + $0x18] sm:$0xff]
      %389 = vmatprep.subr.mxu0 0.0
      %390 = vmatpush1.msra.mxu0 0.0
      %391 = vmatprep.subr.mxu0 0.0
      %392 = vmatpush1.msra.mxu0 0.0
      %393 = vmatprep.subr.mxu0 0.0
      %394 = vmatpush1.msra.mxu0 0.0
      %395 = vmatprep.subr.mxu0 0.0
      %396 = vmatpush1.msra.mxu0 0.0
      %397 = vmatprep.subr.mxu0 0.0
      %398 = vmatpush1.msra.mxu0 0.0
      %399 = vmatprep.subr.mxu0 0.0
      %400 = vmatpush1.msra.mxu0 0.0
      %401 = vmatprep.subr.mxu0 0.0
      %402 = vmatpush1.msra.mxu0 0.0
      %403 = vmatprep.subr.mxu0 0.0
      %404 = vmatpush1.msra.mxu0 0.0
      %405 = vmatprep.subr.mxu0 0.0
      %406 = vmatpush1.msra.mxu0 0.0
      %407 = vmatprep.subr.mxu0 0.0
      %408 = vmatpush1.msra.mxu0 0.0
      %409 = vmatprep.subr.mxu0 0.0
      %410 = vmatpush1.msra.mxu0 0.0
      %411 = vmatprep.subr.mxu0 0.0
      %412 = vmatpush1.msra.mxu0 0.0
      %413 = vmatprep.subr.mxu0 0.0
      %414 = vmatpush1.msra.mxu0 %v388
      %415 = vmatprep.subr.mxu0 0.0
      %416 = vmatpush1.msra.mxu0 %v387
      %417 = vmatprep.subr.mxu0 0.0
      %418 = vmatpush1.msra.mxu0 %v386
      %419 = vmatprep.subr.mxu0 0.0
      %420 = vmatpush1.msra.mxu0 %v385
      %421 = vmatprep.subr.mxu0 0.0
      %422 = vmatpush2.msra.mxu0 0.0
      %423 = vmatprep.subr.mxu0 0.0
      %424 = vmatpush2.msra.mxu0 0.0
      %425 = vmatprep.subr.mxu0 0.0
      %426 = vmatpush2.msra.mxu0 0.0
      %427 = vmatprep.subr.mxu0 0.0
      %428 = vmatpush2.msra.mxu0 0.0
      %429 = vmatprep.subr.mxu0 0.0
      %430 = vmatpush2.msra.mxu0 0.0
      %431 = vmatprep.subr.mxu0 0.0
      %432 = vmatpush2.msra.mxu0 0.0
      %433 = vmatprep.subr.mxu0 0.0
      %434 = vmatpush2.msra.mxu0 0.0
      %435 = vmatprep.subr.mxu0 0.0
      %436 = vmatpush2.msra.mxu0 0.0
      %437 = vmatprep.subr.mxu0 0.0
      %438 = vmatpush2.msra.mxu0 0.0
      %439 = vmatprep.subr.mxu0 0.0
      %440 = vmatpush2.msra.mxu0 0.0
      %441 = vmatprep.subr.mxu0 0.0
      %442 = vmatpush2.msra.mxu0 0.0
      %443 = vmatprep.subr.mxu0 0.0
      %444 = vmatpush2.msra.mxu0 0.0
      %445 = vmatprep.subr.mxu0 0.0
      %446 = vmatpush2.msra.mxu0 0.0
      %447 = vmatprep.subr.mxu0 0.0
      %448 = vmatpush2.msra.mxu0 0.0
      %449 = vmatprep.subr.mxu0 0.0
      %450 = vmatpush2.msra.mxu0 0.0
      %451 = vmatprep.subr.mxu0 0.0
      %452 = vmatpush2.msra.mxu0 0.0
      %453 = vmatprep.mubr.f32.mxu0 0.0
      %454 = vmatmul.mubr.f32.gmra.mxu0 %v229
      %v455 = vpop.f32.mrf.mxu0
      %v456 = vadd.f32 0.0, %v455
      %v457 = vpop.f32.mrf.mxu0
      %458 = vdwg.mxu0
      %v459 = vld [vmem:[#allocation2 + $0x2] sm:$0x7]
      %v460 = vadd.f32 %v459, %v456
      %vm461 = vcmask 256000
      %462 = vst.msk [vmem:[#allocation2 + $0x2] sm:$0x7] %vm461, %v460
      %s463 = scalar_lea.vmem %s1, 96
      %v464 = vld [vmem:[%s463] sm:$0xff]
      %v465 = vld [vmem:[%s463 + $0x8] sm:$0xff]
      %v466 = vld [vmem:[%s463 + $0x10] sm:$0xff]
      %v467 = vld [vmem:[%s463 + $0x18] sm:$0xff]
      %468 = vmatprep.subr.mxu0 0.0
      %469 = vmatpush1.msra.mxu0 0.0
      %470 = vmatprep.subr.mxu0 0.0
      %471 = vmatpush1.msra.mxu0 0.0
      %472 = vmatprep.subr.mxu0 0.0
      %473 = vmatpush1.msra.mxu0 0.0
      %474 = vmatprep.subr.mxu0 0.0
      %475 = vmatpush1.msra.mxu0 0.0
      %476 = vmatprep.subr.mxu0 0.0
      %477 = vmatpush1.msra.mxu0 0.0
      %478 = vmatprep.subr.mxu0 0.0
      %479 = vmatpush1.msra.mxu0 0.0
      %480 = vmatprep.subr.mxu0 0.0
      %481 = vmatpush1.msra.mxu0 0.0
      %482 = vmatprep.subr.mxu0 0.0
      %483 = vmatpush1.msra.mxu0 0.0
      %484 = vmatprep.subr.mxu0 0.0
      %485 = vmatpush1.msra.mxu0 0.0
      %486 = vmatprep.subr.mxu0 0.0
      %487 = vmatpush1.msra.mxu0 0.0
      %488 = vmatprep.subr.mxu0 0.0
      %489 = vmatpush1.msra.mxu0 0.0
      %490 = vmatprep.subr.mxu0 0.0
      %491 = vmatpush1.msra.mxu0 0.0
      %492 = vmatprep.subr.mxu0 0.0
      %493 = vmatpush1.msra.mxu0 %v467
      %494 = vmatprep.subr.mxu0 0.0
      %495 = vmatpush1.msra.mxu0 %v466
      %496 = vmatprep.subr.mxu0 0.0
      %497 = vmatpush1.msra.mxu0 %v465
      %498 = vmatprep.subr.mxu0 0.0
      %499 = vmatpush1.msra.mxu0 %v464
      %500 = vmatprep.subr.mxu0 0.0
      %501 = vmatpush2.msra.mxu0 0.0
      %502 = vmatprep.subr.mxu0 0.0
      %503 = vmatpush2.msra.mxu0 0.0
      %504 = vmatprep.subr.mxu0 0.0
      %505 = vmatpush2.msra.mxu0 0.0
      %506 = vmatprep.subr.mxu0 0.0
      %507 = vmatpush2.msra.mxu0 0.0
      %508 = vmatprep.subr.mxu0 0.0
      %509 = vmatpush2.msra.mxu0 0.0
      %510 = vmatprep.subr.mxu0 0.0
      %511 = vmatpush2.msra.mxu0 0.0
      %512 = vmatprep.subr.mxu0 0.0
      %513 = vmatpush2.msra.mxu0 0.0
      %514 = vmatprep.subr.mxu0 0.0
      %515 = vmatpush2.msra.mxu0 0.0
      %516 = vmatprep.subr.mxu0 0.0
      %517 = vmatpush2.msra.mxu0 0.0
      %518 = vmatprep.subr.mxu0 0.0
      %519 = vmatpush2.msra.mxu0 0.0
      %520 = vmatprep.subr.mxu0 0.0
      %521 = vmatpush2.msra.mxu0 0.0
      %522 = vmatprep.subr.mxu0 0.0
      %523 = vmatpush2.msra.mxu0 0.0
      %524 = vmatprep.subr.mxu0 0.0
      %525 = vmatpush2.msra.mxu0 0.0
      %526 = vmatprep.subr.mxu0 0.0
      %527 = vmatpush2.msra.mxu0 0.0
      %528 = vmatprep.subr.mxu0 0.0
      %529 = vmatpush2.msra.mxu0 0.0
      %530 = vmatprep.subr.mxu0 0.0
      %531 = vmatpush2.msra.mxu0 0.0
      %532 = vmatprep.mubr.f32.mxu0 0.0
      %533 = vmatmul.mubr.f32.gmra.mxu0 %v229
      %v534 = vpop.f32.mrf.mxu0
      %v535 = vadd.f32 0.0, %v534
      %v536 = vpop.f32.mrf.mxu0
      %537 = vdwg.mxu0
      %v538 = vld [vmem:[#allocation2 + $0x1] sm:$0xf]
      %v539 = vadd.f32 %v538, %v535
      %vm540 = vcmask 257024
      %541 = vst.msk [vmem:[#allocation2 + $0x1] sm:$0xf] %vm540, %v539
      %s542 = scalar_lea.vmem %s1, 128
      %v543 = vld [vmem:[%s542] sm:$0xff]
      %v544 = vld [vmem:[%s542 + $0x8] sm:$0xff]
      %v545 = vld [vmem:[%s542 + $0x10] sm:$0xff]
      %v546 = vld [vmem:[%s542 + $0x18] sm:$0xff]
      %547 = vmatprep.subr.mxu0 0.0
      %548 = vmatpush1.msra.mxu0 0.0
      %549 = vmatprep.subr.mxu0 0.0
      %550 = vmatpush1.msra.mxu0 0.0
      %551 = vmatprep.subr.mxu0 0.0
      %552 = vmatpush1.msra.mxu0 0.0
      %553 = vmatprep.subr.mxu0 0.0
      %554 = vmatpush1.msra.mxu0 0.0
      %555 = vmatprep.subr.mxu0 0.0
      %556 = vmatpush1.msra.mxu0 0.0
      %557 = vmatprep.subr.mxu0 0.0
      %558 = vmatpush1.msra.mxu0 0.0
      %559 = vmatprep.subr.mxu0 0.0
      %560 = vmatpush1.msra.mxu0 0.0
      %561 = vmatprep.subr.mxu0 0.0
      %562 = vmatpush1.msra.mxu0 0.0
      %563 = vmatprep.subr.mxu0 0.0
      %564 = vmatpush1.msra.mxu0 0.0
      %565 = vmatprep.subr.mxu0 0.0
      %566 = vmatpush1.msra.mxu0 0.0
      %567 = vmatprep.subr.mxu0 0.0
      %568 = vmatpush1.msra.mxu0 0.0
      %569 = vmatprep.subr.mxu0 0.0
      %570 = vmatpush1.msra.mxu0 0.0
      %571 = vmatprep.subr.mxu0 0.0
      %572 = vmatpush1.msra.mxu0 %v546
      %573 = vmatprep.subr.mxu0 0.0
      %574 = vmatpush1.msra.mxu0 %v545
      %575 = vmatprep.subr.mxu0 0.0
      %576 = vmatpush1.msra.mxu0 %v544
      %577 = vmatprep.subr.mxu0 0.0
      %578 = vmatpush1.msra.mxu0 %v543
      %579 = vmatprep.subr.mxu0 0.0
      %580 = vmatpush2.msra.mxu0 0.0
      %581 = vmatprep.subr.mxu0 0.0
      %582 = vmatpush2.msra.mxu0 0.0
      %583 = vmatprep.subr.mxu0 0.0
      %584 = vmatpush2.msra.mxu0 0.0
      %585 = vmatprep.subr.mxu0 0.0
      %586 = vmatpush2.msra.mxu0 0.0
      %587 = vmatprep.subr.mxu0 0.0
      %588 = vmatpush2.msra.mxu0 0.0
      %589 = vmatprep.subr.mxu0 0.0
      %590 = vmatpush2.msra.mxu0 0.0
      %591 = vmatprep.subr.mxu0 0.0
      %592 = vmatpush2.msra.mxu0 0.0
      %593 = vmatprep.subr.mxu0 0.0
      %594 = vmatpush2.msra.mxu0 0.0
      %595 = vmatprep.subr.mxu0 0.0
      %596 = vmatpush2.msra.mxu0 0.0
      %597 = vmatprep.subr.mxu0 0.0
      %598 = vmatpush2.msra.mxu0 0.0
      %599 = vmatprep.subr.mxu0 0.0
      %600 = vmatpush2.msra.mxu0 0.0
      %601 = vmatprep.subr.mxu0 0.0
      %602 = vmatpush2.msra.mxu0 0.0
      %603 = vmatprep.subr.mxu0 0.0
      %604 = vmatpush2.msra.mxu0 0.0
      %605 = vmatprep.subr.mxu0 0.0
      %606 = vmatpush2.msra.mxu0 0.0
      %607 = vmatprep.subr.mxu0 0.0
      %608 = vmatpush2.msra.mxu0 0.0
      %609 = vmatprep.subr.mxu0 0.0
      %610 = vmatpush2.msra.mxu0 0.0
      %611 = vmatprep.mubr.f32.mxu0 0.0
      %612 = vmatmul.mubr.f32.gmra.mxu0 %v229
      %v613 = vpop.f32.mrf.mxu0
      %v614 = vadd.f32 0.0, %v613
      %v615 = vpop.f32.mrf.mxu0
      %616 = vdwg.mxu0
      %v617 = vld [vmem:[#allocation2] sm:$0x1f]
      %v618 = vadd.f32 %v617, %v614
      %619 = vst.msk [vmem:[#allocation2] sm:$0x1f] %vm221, %v618
      %v620 = vld [vmem:[#allocation2] sm:$0x1f]
      %v621 = vld [vmem:[%s2] sm:$0x1]
      %v623 = vlaneseq
      %v624 = vshrl.u32 %v623, 7
      %v625 = vsub.s32 0, %v624
      %v626 = vrot.slane %v621, %v625
      %v628 = vadd.f32 %v620, %v626
      %v629 = vtanh.pop %v628
      %v630 = vadd.f32 %v629, %v220
      %v631 = vld [vmem:[%s3] sm:$0x1]
      %v632 = vld [vmem:[%s4] sm:$0x1]
      %v633 = vsel %vm221, %v630, 0.0
      %634 = vadd.xlane.f32.xlu0 %v633
      %v635 = vpop.xlane.xlu0 %634
      %v636 = vrcp.pop 32.0
      %v637 = vmul.f32 %v635, %v636
      %v638 = vsub.f32 %v630, %v637
      %v639 = vmul.f32 %v638, %v638
      %v640 = vsel %vm221, %v639, 0.0
      %641 = vadd.xlane.f32.xlu0 %v640
      %v642 = vpop.xlane.xlu0 %641
      %v643 = vmul.f32 %v642, %v636
      %v644 = vadd.f32 %v643, 1e-05
      %v645 = vrsqrt.pop %v644
      %v646 = vmul.f32 %v638, %v645
      %v648 = vlaneseq
      %v649 = vshrl.u32 %v648, 7
      %v650 = vsub.s32 0, %v649
      %v651 = vrot.slane %v631, %v650
      %v653 = vmul.f32 %v646, %v651
      %v655 = vlaneseq
      %v656 = vshrl.u32 %v655, 7
      %v657 = vsub.s32 0, %v656
      %v658 = vrot.slane %v632, %v657
      %v660 = vadd.f32 %v653, %v658
      %661 = vst.msk [vmem:[%s219] sm:$0x1f] %vm221, %v660
      %p662 = scmp.lt.s32.totalorder %s16, 1
      %s663 = scalar_select %p662, %s16, 1
      %s664 = smul.addr %s663, 8
      %s665 = scalar_lea.vmem %s5, %s664
      // Predicated region
      $region41: #{_lambda_.20} parent=39 // pred_check
        %p666 = pneg %p144
      $region42: #{_lambda_.20} parent=39 // pred_check_branch
        %668 = sbr.rel (%p666) target = $region44
      $region43: #{_lambda_.20} parent=39 // pred_region
        _
      $region44: #{_lambda_.20} parent=39 // pred_fallthru
        _
    $region40: #{_lambda_.20} parent=5 // pred_fallthru
      _
    %p669 = scmp.le.s32.totalorder 2, %s11
    // Predicated region
    $region45: #{_lambda_.20} parent=5 // pred_check
      %p670 = pneg %p669
    $region46: #{_lambda_.20} parent=5 // pred_check_branch
      %672 = sbr.rel (%p670) target = $region48
    $region47: #{_lambda_.20} parent=5 // pred_region
      %s673 = ssub.s32 %s11, 2
      // Predicated region
      $region49: #{_lambda_.20} parent=47 // pred_check
        %p674 = pneg %p150
      $region50: #{_lambda_.20} parent=47 // pred_check_branch
        %676 = sbr.rel (%p674) target = $region52
      $region51: #{_lambda_.20} parent=47 // pred_region
        %p677 = scmp.lt.s32.totalorder %s17, 1
        %s678 = scalar_select %p677, %s17, 1
        %s679 = smul.addr %s678, 8
        %s680 = scalar_lea.vmem %s5, %s679
      $region52: #{_lambda_.20} parent=47 // pred_fallthru
        _
    $region48: #{_lambda_.20} parent=5 // pred_fallthru
      _
  $region6: #{_lambda_.20} parent=0 // loop_footer
    %s15 = sadd.s32 1, %s11
  $region7: #{_lambda_.20} parent=0 // loop_footer_branch
    %10 = sbr.rel target = $region3
  $region8: #{_lambda_.20} parent=0 // loop_exit
    _

// kernel: tile.10
$region0: #{tile.10}
  #allocation0 [shape = 's32[1]{0}', space=sflag, size = 0x4, scoped, tag = 'scoped memory for tile.10']
  %s0 = inlined_call_operand.vmem [shape: f32[32], index: 0, kind: input, shape index: {}]
  %s1 = inlined_call_operand.vmem [shape: f32[2,32], index: 1, kind: output, shape index: {}]
  // Predicated region
  $region2: #{tile.10} parent=0 // pred_check
    _
  $region3: #{tile.10} parent=0 // pred_check_branch
    %3 = sbr.rel (0) target = $region5
  $region4: #{tile.10} parent=0 // pred_region
    _
  $region5: #{tile.10} parent=0 // pred_fallthru
    _
  %v4 = vld [vmem:[%s0] ss:$0 sm:$0xff]
  %5 = vst [vmem:[%s1] sm:$0x3] %v4

// kernel: tile.11
$region0: #{tile.11}
  %s0 = inlined_call_operand.vmem [shape: f32[2,32], index: 0, kind: input, shape index: {}]
  %s1 = inlined_call_operand.vmem [shape: f32[1,64], index: 1, kind: output, shape index: {}]
  $region1: #{tile.11} parent=0
    #allocation0 [shape = 'u8[4096]{0}', space=vmem, size = 0x1000, scoped, tag = 'scoped mem for output reshape']
    #allocation1 [shape = 'u8[4096]{0}', space=vmem, size = 0x1000, scoped, tag = 'scoped mem for input reshape']
    %s3 = sshll.u32 1, 2
    %s4 = ssub.s32 %s3, 1
    %v5 = vld [vmem:[%s0] sm:%s4]
    %6 = vst [vmem:[#allocation1] sm:%s4] %v5
    %v7 = vld [vmem:[#allocation1] sm:$0x1]
    %vm8 = vcmask 261120
    %9 = vst.msk [vmem:[#allocation0] sm:$0x1] %vm8, %v7
    %s10 = scalar_lea.vmem [#allocation1], 1
    %v11 = vld [vmem:[%s10] sm:$0x1]
    %12 = vrot.lane.b32.xlu0 %v11, 32
    %v13 = vpop.permute.xlu0 %12
    %vm14 = vcmask 523520
    %15 = vst.msk [vmem:[#allocation0] sm:$0x1] %vm14, %v13
    %s17 = sshll.u32 1, 1
    %s18 = ssub.s32 %s17, 1
    %v20 = vld [vmem:[#allocation0] sm:%s18]
    %s21 = sshll.u32 1, 1
    %s22 = ssub.s32 %s21, 1
    %23 = vst [vmem:[%s1] sm:%s22] %v20

// kernel: _lambda_.13
$region0: #{_lambda_.13}
  #allocation0 [shape = 'u32[]', space=smem, size = 0x4, offset = 0x4, fixed_abs, tag = 'smem constant byte address 0x4 - core index']
  #allocation1 [shape = 'u32[144,128]{1,0:T(1,128)}', space=vmem, size = 0x12000, scoped, tag = 'internal scratch']
  %s0 = inlined_call_operand.vmem [shape: f32[2,18,32], index: 0, kind: input, shape index: {}]
  %s1 = inlined_call_operand.vmem [shape: f32[2,16,32], index: 1, kind: output, shape index: {}]
  %s2 = sld [smem:[#allocation0]]
  $region37: #{_lambda_.13} parent=0
    _
  %s4 = ssub.s32 1, %s2
  %s5 = scalar_select 0, %s4, %s2
  loop: start=0, step=1, limit=4
  $region2: #{_lambda_.13} parent=0 // loop_pre_header
    _
  $region3: #{_lambda_.13} parent=0 // loop_header
    %s7 = sphi 0, %s11
    %p8 = scmp.ge.s32.totalorder %s7, 4
    %s17 = sphi 0, %s19
    %s20 = sphi 0, %s17
    %s21 = sphi 0, %s20
    %s37 = sphi 0, %s21
    %s43 = sphi 0, %s45
    %s46 = sphi 0, %s43
    %s47 = sphi 0, %s46
    %s63 = sphi 0, %s47
  $region4: #{_lambda_.13} parent=0 // loop_header_branch
    %10 = sbr.rel (%p8) target = $region8
  $region5: #{_lambda_.13} parent=0 // loop_body
    %s12 = ssub.s32 %s7, 1
    %s13 = ssub.s32 %s7, 2
    %s14 = sadd.s32 %s7, 1
    %s15 = ssub.s32 %s7, %s14
    %p16 = scmp.eq.s32.totalorder %s15, 0
    %s18 = sadd.s32 %s17, 1
    %s19 = scalar_select %p16, %s17, %s18
    %p22 = pneg %p16
    %p23 = scmp.eq.s32.totalorder %s7, 1
    %p24 = por %p22, %p23
    %p25 = scmp.ne.s32.totalorder %s17, %s20
    %p26 = scmp.eq.s32.totalorder %s7, 0
    %p27 = por %p25, %p26
    %p28 = scmp.ne.s32.totalorder %s17, %s20
    %p29 = scmp.eq.s32.totalorder %s12, 1
    %p30 = por %p28, %p29
    %p31 = scmp.ne.s32.totalorder %s20, %s21
    %p32 = scmp.eq.s32.totalorder %s12, 0
    %p33 = por %p31, %p32
    %p34 = scmp.ne.s32.totalorder %s20, %s21
    %p35 = scmp.eq.s32.totalorder %s13, 1
    %p36 = por %p34, %p35
    %p38 = scmp.ne.s32.totalorder %s21, %s37
    %p39 = scmp.eq.s32.totalorder %s13, 0
    %p40 = por %p38, %p39
    %s41 = ssub.s32 %s7, %s14
    %p42 = scmp.eq.s32.totalorder %s41, 0
    %s44 = sadd.s32 %s43, 1
    %s45 = scalar_select %p42, %s43, %s44
    %p48 = pneg %p42
    %p49 = scmp.eq.s32.totalorder %s7, 1
    %p50 = por %p48, %p49
    %p51 = scmp.ne.s32.totalorder %s43, %s46
    %p52 = scmp.eq.s32.totalorder %s7, 0
    %p53 = por %p51, %p52
    %p54 = scmp.ne.s32.totalorder %s43, %s46
    %p55 = scmp.eq.s32.totalorder %s12, 1
    %p56 = por %p54, %p55
    %p57 = scmp.ne.s32.totalorder %s46, %s47
    %p58 = scmp.eq.s32.totalorder %s12, 0
    %p59 = por %p57, %p58
    %p60 = scmp.ne.s32.totalorder %s46, %s47
    %p61 = scmp.eq.s32.totalorder %s13, 1
    %p62 = por %p60, %p61
    %p64 = scmp.ne.s32.totalorder %s47, %s63
    %p65 = scmp.eq.s32.totalorder %s13, 0
    %p66 = por %p64, %p65
    %p67 = scmp.le.s32.totalorder 1, %s7
    %p68 = scmp.lt.s32.totalorder %s7, 3
    %p69 = pnand %p67, %p68
    %p70 = pneg %p69
    // Predicated region
    $region9: #{_lambda_.13} parent=5 // pred_check
      _
    $region10: #{_lambda_.13} parent=5 // pred_check_branch
      %72 = sbr.rel (%p69) target = $region12
    $region11: #{_lambda_.13} parent=5 // pred_region
      %s73 = ssub.s32 %s7, 1
    $region12: #{_lambda_.13} parent=5 // pred_fallthru
      _
    %p74 = scmp.lt.s32.totalorder %s7, 2
    // Predicated region
    $region13: #{_lambda_.13} parent=5 // pred_check
      %p75 = pneg %p74
    $region14: #{_lambda_.13} parent=5 // pred_check_branch
      %77 = sbr.rel (%p75) target = $region16
    $region15: #{_lambda_.13} parent=5 // pred_region
      // Predicated region
      $region17: #{_lambda_.13} parent=15 // pred_check
        %p78 = pneg %p27
      $region18: #{_lambda_.13} parent=15 // pred_check_branch
        %80 = sbr.rel (%p78) target = $region20
      $region19: #{_lambda_.13} parent=15 // pred_region
        %p81 = scmp.lt.s32.totalorder %s7, 1
        %s82 = scalar_select %p81, %s7, 1
        %s83 = smul.addr %s82, 3
        %s84 = smul.addr %s83, 8
        %s85 = scalar_lea.vmem %s0, %s84
      $region20: #{_lambda_.13} parent=15 // pred_fallthru
        _
    $region16: #{_lambda_.13} parent=5 // pred_fallthru
      _
    %p86 = scmp.le.s32.totalorder 1, %s7
    %p87 = scmp.lt.s32.totalorder %s7, 3
    %p88 = pnand %p86, %p87
    %p89 = pneg %p88
    // Predicated region
    $region21: #{_lambda_.13} parent=5 // pred_check
      _
    $region22: #{_lambda_.13} parent=5 // pred_check_branch
      %91 = sbr.rel (%p88) target = $region24
    $region23: #{_lambda_.13} parent=5 // pred_region
      %s92 = ssub.s32 %s7, 1
      %p93 = scmp.lt.s32.totalorder %s12, 1
      %s94 = scalar_select %p93, %s12, 1
      %s95 = smul.addr %s94, 3
      %s96 = smul.addr %s95, 8
      %s97 = scalar_lea.vmem %s0, %s96
      %p98 = pneg %p33
      %p99 = pneg %p30
      %p100 = pneg %p59
      %p101 = pneg %p56
      %p102 = scmp.lt.s32.totalorder %s12, 1
      %s103 = scalar_select %p102, %s12, 1
      %s104 = smul.addr %s103, 2
      %s105 = smul.addr %s104, 8
      %s106 = scalar_lea.vmem %s1, %s105
      %p107 = scmp.lt.s32.totalorder %s12, 1
      %s108 = scalar_select %p107, %s12, 1
      %s109 = smul.addr %s108, 3
      %s110 = smul.addr %s109, 8
      %s111 = scalar_lea.vmem %s0, %s110
      %p112 = scmp.lt.s32.totalorder %s12, 1
      %s113 = scalar_select %p112, %s12, 1
      %s114 = smul.addr %s113, 2
      %s115 = smul.addr %s114, 8
      %s116 = scalar_lea.vmem %s1, %s115
      %v117 = vld [vmem:[%s111] sm:$0xff]
      %v118 = vld [vmem:[%s111 + $0x8] sm:$0xff]
      %v119 = vld [vmem:[%s111 + $0x10] sm:$0x3]
      %vm123 = vcmask 1046528
      %v124 = vrot.slane %v117, 1
      %v125 = vrot.slane %v118, 1
      %v126 = vsel %vm123, %v124, %v125
      %v127 = vrot.slane %v119, 1
      %v128 = vsel %vm123, %v125, %v127
      %v131 = vadd.f32 %v117, %v126
      %v132 = vadd.f32 %v118, %v128
      %vm133 = vcmask 1045504
      %v134 = vrot.slane %v117, 2
      %v135 = vrot.slane %v118, 2
      %v136 = vsel %vm133, %v134, %v135
      %v137 = vrot.slane %v119, 2
      %v138 = vsel %vm133, %v135, %v137
      %v141 = vadd.f32 %v131, %v136
      %v142 = vadd.f32 %v132, %v138
      %v143 = vmul.f32 %v141, 0.33333334
      %v144 = vmul.f32 %v142, 0.33333334
      %vm147 = vcmask 1040384
      %v148 = vrot.slane %v143, 7
      %v149 = vrot.slane %v144, 7
      %v150 = vsel %vm147, %v148, %v149
      %v154 = vsub.f32 %v117, %v148
      %v155 = vsub.f32 %v118, %v150
      %v156 = vsub.f32 %v119, %v149
      %vm157 = vcmask 261121
      %158 = vst.msk [vmem:[%s116 - $0x1] sm:$0xfe] %vm157, %v154
      %vm159 = vcmask 261120
      %160 = vst.msk [vmem:[%s116 + $0x7] sm:$0xff] %vm159, %v155
      %vm161 = vcmask 253952
      %162 = vst.msk [vmem:[%s116 + $0xf] sm:$0x1] %vm161, %v156
      %p163 = scmp.lt.s32.totalorder %s12, 1
      %s164 = scalar_select %p163, %s12, 1
      %s165 = smul.addr %s164, 2
      %s166 = smul.addr %s165, 8
      %s167 = scalar_lea.vmem %s1, %s166
      // Predicated region
      $region25: #{_lambda_.13} parent=23 // pred_check
        %p168 = pneg %p56
      $region26: #{_lambda_.13} parent=23 // pred_check_branch
        %170 = sbr.rel (%p168) target = $region28
      $region27: #{_lambda_.13} parent=23 // pred_region
        _
      $region28: #{_lambda_.13} parent=23 // pred_fallthru
        _
    $region24: #{_lambda_.13} parent=5 // pred_fallthru
      _
    %p171 = scmp.le.s32.totalorder 2, %s7
    // Predicated region
    $region29: #{_lambda_.13} parent=5 // pred_check
      %p172 = pneg %p171
    $region30: #{_lambda_.13} parent=5 // pred_check_branch
      %174 = sbr.rel (%p172) target = $region32
    $region31: #{_lambda_.13} parent=5 // pred_region
      %s175 = ssub.s32 %s7, 2
      // Predicated region
      $region33: #{_lambda_.13} parent=31 // pred_check
        %p176 = pneg %p62
      $region34: #{_lambda_.13} parent=31 // pred_check_branch
        %178 = sbr.rel (%p176) target = $region36
      $region35: #{_lambda_.13} parent=31 // pred_region
        %p179 = scmp.lt.s32.totalorder %s13, 1
        %s180 = scalar_select %p179, %s13, 1
        %s181 = smul.addr %s180, 2
        %s182 = smul.addr %s181, 8
        %s183 = scalar_lea.vmem %s1, %s182
      $region36: #{_lambda_.13} parent=31 // pred_fallthru
        _
    $region32: #{_lambda_.13} parent=5 // pred_fallthru
      _
  $region6: #{_lambda_.13} parent=0 // loop_footer
    %s11 = sadd.s32 1, %s7
  $region7: #{_lambda_.13} parent=0 // loop_footer_branch
    %6 = sbr.rel target = $region3
  $region8: #{_lambda_.13} parent=0 // loop_exit
    _

// kernel: _lambda_.14
$region0: #{_lambda_.14}
  #allocation0 [shape = 'u32[]', space=smem, size = 0x4, offset = 0x4, fixed_abs, tag = 'smem constant byte address 0x4 - core index']
  #allocation1 [shape = 'u32[144,128]{1,0:T(1,128)}', space=vmem, size = 0x12000, scoped, tag = 'internal scratch']
  #allocation2 [shape = 'f32[24,32]{1,0:T(8,128)}', space=vmem, size = 0x3000, scoped, tag = 'scratch operand']
  %s0 = inlined_call_operand.vmem [shape: f32[2,24,32], index: 0, kind: input, shape index: {}]
  %s1 = inlined_call_operand.vmem [shape: f32[2,32,32], index: 1, kind: input, shape index: {}]
  %s2 = inlined_call_operand.vmem [shape: f32[1,32], index: 2, kind: input, shape index: {}]
  %s3 = inlined_call_operand.vmem [shape: f32[24,32], index: 3, kind: output, shape index: {}]
  %s4 = sld [smem:[#allocation0]]
  $region53: #{_lambda_.14} parent=0
    _
  %s6 = ssub.s32 1, %s4
  %s7 = scalar_select 0, %s6, %s4
  loop: start=0, step=1, limit=4
  $region2: #{_lambda_.14} parent=0 // loop_pre_header
    _
  $region3: #{_lambda_.14} parent=0 // loop_header
    %s9 = sphi 0, %s13
    %p10 = scmp.ge.s32.totalorder %s9, 4
    %s16 = sphi 0, %s28
    %s17 = sphi 0, %s24
    %s18 = sphi 0, %s16
    %s19 = sphi 0, %s17
    %s20 = sphi 0, %s18
    %s21 = sphi 0, %s19
    %s33 = sphi 0, %s35
    %s36 = sphi 0, %s33
    %s37 = sphi 0, %s36
    %s53 = sphi 0, %s37
    %s59 = sphi 0, %s61
    %s62 = sphi 0, %s59
    %s63 = sphi 0, %s62
    %s79 = sphi 0, %s63
    %s83 = sphi 0, %s83
    %s85 = sphi 0, %s83
    %s86 = sphi 0, %s85
    %s100 = sphi 0, %s86
    %s106 = sphi 0, %s108
    %s109 = sphi 0, %s106
    %s110 = sphi 0, %s109
    %s126 = sphi 0, %s110
  $region4: #{_lambda_.14} parent=0 // loop_header_branch
    %12 = sbr.rel (%p10) target = $region8
  $region5: #{_lambda_.14} parent=0 // loop_body
    %s14 = ssub.s32 %s9, 1
    %s15 = ssub.s32 %s9, 2
    %s22 = sadd.s32 1, %s17
    %p23 = scmp.ge.s32.totalorder %s22, 2
    %s24 = scalar_select %p23, 0, %s22
    %s25 = sadd.s32 1, %s16
    %s26 = scalar_select %p23, %s25, %s16
    %p27 = scmp.ge.s32.totalorder %s26, 1
    %s28 = scalar_select %p27, 0, %s26
    %s29 = ssub.s32 %s17, %s24
    %s30 = ssub.s32 %s16, %s28
    %s31 = sor.u32 %s29, %s30
    %p32 = scmp.eq.s32.totalorder %s31, 0
    %s34 = sadd.s32 %s33, 1
    %s35 = scalar_select %p32, %s33, %s34
    %p38 = pneg %p32
    %p39 = scmp.eq.s32.totalorder %s9, 1
    %p40 = por %p38, %p39
    %p41 = scmp.ne.s32.totalorder %s33, %s36
    %p42 = scmp.eq.s32.totalorder %s9, 0
    %p43 = por %p41, %p42
    %p44 = scmp.ne.s32.totalorder %s33, %s36
    %p45 = scmp.eq.s32.totalorder %s14, 1
    %p46 = por %p44, %p45
    %p47 = scmp.ne.s32.totalorder %s36, %s37
    %p48 = scmp.eq.s32.totalorder %s14, 0
    %p49 = por %p47, %p48
    %p50 = scmp.ne.s32.totalorder %s36, %s37
    %p51 = scmp.eq.s32.totalorder %s15, 1
    %p52 = por %p50, %p51
    %p54 = scmp.ne.s32.totalorder %s37, %s53
    %p55 = scmp.eq.s32.totalorder %s15, 0
    %p56 = por %p54, %p55
    %s57 = ssub.s32 %s17, %s24
    %p58 = scmp.eq.s32.totalorder %s57, 0
    %s60 = sadd.s32 %s59, 1
    %s61 = scalar_select %p58, %s59, %s60
    %p64 = pneg %p58
    %p65 = scmp.eq.s32.totalorder %s9, 1
    %p66 = por %p64, %p65
    %p67 = scmp.ne.s32.totalorder %s59, %s62
    %p68 = scmp.eq.s32.totalorder %s9, 0
    %p69 = por %p67, %p68
    %p70 = scmp.ne.s32.totalorder %s59, %s62
    %p71 = scmp.eq.s32.totalorder %s14, 1
    %p72 = por %p70, %p71
    %p73 = scmp.ne.s32.totalorder %s62, %s63
    %p74 = scmp.eq.s32.totalorder %s14, 0
    %p75 = por %p73, %p74
    %p76 = scmp.ne.s32.totalorder %s62, %s63
    %p77 = scmp.eq.s32.totalorder %s15, 1
    %p78 = por %p76, %p77
    %p80 = scmp.ne.s32.totalorder %s63, %s79
    %p81 = scmp.eq.s32.totalorder %s15, 0
    %p82 = por %p80, %p81
    %s84 = sadd.s32 %s83, 1
    %p87 = scmp.eq.s32.totalorder %s9, 1
    %p88 = scmp.ne.s32.totalorder %s83, %s85
    %p89 = scmp.eq.s32.totalorder %s9, 0
    %p90 = por %p88, %p89
    %p91 = scmp.ne.s32.totalorder %s83, %s85
    %p92 = scmp.eq.s32.totalorder %s14, 1
    %p93 = por %p91, %p92
    %p94 = scmp.ne.s32.totalorder %s85, %s86
    %p95 = scmp.eq.s32.totalorder %s14, 0
    %p96 = por %p94, %p95
    %p97 = scmp.ne.s32.totalorder %s85, %s86
    %p98 = scmp.eq.s32.totalorder %s15, 1
    %p99 = por %p97, %p98
    %p101 = scmp.ne.s32.totalorder %s86, %s100
    %p102 = scmp.eq.s32.totalorder %s15, 0
    %p103 = por %p101, %p102
    %s104 = ssub.s32 %s16, %s28
    %p105 = scmp.eq.s32.totalorder %s104, 0
    %s107 = sadd.s32 %s106, 1
    %s108 = scalar_select %p105, %s106, %s107
    %p111 = pneg %p105
    %p112 = scmp.eq.s32.totalorder %s9, 1
    %p113 = por %p111, %p112
    %p114 = scmp.ne.s32.totalorder %s106, %s109
    %p115 = scmp.eq.s32.totalorder %s9, 0
    %p116 = por %p114, %p115
    %p117 = scmp.ne.s32.totalorder %s106, %s109
    %p118 = scmp.eq.s32.totalorder %s14, 1
    %p119 = por %p117, %p118
    %p120 = scmp.ne.s32.totalorder %s109, %s110
    %p121 = scmp.eq.s32.totalorder %s14, 0
    %p122 = por %p120, %p121
    %p123 = scmp.ne.s32.totalorder %s109, %s110
    %p124 = scmp.eq.s32.totalorder %s15, 1
    %p125 = por %p123, %p124
    %p127 = scmp.ne.s32.totalorder %s110, %s126
    %p128 = scmp.eq.s32.totalorder %s15, 0
    %p129 = por %p127, %p128
    %p130 = scmp.le.s32.totalorder 1, %s9
    %p131 = scmp.lt.s32.totalorder %s9, 3
    %p132 = pnand %p130, %p131
    %p133 = pneg %p132
    // Predicated region
    $region9: #{_lambda_.14} parent=5 // pred_check
      _
    $region10: #{_lambda_.14} parent=5 // pred_check_branch
      %135 = sbr.rel (%p132) target = $region12
    $region11: #{_lambda_.14} parent=5 // pred_region
      %s136 = ssub.s32 %s9, 1
      // Predicated region
      $region13: #{_lambda_.14} parent=11 // pred_check
        %p137 = pneg %p96
      $region14: #{_lambda_.14} parent=11 // pred_check_branch
        %139 = sbr.rel (%p137) target = $region16
      $region15: #{_lambda_.14} parent=11 // pred_region
        _
      $region16: #{_lambda_.14} parent=11 // pred_fallthru
        _
    $region12: #{_lambda_.14} parent=5 // pred_fallthru
      _
    %p140 = scmp.lt.s32.totalorder %s9, 2
    // Predicated region
    $region17: #{_lambda_.14} parent=5 // pred_check
      %p141 = pneg %p140
    $region18: #{_lambda_.14} parent=5 // pred_check_branch
      %143 = sbr.rel (%p141) target = $region20
    $region19: #{_lambda_.14} parent=5 // pred_region
      // Predicated region
      $region21: #{_lambda_.14} parent=19 // pred_check
        %p144 = pneg %p43
      $region22: #{_lambda_.14} parent=19 // pred_check_branch
        %146 = sbr.rel (%p144) target = $region24
      $region23: #{_lambda_.14} parent=19 // pred_region
        %s147 = smul.u32 3, %s16
        %p148 = scmp.lt.s32.totalorder %s17, 1
        %s149 = scalar_select %p148, %s17, 1
        %p150 = scmp.lt.s32.totalorder %s147, 2
        %s151 = scalar_select %p150, %s147, 2
        %s152 = smul.addr %s149, 3
        %s153 = sadd.s32 %s151, %s152
        %s154 = smul.addr %s153, 8
        %s155 = scalar_lea.vmem %s0, %s154
        %s156 = smul.u32 3, %s16
      $region24: #{_lambda_.14} parent=19 // pred_fallthru
        _
      // Predicated region
      $region25: #{_lambda_.14} parent=19 // pred_check
        %p157 = pneg %p69
      $region26: #{_lambda_.14} parent=19 // pred_check_branch
        %159 = sbr.rel (%p157) target = $region28
      $region27: #{_lambda_.14} parent=19 // pred_region
        %p160 = scmp.lt.s32.totalorder %s17, 1
        %s161 = scalar_select %p160, %s17, 1
        %s162 = smul.addr %s161, 4
        %s163 = smul.addr %s162, 8
        %s164 = scalar_lea.vmem %s1, %s163
      $region28: #{_lambda_.14} parent=19 // pred_fallthru
        _
    $region20: #{_lambda_.14} parent=5 // pred_fallthru
      _
    %p165 = scmp.le.s32.totalorder 1, %s9
    %p166 = scmp.lt.s32.totalorder %s9, 3
    %p167 = pnand %p165, %p166
    %p168 = pneg %p167
    // Predicated region
    $region29: #{_lambda_.14} parent=5 // pred_check
      _
    $region30: #{_lambda_.14} parent=5 // pred_check_branch
      %170 = sbr.rel (%p167) target = $region32
    $region31: #{_lambda_.14} parent=5 // pred_region
      %s171 = ssub.s32 %s9, 1
      %s172 = smul.u32 3, %s18
      %p173 = scmp.lt.s32.totalorder %s19, 1
      %s174 = scalar_select %p173, %s19, 1
      %p175 = scmp.lt.s32.totalorder %s172, 2
      %s176 = scalar_select %p175, %s172, 2
      %s177 = smul.addr %s174, 3
      %s178 = sadd.s32 %s176, %s177
      %s179 = smul.addr %s178, 8
      %s180 = scalar_lea.vmem %s0, %s179
      %p181 = pneg %p49
      %p182 = pneg %p46
      %p183 = scmp.lt.s32.totalorder %s19, 1
      %s184 = scalar_select %p183, %s19, 1
      %s185 = smul.addr %s184, 4
      %s186 = smul.addr %s185, 8
      %s187 = scalar_lea.vmem %s1, %s186
      %p188 = pneg %p75
      %p189 = pneg %p72
      %p190 = pneg %p96
      %p191 = pneg %p93
      %p192 = pneg %p122
      %p193 = pneg %p119
      %s194 = smul.u32 3, %s18
      %p195 = scmp.lt.s32.totalorder %s194, 2
      %s196 = scalar_select %p195, %s194, 2
      %s197 = smul.addr %s196, 8
      %s198 = scalar_lea.vmem %s3, %s197
      %s199 = smul.u32 3, %s18
      %p200 = scmp.lt.s32.totalorder %s19, 1
      %s201 = scalar_select %p200, %s19, 1
      %p202 = scmp.lt.s32.totalorder %s199, 2
      %s203 = scalar_select %p202, %s199, 2
      %s204 = smul.addr %s201, 3
      %s205 = sadd.s32 %s203, %s204
      %s206 = smul.addr %s205, 8
      %s207 = scalar_lea.vmem %s0, %s206
      %s208 = smul.u32 3, %s18
      %p209 = scmp.lt.s32.totalorder %s19, 1
      %s210 = scalar_select %p209, %s19, 1
      %s211 = smul.addr %s210, 4
      %s212 = smul.addr %s211, 8
      %s213 = scalar_lea.vmem %s1, %s212
      %s214 = smul.u32 3, %s18
      %p215 = scmp.lt.s32.totalorder %s214, 2
      %s216 = scalar_select %p215, %s214, 2
      %s217 = smul.addr %s216, 8
      %s218 = scalar_lea.vmem %s3, %s217
      %s219 = smul.u32 3, %s18
      %p220 = scmp.eq.s32.totalorder %s19, 0
      // Predicated region
      $region33: #{_lambda_.14} parent=31 // pred_check
        %p221 = pneg %p220
      $region34: #{_lambda_.14} parent=31 // pred_check_branch
        %223 = sbr.rel (%p221) target = $region36
      $region35: #{_lambda_.14} parent=31 // pred_region
        %vm224 = vcmask 261120
        %225 = vst.msk [vmem:[#allocation2] sm:$0xff] %vm224, 0.0
        %226 = vst.msk [vmem:[#allocation2 + $0x8] sm:$0xff] %vm224, 0.0
        %227 = vst.msk [vmem:[#allocation2 + $0x10] sm:$0xff] %vm224, 0.0
      $region36: #{_lambda_.14} parent=31 // pred_fallthru
        _
      %v228 = vld [vmem:[#allocation2] sm:$0xff]
      %v229 = vld [vmem:[#allocation2 + $0x8] sm:$0xff]
      %v230 = vld [vmem:[#allocation2 + $0x10] sm:$0xff]
      %v231 = vld [vmem:[%s207] sm:$0xff]
      %v232 = vld [vmem:[%s207 + $0x8] sm:$0xff]
      %v233 = vld [vmem:[%s207 + $0x10] sm:$0xff]
      %v234 = vld [vmem:[%s213] sm:$0xff]
      %v235 = vld [vmem:[%s213 + $0x8] sm:$0xff]
      %v236 = vld [vmem:[%s213 + $0x10] sm:$0xff]
      %v237 = vld [vmem:[%s213 + $0x18] sm:$0xff]
      %vm238 = vcmask 261120
      %v240 = vsel %vm238, %v231, 0
      %v243 = vsel %vm238, %v232, 0
      %v246 = vsel %vm238, %v233, 0
      %248 = vmatprep.subr.mxu0 0.0
      %249 = vmatpush1.msra.mxu0 0.0
      %250 = vmatprep.subr.mxu0 0.0
      %251 = vmatpush1.msra.mxu0 0.0
      %252 = vmatprep.subr.mxu0 0.0
      %253 = vmatpush1.msra.mxu0 0.0
      %254 = vmatprep.subr.mxu0 0.0
      %255 = vmatpush1.msra.mxu0 0.0
      %256 = vmatprep.subr.mxu0 0.0
      %257 = vmatpush1.msra.mxu0 0.0
      %258 = vmatprep.subr.mxu0 0.0
      %259 = vmatpush1.msra.mxu0 0.0
      %260 = vmatprep.subr.mxu0 0.0
      %261 = vmatpush1.msra.mxu0 0.0
      %262 = vmatprep.subr.mxu0 0.0
      %263 = vmatpush1.msra.mxu0 0.0
      %264 = vmatprep.subr.mxu0 0.0
      %265 = vmatpush1.msra.mxu0 0.0
      %266 = vmatprep.subr.mxu0 0.0
      %267 = vmatpush1.msra.mxu0 0.0
      %268 = vmatprep.subr.mxu0 0.0
      %269 = vmatpush1.msra.mxu0 0.0
      %270 = vmatprep.subr.mxu0 0.0
      %271 = vmatpush1.msra.mxu0 0.0
      %272 = vmatprep.subr.mxu0 0.0
      %273 = vmatpush1.msra.mxu0 %v237
      %274 = vmatprep.subr.mxu0 0.0
      %275 = vmatpush1.msra.mxu0 %v236
      %276 = vmatprep.subr.mxu0 0.0
      %277 = vmatpush1.msra.mxu0 %v235
      %278 = vmatprep.subr.mxu0 0.0
      %279 = vmatpush1.msra.mxu0 %v234
      %280 = vmatprep.subr.mxu0 0.0
      %281 = vmatpush2.msra.mxu0 0.0
      %282 = vmatprep.subr.mxu0 0.0
      %283 = vmatpush2.msra.mxu0 0.0
      %284 = vmatprep.subr.mxu0 0.0
      %285 = vmatpush2.msra.mxu0 0.0
      %286 = vmatprep.subr.mxu0 0.0
      %287 = vmatpush2.msra.mxu0 0.0
      %288 = vmatprep.subr.mxu0 0.0
      %289 = vmatpush2.msra.mxu0 0.0
      %290 = vmatprep.subr.mxu0 0.0
      %291 = vmatpush2.msra.mxu0 0.0
      %292 = vmatprep.subr.mxu0 0.0
      %293 = vmatpush2.msra.mxu0 0.0
      %294 = vmatprep.subr.mxu0 0.0
      %295 = vmatpush2.msra.mxu0 0.0
      %296 = vmatprep.subr.mxu0 0.0
      %297 = vmatpush2.msra.mxu0 0.0
      %298 = vmatprep.subr.mxu0 0.0
      %299 = vmatpush2.msra.mxu0 0.0
      %300 = vmatprep.subr.mxu0 0.0
      %301 = vmatpush2.msra.mxu0 0.0
      %302 = vmatprep.subr.mxu0 0.0
      %303 = vmatpush2.msra.mxu0 0.0
      %304 = vmatprep.subr.mxu0 0.0
      %305 = vmatpush2.msra.mxu0 0.0
      %306 = vmatprep.subr.mxu0 0.0
      %307 = vmatpush2.msra.mxu0 0.0
      %308 = vmatprep.subr.mxu0 0.0
      %309 = vmatpush2.msra.mxu0 0.0
      %310 = vmatprep.subr.mxu0 0.0
      %311 = vmatpush2.msra.mxu0 0.0
      %312 = vmatprep.mubr.f32.mxu0 0.0
      %313 = vmatmul.mubr.f32.gmra.mxu0 %v240
      %v314 = vpop.f32.mrf.mxu0
      %v315 = vadd.f32 0.0, %v314
      %v316 = vpop.f32.mrf.mxu0
      %317 = vmatprep.mubr.f32.mxu0 0.0
      %318 = vmatmul.mubr.f32.gmra.mxu0 %v243
      %v319 = vpop.f32.mrf.mxu0
      %v320 = vadd.f32 0.0, %v319
      %v321 = vpop.f32.mrf.mxu0
      %322 = vmatprep.mubr.f32.mxu0 0.0
      %323 = vmatmul.mubr.f32.gmra.mxu0 %v246
      %v324 = vpop.f32.mrf.mxu0
      %v325 = vadd.f32 0.0, %v324
      %v326 = vpop.f32.mrf.mxu0
      %327 = vdwg.mxu0
      %v328 = vadd.f32 %v228, %v315
      %v329 = vadd.f32 %v229, %v320
      %v330 = vadd.f32 %v230, %v325
      %331 = vst.msk [vmem:[#allocation2] sm:$0xff] %vm238, %v328
      %332 = vst.msk [vmem:[#allocation2 + $0x8] sm:$0xff] %vm238, %v329
      %333 = vst.msk [vmem:[#allocation2 + $0x10] sm:$0xff] %vm238, %v330
      %p334 = scmp.eq.s32.totalorder %s19, 1
      // Predicated region
      $region37: #{_lambda_.14} parent=31 // pred_check
        %p335 = pneg %p334
      $region38: #{_lambda_.14} parent=31 // pred_check_branch
        %337 = sbr.rel (%p335) target = $region40
      $region39: #{_lambda_.14} parent=31 // pred_region
        %v338 = vld [vmem:[#allocation2] sm:$0xff]
        %v339 = vld [vmem:[#allocation2 + $0x8] sm:$0xff]
        %v340 = vld [vmem:[#allocation2 + $0x10] sm:$0xff]
        %v341 = vld [vmem:[%s2] sm:$0x1]
        %v343 = vlaneseq
        %v344 = vshrl.u32 %v343, 7
        %v345 = vsub.s32 0, %v344
        %v346 = vrot.slane %v341, %v345
        %v348 = vadd.f32 %v338, %v346
        %v349 = vadd.f32 %v339, %v346
        %v350 = vadd.f32 %v340, %v346
        %v351 = vtanh.pop %v348
        %v352 = vtanh.pop %v349
        %v353 = vtanh.pop %v350
        %354 = vst.msk [vmem:[%s218] sm:$0xff] %vm238, %v351
        %355 = vst.msk [vmem:[%s218 + $0x8] sm:$0xff] %vm238, %v352
        %356 = vst.msk [vmem:[%s218 + $0x10] sm:$0xff] %vm238, %v353
      $region40: #{_lambda_.14} parent=31 // pred_fallthru
        _
      %s357 = smul.u32 3, %s18
      %p358 = scmp.lt.s32.totalorder %s357, 2
      %s359 = scalar_select %p358, %s357, 2
      %s360 = smul.addr %s359, 8
      %s361 = scalar_lea.vmem %s3, %s360
      // Predicated region
      $region41: #{_lambda_.14} parent=31 // pred_check
        %p362 = pneg %p119
      $region42: #{_lambda_.14} parent=31 // pred_check_branch
        %364 = sbr.rel (%p362) target = $region44
      $region43: #{_lambda_.14} parent=31 // pred_region
        %s365 = smul.u32 3, %s18
      $region44: #{_lambda_.14} parent=31 // pred_fallthru
        _
      // Predicated region
      $region45: #{_lambda_.14} parent=31 // pred_check
        %p366 = pneg %p119
      $region46: #{_lambda_.14} parent=31 // pred_check_branch
        %368 = sbr.rel (%p366) target = $region48
      $region47: #{_lambda_.14} parent=31 // pred_region
        %s369 = smul.u32 3, %s18
        %p370 = scmp.lt.s32.totalorder %s369, 2
        %s371 = scalar_select %p370, %s369, 2
        %s372 = smul.addr %s371, 8
        %s373 = scalar_lea.vmem %s3, %s372
      $region48: #{_lambda_.14} parent=31 // pred_fallthru
        _
    $region32: #{_lambda_.14} parent=5 // pred_fallthru
      _
    %p374 = scmp.le.s32.totalorder 2, %s9
    // Predicated region
    $region49: #{_lambda_.14} parent=5 // pred_check
      %p375 = pneg %p374
    $region50: #{_lambda_.14} parent=5 // pred_check_branch
      %377 = sbr.rel (%p375) target = $region52
    $region51: #{_lambda_.14} parent=5 // pred_region
      %s378 = ssub.s32 %s9, 2
    $region52: #{_lambda_.14} parent=5 // pred_fallthru
      _
  $region6: #{_lambda_.14} parent=0 // loop_footer
    %s13 = sadd.s32 1, %s9
  $region7: #{_lambda_.14} parent=0 // loop_footer_branch
    %8 = sbr.rel target = $region3
  $region8: #{_lambda_.14} parent=0 // loop_exit
    _

// kernel: _lambda_.16
$region0: #{_lambda_.16}
  #allocation0 [shape = 'u32[]', space=smem, size = 0x4, offset = 0x4, fixed_abs, tag = 'smem constant byte address 0x4 - core index']
  #allocation1 [shape = 'u32[144,128]{1,0:T(1,128)}', space=vmem, size = 0x12000, scoped, tag = 'internal scratch']
  #allocation2 [shape = 'f32[24,64]{1,0:T(8,128)}', space=vmem, size = 0x3000, scoped, tag = 'scratch operand']
  %s0 = inlined_call_operand.vmem [shape: f32[1,24,32], index: 0, kind: input, shape index: {}]
  %s1 = inlined_call_operand.vmem [shape: f32[1,32,64], index: 1, kind: input, shape index: {}]
  %s2 = inlined_call_operand.vmem [shape: f32[1,64], index: 2, kind: input, shape index: {}]
  %s3 = inlined_call_operand.vmem [shape: f32[24,64], index: 3, kind: output, shape index: {}]
  %s4 = sld [smem:[#allocation0]]
  $region30: #{_lambda_.16} parent=0
    _
  %s6 = ssub.s32 1, %s4
  %s7 = scalar_select 0, %s6, %s4
  // Predicated region
  $region2: #{_lambda_.16} parent=0 // pred_check
    _
  $region3: #{_lambda_.16} parent=0 // pred_check_branch
    %9 = sbr.rel (0) target = $region5
  $region4: #{_lambda_.16} parent=0 // pred_region
    _
  $region5: #{_lambda_.16} parent=0 // pred_fallthru
    _
  // Predicated region
  $region6: #{_lambda_.16} parent=0 // pred_check
    _
  $region7: #{_lambda_.16} parent=0 // pred_check_branch
    %11 = sbr.rel (0) target = $region9
  $region8: #{_lambda_.16} parent=0 // pred_region
    _
  $region9: #{_lambda_.16} parent=0 // pred_fallthru
    _
  // Predicated region
  $region10: #{_lambda_.16} parent=0 // pred_check
    _
  $region11: #{_lambda_.16} parent=0 // pred_check_branch
    %13 = sbr.rel (0) target = $region13
  $region12: #{_lambda_.16} parent=0 // pred_region
    _
  $region13: #{_lambda_.16} parent=0 // pred_fallthru
    _
  %p14 = scmp.eq.s32.totalorder 0, 0
  // Predicated region
  $region14: #{_lambda_.16} parent=0 // pred_check
    %p15 = pneg %p14
  $region15: #{_lambda_.16} parent=0 // pred_check_branch
    %17 = sbr.rel (%p15) target = $region17
  $region16: #{_lambda_.16} parent=0 // pred_region
    %vm18 = vcmask 523264
    %19 = vst.msk [vmem:[#allocation2] sm:$0xff] %vm18, 0.0
    %20 = vst.msk [vmem:[#allocation2 + $0x8] sm:$0xff] %vm18, 0.0
    %21 = vst.msk [vmem:[#allocation2 + $0x10] sm:$0xff] %vm18, 0.0
  $region17: #{_lambda_.16} parent=0 // pred_fallthru
    _
  %v22 = vld [vmem:[#allocation2] sm:$0xff]
  %v23 = vld [vmem:[#allocation2 + $0x8] sm:$0xff]
  %v24 = vld [vmem:[#allocation2 + $0x10] sm:$0xff]
  %v25 = vld [vmem:[%s0] sm:$0xff]
  %v26 = vld [vmem:[%s0 + $0x8] sm:$0xff]
  %v27 = vld [vmem:[%s0 + $0x10] sm:$0xff]
  %v28 = vld [vmem:[%s1] sm:$0xff]
  %v29 = vld [vmem:[%s1 + $0x8] sm:$0xff]
  %v30 = vld [vmem:[%s1 + $0x10] sm:$0xff]
  %v31 = vld [vmem:[%s1 + $0x18] sm:$0xff]
  %vm32 = vcmask 261120
  %v34 = vsel %vm32, %v25, 0
  %v37 = vsel %vm32, %v26, 0
  %v40 = vsel %vm32, %v27, 0
  %42 = vmatprep.subr.mxu0 0.0
  %43 = vmatpush1.msra.mxu0 0.0
  %44 = vmatprep.subr.mxu0 0.0
  %45 = vmatpush1.msra.mxu0 0.0
  %46 = vmatprep.subr.mxu0 0.0
  %47 = vmatpush1.msra.mxu0 0.0
  %48 = vmatprep.subr.mxu0 0.0
  %49 = vmatpush1.msra.mxu0 0.0
  %50 = vmatprep.subr.mxu0 0.0
  %51 = vmatpush1.msra.mxu0 0.0
  %52 = vmatprep.subr.mxu0 0.0
  %53 = vmatpush1.msra.mxu0 0.0
  %54 = vmatprep.subr.mxu0 0.0
  %55 = vmatpush1.msra.mxu0 0.0
  %56 = vmatprep.subr.mxu0 0.0
  %57 = vmatpush1.msra.mxu0 0.0
  %58 = vmatprep.subr.mxu0 0.0
  %59 = vmatpush1.msra.mxu0 0.0
  %60 = vmatprep.subr.mxu0 0.0
  %61 = vmatpush1.msra.mxu0 0.0
  %62 = vmatprep.subr.mxu0 0.0
  %63 = vmatpush1.msra.mxu0 0.0
  %64 = vmatprep.subr.mxu0 0.0
  %65 = vmatpush1.msra.mxu0 0.0
  %66 = vmatprep.subr.mxu0 0.0
  %67 = vmatpush1.msra.mxu0 %v31
  %68 = vmatprep.subr.mxu0 0.0
  %69 = vmatpush1.msra.mxu0 %v30
  %70 = vmatprep.subr.mxu0 0.0
  %71 = vmatpush1.msra.mxu0 %v29
  %72 = vmatprep.subr.mxu0 0.0
  %73 = vmatpush1.msra.mxu0 %v28
  %74 = vmatprep.subr.mxu0 0.0
  %75 = vmatpush2.msra.mxu0 0.0
  %76 = vmatprep.subr.mxu0 0.0
  %77 = vmatpush2.msra.mxu0 0.0
  %78 = vmatprep.subr.mxu0 0.0
  %79 = vmatpush2.msra.mxu0 0.0
  %80 = vmatprep.subr.mxu0 0.0
  %81 = vmatpush2.msra.mxu0 0.0
  %82 = vmatprep.subr.mxu0 0.0
  %83 = vmatpush2.msra.mxu0 0.0
  %84 = vmatprep.subr.mxu0 0.0
  %85 = vmatpush2.msra.mxu0 0.0
  %86 = vmatprep.subr.mxu0 0.0
  %87 = vmatpush2.msra.mxu0 0.0
  %88 = vmatprep.subr.mxu0 0.0
  %89 = vmatpush2.msra.mxu0 0.0
  %90 = vmatprep.subr.mxu0 0.0
  %91 = vmatpush2.msra.mxu0 0.0
  %92 = vmatprep.subr.mxu0 0.0
  %93 = vmatpush2.msra.mxu0 0.0
  %94 = vmatprep.subr.mxu0 0.0
  %95 = vmatpush2.msra.mxu0 0.0
  %96 = vmatprep.subr.mxu0 0.0
  %97 = vmatpush2.msra.mxu0 0.0
  %98 = vmatprep.subr.mxu0 0.0
  %99 = vmatpush2.msra.mxu0 0.0
  %100 = vmatprep.subr.mxu0 0.0
  %101 = vmatpush2.msra.mxu0 0.0
  %102 = vmatprep.subr.mxu0 0.0
  %103 = vmatpush2.msra.mxu0 0.0
  %104 = vmatprep.subr.mxu0 0.0
  %105 = vmatpush2.msra.mxu0 0.0
  %106 = vmatprep.mubr.f32.mxu0 0.0
  %107 = vmatmul.mubr.f32.gmra.mxu0 %v34
  %v108 = vpop.f32.mrf.mxu0
  %v109 = vadd.f32 0.0, %v108
  %v110 = vpop.f32.mrf.mxu0
  %111 = vmatprep.mubr.f32.mxu0 0.0
  %112 = vmatmul.mubr.f32.gmra.mxu0 %v37
  %v113 = vpop.f32.mrf.mxu0
  %v114 = vadd.f32 0.0, %v113
  %v115 = vpop.f32.mrf.mxu0
  %116 = vmatprep.mubr.f32.mxu0 0.0
  %117 = vmatmul.mubr.f32.gmra.mxu0 %v40
  %v118 = vpop.f32.mrf.mxu0
  %v119 = vadd.f32 0.0, %v118
  %v120 = vpop.f32.mrf.mxu0
  %121 = vdwg.mxu0
  %v122 = vadd.f32 %v22, %v109
  %v123 = vadd.f32 %v23, %v114
  %v124 = vadd.f32 %v24, %v119
  %vm125 = vcmask 523264
  %126 = vst.msk [vmem:[#allocation2] sm:$0xff] %vm125, %v122
  %127 = vst.msk [vmem:[#allocation2 + $0x8] sm:$0xff] %vm125, %v123
  %128 = vst.msk [vmem:[#allocation2 + $0x10] sm:$0xff] %vm125, %v124
  // Predicated region
  $region18: #{_lambda_.16} parent=0 // pred_check
    %p129 = pneg %p14
  $region19: #{_lambda_.16} parent=0 // pred_check_branch
    %131 = sbr.rel (%p129) target = $region21
  $region20: #{_lambda_.16} parent=0 // pred_region
    %v132 = vld [vmem:[#allocation2] sm:$0xff]
    %v133 = vld [vmem:[#allocation2 + $0x8] sm:$0xff]
    %v134 = vld [vmem:[#allocation2 + $0x10] sm:$0xff]
    %v135 = vld [vmem:[%s2] sm:$0x1]
    %v137 = vlaneseq
    %v138 = vshrl.u32 %v137, 7
    %v139 = vsub.s32 0, %v138
    %v140 = vrot.slane %v135, %v139
    %v142 = vadd.f32 %v132, %v140
    %v143 = vadd.f32 %v133, %v140
    %v144 = vadd.f32 %v134, %v140
    %v145 = vtanh.pop %v142
    %v146 = vtanh.pop %v143
    %v147 = vtanh.pop %v144
    %148 = vst.msk [vmem:[%s3] sm:$0xff] %vm125, %v145
    %149 = vst.msk [vmem:[%s3 + $0x8] sm:$0xff] %vm125, %v146
    %150 = vst.msk [vmem:[%s3 + $0x10] sm:$0xff] %vm125, %v147
  $region21: #{_lambda_.16} parent=0 // pred_fallthru
    _
  // Predicated region
  $region22: #{_lambda_.16} parent=0 // pred_check
    _
  $region23: #{_lambda_.16} parent=0 // pred_check_branch
    %152 = sbr.rel (0) target = $region25
  $region24: #{_lambda_.16} parent=0 // pred_region
    _
  $region25: #{_lambda_.16} parent=0 // pred_fallthru
    _
  // Predicated region
  $region26: #{_lambda_.16} parent=0 // pred_check
    _
  $region27: #{_lambda_.16} parent=0 // pred_check_branch
    %154 = sbr.rel (0) target = $region29
  $region28: #{_lambda_.16} parent=0 // pred_region
    _
  $region29: #{_lambda_.16} parent=0 // pred_fallthru
    _

// kernel: _lambda_.15
$region0: #{_lambda_.15}
  #allocation0 [shape = 'u32[]', space=smem, size = 0x4, offset = 0x4, fixed_abs, tag = 'smem constant byte address 0x4 - core index']
  #allocation1 [shape = 'u32[144,128]{1,0:T(1,128)}', space=vmem, size = 0x12000, scoped, tag = 'internal scratch']
  #allocation2 [shape = 'f32[9,32]{1,0:T(8,128)}', space=vmem, size = 0x2000, scoped, tag = 'scratch operand']
  %s0 = inlined_call_operand.vmem [shape: f32[2,9,32], index: 0, kind: input, shape index: {}]
  %s1 = inlined_call_operand.vmem [shape: f32[9,32,32], index: 1, kind: input, shape index: {}]
  %s2 = inlined_call_operand.vmem [shape: f32[1,32], index: 2, kind: input, shape index: {}]
  %s3 = inlined_call_operand.vmem [shape: f32[1,32], index: 3, kind: input, shape index: {}]
  %s4 = inlined_call_operand.vmem [shape: f32[1,32], index: 4, kind: input, shape index: {}]
  %s5 = inlined_call_operand.vmem [shape: f32[2,9,32], index: 5, kind: output, shape index: {}]
  %s6 = sld [smem:[#allocation0]]
  $region53: #{_lambda_.15} parent=0
    _
  %s8 = ssub.s32 1, %s6
  %s9 = scalar_select 0, %s8, %s6
  loop: start=0, step=1, limit=4
  $region2: #{_lambda_.15} parent=0 // loop_pre_header
    _
  $region3: #{_lambda_.15} parent=0 // loop_header
    %s11 = sphi 0, %s15
    %p12 = scmp.ge.s32.totalorder %s11, 4
    %s21 = sphi 0, %s23
    %s24 = sphi 0, %s21
    %s25 = sphi 0, %s24
    %s41 = sphi 0, %s25
    %s45 = sphi 0, %s45
    %s47 = sphi 0, %s45
    %s48 = sphi 0, %s47
    %s62 = sphi 0, %s48
    %s66 = sphi 0, %s66
    %s68 = sphi 0, %s66
    %s69 = sphi 0, %s68
    %s83 = sphi 0, %s69
    %s87 = sphi 0, %s87
    %s89 = sphi 0, %s87
    %s90 = sphi 0, %s89
    %s104 = sphi 0, %s90
    %s108 = sphi 0, %s108
    %s110 = sphi 0, %s108
    %s111 = sphi 0, %s110
    %s125 = sphi 0, %s111
    %s131 = sphi 0, %s133
    %s134 = sphi 0, %s131
    %s135 = sphi 0, %s134
    %s151 = sphi 0, %s135
  $region4: #{_lambda_.15} parent=0 // loop_header_branch
    %14 = sbr.rel (%p12) target = $region8
  $region5: #{_lambda_.15} parent=0 // loop_body
    %s16 = ssub.s32 %s11, 1
    %s17 = ssub.s32 %s11, 2
    %s18 = sadd.s32 %s11, 1
    %s19 = ssub.s32 %s11, %s18
    %p20 = scmp.eq.s32.totalorder %s19, 0
    %s22 = sadd.s32 %s21, 1
    %s23 = scalar_select %p20, %s21, %s22
    %p26 = pneg %p20
    %p27 = scmp.eq.s32.totalorder %s11, 1
    %p28 = por %p26, %p27
    %p29 = scmp.ne.s32.totalorder %s21, %s24
    %p30 = scmp.eq.s32.totalorder %s11, 0
    %p31 = por %p29, %p30
    %p32 = scmp.ne.s32.totalorder %s21, %s24
    %p33 = scmp.eq.s32.totalorder %s16, 1
    %p34 = por %p32, %p33
    %p35 = scmp.ne.s32.totalorder %s24, %s25
    %p36 = scmp.eq.s32.totalorder %s16, 0
    %p37 = por %p35, %p36
    %p38 = scmp.ne.s32.totalorder %s24, %s25
    %p39 = scmp.eq.s32.totalorder %s17, 1
    %p40 = por %p38, %p39
    %p42 = scmp.ne.s32.totalorder %s25, %s41
    %p43 = scmp.eq.s32.totalorder %s17, 0
    %p44 = por %p42, %p43
    %s46 = sadd.s32 %s45, 1
    %p49 = scmp.eq.s32.totalorder %s11, 1
    %p50 = scmp.ne.s32.totalorder %s45, %s47
    %p51 = scmp.eq.s32.totalorder %s11, 0
    %p52 = por %p50, %p51
    %p53 = scmp.ne.s32.totalorder %s45, %s47
    %p54 = scmp.eq.s32.totalorder %s16, 1
    %p55 = por %p53, %p54
    %p56 = scmp.ne.s32.totalorder %s47, %s48
    %p57 = scmp.eq.s32.totalorder %s16, 0
    %p58 = por %p56, %p57
    %p59 = scmp.ne.s32.totalorder %s47, %s48
    %p60 = scmp.eq.s32.totalorder %s17, 1
    %p61 = por %p59, %p60
    %p63 = scmp.ne.s32.totalorder %s48, %s62
    %p64 = scmp.eq.s32.totalorder %s17, 0
    %p65 = por %p63, %p64
    %s67 = sadd.s32 %s66, 1
    %p70 = scmp.eq.s32.totalorder %s11, 1
    %p71 = scmp.ne.s32.totalorder %s66, %s68
    %p72 = scmp.eq.s32.totalorder %s11, 0
    %p73 = por %p71, %p72
    %p74 = scmp.ne.s32.totalorder %s66, %s68
    %p75 = scmp.eq.s32.totalorder %s16, 1
    %p76 = por %p74, %p75
    %p77 = scmp.ne.s32.totalorder %s68, %s69
    %p78 = scmp.eq.s32.totalorder %s16, 0
    %p79 = por %p77, %p78
    %p80 = scmp.ne.s32.totalorder %s68, %s69
    %p81 = scmp.eq.s32.totalorder %s17, 1
    %p82 = por %p80, %p81
    %p84 = scmp.ne.s32.totalorder %s69, %s83
    %p85 = scmp.eq.s32.totalorder %s17, 0
    %p86 = por %p84, %p85
    %s88 = sadd.s32 %s87, 1
    %p91 = scmp.eq.s32.totalorder %s11, 1
    %p92 = scmp.ne.s32.totalorder %s87, %s89
    %p93 = scmp.eq.s32.totalorder %s11, 0
    %p94 = por %p92, %p93
    %p95 = scmp.ne.s32.totalorder %s87, %s89
    %p96 = scmp.eq.s32.totalorder %s16, 1
    %p97 = por %p95, %p96
    %p98 = scmp.ne.s32.totalorder %s89, %s90
    %p99 = scmp.eq.s32.totalorder %s16, 0
    %p100 = por %p98, %p99
    %p101 = scmp.ne.s32.totalorder %s89, %s90
    %p102 = scmp.eq.s32.totalorder %s17, 1
    %p103 = por %p101, %p102
    %p105 = scmp.ne.s32.totalorder %s90, %s104
    %p106 = scmp.eq.s32.totalorder %s17, 0
    %p107 = por %p105, %p106
    %s109 = sadd.s32 %s108, 1
    %p112 = scmp.eq.s32.totalorder %s11, 1
    %p113 = scmp.ne.s32.totalorder %s108, %s110
    %p114 = scmp.eq.s32.totalorder %s11, 0
    %p115 = por %p113, %p114
    %p116 = scmp.ne.s32.totalorder %s108, %s110
    %p117 = scmp.eq.s32.totalorder %s16, 1
    %p118 = por %p116, %p117
    %p119 = scmp.ne.s32.totalorder %s110, %s111
    %p120 = scmp.eq.s32.totalorder %s16, 0
    %p121 = por %p119, %p120
    %p122 = scmp.ne.s32.totalorder %s110, %s111
    %p123 = scmp.eq.s32.totalorder %s17, 1
    %p124 = por %p122, %p123
    %p126 = scmp.ne.s32.totalorder %s111, %s125
    %p127 = scmp.eq.s32.totalorder %s17, 0
    %p128 = por %p126, %p127
    %s129 = ssub.s32 %s11, %s18
    %p130 = scmp.eq.s32.totalorder %s129, 0
    %s132 = sadd.s32 %s131, 1
    %s133 = scalar_select %p130, %s131, %s132
    %p136 = pneg %p130
    %p137 = scmp.eq.s32.totalorder %s11, 1
    %p138 = por %p136, %p137
    %p139 = scmp.ne.s32.totalorder %s131, %s134
    %p140 = scmp.eq.s32.totalorder %s11, 0
    %p141 = por %p139, %p140
    %p142 = scmp.ne.s32.totalorder %s131, %s134
    %p143 = scmp.eq.s32.totalorder %s16, 1
    %p144 = por %p142, %p143
    %p145 = scmp.ne.s32.totalorder %s134, %s135
    %p146 = scmp.eq.s32.totalorder %s16, 0
    %p147 = por %p145, %p146
    %p148 = scmp.ne.s32.totalorder %s134, %s135
    %p149 = scmp.eq.s32.totalorder %s17, 1
    %p150 = por %p148, %p149
    %p152 = scmp.ne.s32.totalorder %s135, %s151
    %p153 = scmp.eq.s32.totalorder %s17, 0
    %p154 = por %p152, %p153
    %p155 = scmp.le.s32.totalorder 1, %s11
    %p156 = scmp.lt.s32.totalorder %s11, 3
    %p157 = pnand %p155, %p156
    %p158 = pneg %p157
    // Predicated region
    $region9: #{_lambda_.15} parent=5 // pred_check
      _
    $region10: #{_lambda_.15} parent=5 // pred_check_branch
      %160 = sbr.rel (%p157) target = $region12
    $region11: #{_lambda_.15} parent=5 // pred_region
      %s161 = ssub.s32 %s11, 1
      // Predicated region
      $region13: #{_lambda_.15} parent=11 // pred_check
        %p162 = pneg %p58
      $region14: #{_lambda_.15} parent=11 // pred_check_branch
        %164 = sbr.rel (%p162) target = $region16
      $region15: #{_lambda_.15} parent=11 // pred_region
        _
      $region16: #{_lambda_.15} parent=11 // pred_fallthru
        _
      // Predicated region
      $region17: #{_lambda_.15} parent=11 // pred_check
        %p165 = pneg %p79
      $region18: #{_lambda_.15} parent=11 // pred_check_branch
        %167 = sbr.rel (%p165) target = $region20
      $region19: #{_lambda_.15} parent=11 // pred_region
        _
      $region20: #{_lambda_.15} parent=11 // pred_fallthru
        _
      // Predicated region
      $region21: #{_lambda_.15} parent=11 // pred_check
        %p168 = pneg %p100
      $region22: #{_lambda_.15} parent=11 // pred_check_branch
        %170 = sbr.rel (%p168) target = $region24
      $region23: #{_lambda_.15} parent=11 // pred_region
        _
      $region24: #{_lambda_.15} parent=11 // pred_fallthru
        _
      // Predicated region
      $region25: #{_lambda_.15} parent=11 // pred_check
        %p171 = pneg %p121
      $region26: #{_lambda_.15} parent=11 // pred_check_branch
        %173 = sbr.rel (%p171) target = $region28
      $region27: #{_lambda_.15} parent=11 // pred_region
        _
      $region28: #{_lambda_.15} parent=11 // pred_fallthru
        _
    $region12: #{_lambda_.15} parent=5 // pred_fallthru
      _
    %p174 = scmp.lt.s32.totalorder %s11, 2
    // Predicated region
    $region29: #{_lambda_.15} parent=5 // pred_check
      %p175 = pneg %p174
    $region30: #{_lambda_.15} parent=5 // pred_check_branch
      %177 = sbr.rel (%p175) target = $region32
    $region31: #{_lambda_.15} parent=5 // pred_region
      // Predicated region
      $region33: #{_lambda_.15} parent=31 // pred_check
        %p178 = pneg %p31
      $region34: #{_lambda_.15} parent=31 // pred_check_branch
        %180 = sbr.rel (%p178) target = $region36
      $region35: #{_lambda_.15} parent=31 // pred_region
        %p181 = scmp.lt.s32.totalorder %s11, 1
        %s182 = scalar_select %p181, %s11, 1
        %s183 = smul.addr %s182, 2
        %s184 = smul.addr %s183, 8
        %s185 = scalar_lea.vmem %s0, %s184
      $region36: #{_lambda_.15} parent=31 // pred_fallthru
        _
    $region32: #{_lambda_.15} parent=5 // pred_fallthru
      _
    %p186 = scmp.le.s32.totalorder 1, %s11
    %p187 = scmp.lt.s32.totalorder %s11, 3
    %p188 = pnand %p186, %p187
    %p189 = pneg %p188
    // Predicated region
    $region37: #{_lambda_.15} parent=5 // pred_check
      _
    $region38: #{_lambda_.15} parent=5 // pred_check_branch
      %191 = sbr.rel (%p188) target = $region40
    $region39: #{_lambda_.15} parent=5 // pred_region
      %s192 = ssub.s32 %s11, 1
      %p193 = scmp.lt.s32.totalorder %s16, 1
      %s194 = scalar_select %p193, %s16, 1
      %s195 = smul.addr %s194, 2
      %s196 = smul.addr %s195, 8
      %s197 = scalar_lea.vmem %s0, %s196
      %p198 = pneg %p37
      %p199 = pneg %p34
      %p200 = pneg %p58
      %p201 = pneg %p55
      %p202 = pneg %p79
      %p203 = pneg %p76
      %p204 = pneg %p100
      %p205 = pneg %p97
      %p206 = pneg %p121
      %p207 = pneg %p118
      %p208 = pneg %p147
      %p209 = pneg %p144
      %p210 = scmp.lt.s32.totalorder %s16, 1
      %s211 = scalar_select %p210, %s16, 1
      %s212 = smul.addr %s211, 2
      %s213 = smul.addr %s212, 8
      %s214 = scalar_lea.vmem %s5, %s213
      %p215 = scmp.lt.s32.totalorder %s16, 1
      %s216 = scalar_select %p215, %s16, 1
      %s217 = smul.addr %s216, 2
      %s218 = smul.addr %s217, 8
      %s219 = scalar_lea.vmem %s0, %s218
      %p220 = scmp.lt.s32.totalorder %s16, 1
      %s221 = scalar_select %p220, %s16, 1
      %s222 = smul.addr %s221, 2
      %s223 = smul.addr %s222, 8
      %s224 = scalar_lea.vmem %s5, %s223
      %v225 = vld [vmem:[%s219] sm:$0xff]
      %v226 = vld [vmem:[%s219 + $0x8] sm:$0x1]
      %vm227 = vcmask 261120
      %228 = vst.msk [vmem:[#allocation2] sm:$0xff] %vm227, 0.0
      %vm229 = vcmask 253952
      %230 = vst.msk [vmem:[#allocation2 + $0x8] sm:$0x1] %vm229, 0.0
      %v231 = vld [vmem:[%s1] sm:$0xff]
      %v232 = vld [vmem:[%s1 + $0x8] sm:$0xff]
      %v233 = vld [vmem:[%s1 + $0x10] sm:$0xff]
      %v234 = vld [vmem:[%s1 + $0x18] sm:$0xff]
      %v236 = vsel %vm227, %v225, 0
      %238 = vmatprep.subr.mxu0 0.0
      %239 = vmatpush1.msra.mxu0 0.0
      %240 = vmatprep.subr.mxu0 0.0
      %241 = vmatpush1.msra.mxu0 0.0
      %242 = vmatprep.subr.mxu0 0.0
      %243 = vmatpush1.msra.mxu0 0.0
      %244 = vmatprep.subr.mxu0 0.0
      %245 = vmatpush1.msra.mxu0 0.0
      %246 = vmatprep.subr.mxu0 0.0
      %247 = vmatpush1.msra.mxu0 0.0
      %248 = vmatprep.subr.mxu0 0.0
      %249 = vmatpush1.msra.mxu0 0.0
      %250 = vmatprep.subr.mxu0 0.0
      %251 = vmatpush1.msra.mxu0 0.0
      %252 = vmatprep.subr.mxu0 0.0
      %253 = vmatpush1.msra.mxu0 0.0
      %254 = vmatprep.subr.mxu0 0.0
      %255 = vmatpush1.msra.mxu0 0.0
      %256 = vmatprep.subr.mxu0 0.0
      %257 = vmatpush1.msra.mxu0 0.0
      %258 = vmatprep.subr.mxu0 0.0
      %259 = vmatpush1.msra.mxu0 0.0
      %260 = vmatprep.subr.mxu0 0.0
      %261 = vmatpush1.msra.mxu0 0.0
      %262 = vmatprep.subr.mxu0 0.0
      %263 = vmatpush1.msra.mxu0 %v234
      %264 = vmatprep.subr.mxu0 0.0
      %265 = vmatpush1.msra.mxu0 %v233
      %266 = vmatprep.subr.mxu0 0.0
      %267 = vmatpush1.msra.mxu0 %v232
      %268 = vmatprep.subr.mxu0 0.0
      %269 = vmatpush1.msra.mxu0 %v231
      %270 = vmatprep.subr.mxu0 0.0
      %271 = vmatpush2.msra.mxu0 0.0
      %272 = vmatprep.subr.mxu0 0.0
      %273 = vmatpush2.msra.mxu0 0.0
      %274 = vmatprep.subr.mxu0 0.0
      %275 = vmatpush2.msra.mxu0 0.0
      %276 = vmatprep.subr.mxu0 0.0
      %277 = vmatpush2.msra.mxu0 0.0
      %278 = vmatprep.subr.mxu0 0.0
      %279 = vmatpush2.msra.mxu0 0.0
      %280 = vmatprep.subr.mxu0 0.0
      %281 = vmatpush2.msra.mxu0 0.0
      %282 = vmatprep.subr.mxu0 0.0
      %283 = vmatpush2.msra.mxu0 0.0
      %284 = vmatprep.subr.mxu0 0.0
      %285 = vmatpush2.msra.mxu0 0.0
      %286 = vmatprep.subr.mxu0 0.0
      %287 = vmatpush2.msra.mxu0 0.0
      %288 = vmatprep.subr.mxu0 0.0
      %289 = vmatpush2.msra.mxu0 0.0
      %290 = vmatprep.subr.mxu0 0.0
      %291 = vmatpush2.msra.mxu0 0.0
      %292 = vmatprep.subr.mxu0 0.0
      %293 = vmatpush2.msra.mxu0 0.0
      %294 = vmatprep.subr.mxu0 0.0
      %295 = vmatpush2.msra.mxu0 0.0
      %296 = vmatprep.subr.mxu0 0.0
      %297 = vmatpush2.msra.mxu0 0.0
      %298 = vmatprep.subr.mxu0 0.0
      %299 = vmatpush2.msra.mxu0 0.0
      %300 = vmatprep.subr.mxu0 0.0
      %301 = vmatpush2.msra.mxu0 0.0
      %302 = vmatprep.mubr.f32.mxu0 0.0
      %303 = vmatmul.mubr.f32.gmra.mxu0 %v236
      %v304 = vpop.f32.mrf.mxu0
      %v305 = vadd.f32 0.0, %v304
      %v306 = vpop.f32.mrf.mxu0
      %307 = vdwg.mxu0
      %v308 = vld [vmem:[#allocation2 + $0x8] sm:$0x1]
      %v309 = vadd.f32 %v308, %v305
      %310 = vst.msk [vmem:[#allocation2 + $0x8] sm:$0x1] %vm229, %v309
      %s311 = scalar_lea.vmem %s1, 32
      %v312 = vld [vmem:[%s311] sm:$0xff]
      %v313 = vld [vmem:[%s311 + $0x8] sm:$0xff]
      %v314 = vld [vmem:[%s311 + $0x10] sm:$0xff]
      %v315 = vld [vmem:[%s311 + $0x18] sm:$0xff]
      %316 = vmatprep.subr.mxu0 0.0
      %317 = vmatpush1.msra.mxu0 0.0
      %318 = vmatprep.subr.mxu0 0.0
      %319 = vmatpush1.msra.mxu0 0.0
      %320 = vmatprep.subr.mxu0 0.0
      %321 = vmatpush1.msra.mxu0 0.0
      %322 = vmatprep.subr.mxu0 0.0
      %323 = vmatpush1.msra.mxu0 0.0
      %324 = vmatprep.subr.mxu0 0.0
      %325 = vmatpush1.msra.mxu0 0.0
      %326 = vmatprep.subr.mxu0 0.0
      %327 = vmatpush1.msra.mxu0 0.0
      %328 = vmatprep.subr.mxu0 0.0
      %329 = vmatpush1.msra.mxu0 0.0
      %330 = vmatprep.subr.mxu0 0.0
      %331 = vmatpush1.msra.mxu0 0.0
      %332 = vmatprep.subr.mxu0 0.0
      %333 = vmatpush1.msra.mxu0 0.0
      %334 = vmatprep.subr.mxu0 0.0
      %335 = vmatpush1.msra.mxu0 0.0
      %336 = vmatprep.subr.mxu0 0.0
      %337 = vmatpush1.msra.mxu0 0.0
      %338 = vmatprep.subr.mxu0 0.0
      %339 = vmatpush1.msra.mxu0 0.0
      %340 = vmatprep.subr.mxu0 0.0
      %341 = vmatpush1.msra.mxu0 %v315
      %342 = vmatprep.subr.mxu0 0.0
      %343 = vmatpush1.msra.mxu0 %v314
      %344 = vmatprep.subr.mxu0 0.0
      %345 = vmatpush1.msra.mxu0 %v313
      %346 = vmatprep.subr.mxu0 0.0
      %347 = vmatpush1.msra.mxu0 %v312
      %348 = vmatprep.subr.mxu0 0.0
      %349 = vmatpush2.msra.mxu0 0.0
      %350 = vmatprep.subr.mxu0 0.0
      %351 = vmatpush2.msra.mxu0 0.0
      %352 = vmatprep.subr.mxu0 0.0
      %353 = vmatpush2.msra.mxu0 0.0
      %354 = vmatprep.subr.mxu0 0.0
      %355 = vmatpush2.msra.mxu0 0.0
      %356 = vmatprep.subr.mxu0 0.0
      %357 = vmatpush2.msra.mxu0 0.0
      %358 = vmatprep.subr.mxu0 0.0
      %359 = vmatpush2.msra.mxu0 0.0
      %360 = vmatprep.subr.mxu0 0.0
      %361 = vmatpush2.msra.mxu0 0.0
      %362 = vmatprep.subr.mxu0 0.0
      %363 = vmatpush2.msra.mxu0 0.0
      %364 = vmatprep.subr.mxu0 0.0
      %365 = vmatpush2.msra.mxu0 0.0
      %366 = vmatprep.subr.mxu0 0.0
      %367 = vmatpush2.msra.mxu0 0.0
      %368 = vmatprep.subr.mxu0 0.0
      %369 = vmatpush2.msra.mxu0 0.0
      %370 = vmatprep.subr.mxu0 0.0
      %371 = vmatpush2.msra.mxu0 0.0
      %372 = vmatprep.subr.mxu0 0.0
      %373 = vmatpush2.msra.mxu0 0.0
      %374 = vmatprep.subr.mxu0 0.0
      %375 = vmatpush2.msra.mxu0 0.0
      %376 = vmatprep.subr.mxu0 0.0
      %377 = vmatpush2.msra.mxu0 0.0
      %378 = vmatprep.subr.mxu0 0.0
      %379 = vmatpush2.msra.mxu0 0.0
      %380 = vmatprep.mubr.f32.mxu0 0.0
      %381 = vmatmul.mubr.f32.gmra.mxu0 %v236
      %v382 = vpop.f32.mrf.mxu0
      %v383 = vadd.f32 0.0, %v382
      %v384 = vpop.f32.mrf.mxu0
      %385 = vdwg.mxu0
      %v386 = vld [vmem:[#allocation2 + $0x7] sm:$0x3]
      %v387 = vadd.f32 %v386, %v383
      %vm388 = vcmask 254976
      %389 = vst.msk [vmem:[#allocation2 + $0x7] sm:$0x3] %vm388, %v387
      %s390 = scalar_lea.vmem %s1, 64
      %v391 = vld [vmem:[%s390] sm:$0xff]
      %v392 = vld [vmem:[%s390 + $0x8] sm:$0xff]
      %v393 = vld [vmem:[%s390 + $0x10] sm:$0xff]
      %v394 = vld [vmem:[%s390 + $0x18] sm:$0xff]
      %395 = vmatprep.subr.mxu0 0.0
      %396 = vmatpush1.msra.mxu0 0.0
      %397 = vmatprep.subr.mxu0 0.0
      %398 = vmatpush1.msra.mxu0 0.0
      %399 = vmatprep.subr.mxu0 0.0
      %400 = vmatpush1.msra.mxu0 0.0
      %401 = vmatprep.subr.mxu0 0.0
      %402 = vmatpush1.msra.mxu0 0.0
      %403 = vmatprep.subr.mxu0 0.0
      %404 = vmatpush1.msra.mxu0 0.0
      %405 = vmatprep.subr.mxu0 0.0
      %406 = vmatpush1.msra.mxu0 0.0
      %407 = vmatprep.subr.mxu0 0.0
      %408 = vmatpush1.msra.mxu0 0.0
      %409 = vmatprep.subr.mxu0 0.0
      %410 = vmatpush1.msra.mxu0 0.0
      %411 = vmatprep.subr.mxu0 0.0
      %412 = vmatpush1.msra.mxu0 0.0
      %413 = vmatprep.subr.mxu0 0.0
      %414 = vmatpush1.msra.mxu0 0.0
      %415 = vmatprep.subr.mxu0 0.0
      %416 = vmatpush1.msra.mxu0 0.0
      %417 = vmatprep.subr.mxu0 0.0
      %418 = vmatpush1.msra.mxu0 0.0
      %419 = vmatprep.subr.mxu0 0.0
      %420 = vmatpush1.msra.mxu0 %v394
      %421 = vmatprep.subr.mxu0 0.0
      %422 = vmatpush1.msra.mxu0 %v393
      %423 = vmatprep.subr.mxu0 0.0
      %424 = vmatpush1.msra.mxu0 %v392
      %425 = vmatprep.subr.mxu0 0.0
      %426 = vmatpush1.msra.mxu0 %v391
      %427 = vmatprep.subr.mxu0 0.0
      %428 = vmatpush2.msra.mxu0 0.0
      %429 = vmatprep.subr.mxu0 0.0
      %430 = vmatpush2.msra.mxu0 0.0
      %431 = vmatprep.subr.mxu0 0.0
      %432 = vmatpush2.msra.mxu0 0.0
      %433 = vmatprep.subr.mxu0 0.0
      %434 = vmatpush2.msra.mxu0 0.0
      %435 = vmatprep.subr.mxu0 0.0
      %436 = vmatpush2.msra.mxu0 0.0
      %437 = vmatprep.subr.mxu0 0.0
      %438 = vmatpush2.msra.mxu0 0.0
      %439 = vmatprep.subr.mxu0 0.0
      %440 = vmatpush2.msra.mxu0 0.0
      %441 = vmatprep.subr.mxu0 0.0
      %442 = vmatpush2.msra.mxu0 0.0
      %443 = vmatprep.subr.mxu0 0.0
      %444 = vmatpush2.msra.mxu0 0.0
      %445 = vmatprep.subr.mxu0 0.0
      %446 = vmatpush2.msra.mxu0 0.0
      %447 = vmatprep.subr.mxu0 0.0
      %448 = vmatpush2.msra.mxu0 0.0
      %449 = vmatprep.subr.mxu0 0.0
      %450 = vmatpush2.msra.mxu0 0.0
      %451 = vmatprep.subr.mxu0 0.0
      %452 = vmatpush2.msra.mxu0 0.0
      %453 = vmatprep.subr.mxu0 0.0
      %454 = vmatpush2.msra.mxu0 0.0
      %455 = vmatprep.subr.mxu0 0.0
      %456 = vmatpush2.msra.mxu0 0.0
      %457 = vmatprep.subr.mxu0 0.0
      %458 = vmatpush2.msra.mxu0 0.0
      %459 = vmatprep.mubr.f32.mxu0 0.0
      %460 = vmatmul.mubr.f32.gmra.mxu0 %v236
      %v461 = vpop.f32.mrf.mxu0
      %v462 = vadd.f32 0.0, %v461
      %v463 = vpop.f32.mrf.mxu0
      %464 = vdwg.mxu0
      %v465 = vld [vmem:[#allocation2 + $0x6] sm:$0x7]
      %v466 = vadd.f32 %v465, %v462
      %vm467 = vcmask 256000
      %468 = vst.msk [vmem:[#allocation2 + $0x6] sm:$0x7] %vm467, %v466
      %s469 = scalar_lea.vmem %s1, 96
      %v470 = vld [vmem:[%s469] sm:$0xff]
      %v471 = vld [vmem:[%s469 + $0x8] sm:$0xff]
      %v472 = vld [vmem:[%s469 + $0x10] sm:$0xff]
      %v473 = vld [vmem:[%s469 + $0x18] sm:$0xff]
      %474 = vmatprep.subr.mxu0 0.0
      %475 = vmatpush1.msra.mxu0 0.0
      %476 = vmatprep.subr.mxu0 0.0
      %477 = vmatpush1.msra.mxu0 0.0
      %478 = vmatprep.subr.mxu0 0.0
      %479 = vmatpush1.msra.mxu0 0.0
      %480 = vmatprep.subr.mxu0 0.0
      %481 = vmatpush1.msra.mxu0 0.0
      %482 = vmatprep.subr.mxu0 0.0
      %483 = vmatpush1.msra.mxu0 0.0
      %484 = vmatprep.subr.mxu0 0.0
      %485 = vmatpush1.msra.mxu0 0.0
      %486 = vmatprep.subr.mxu0 0.0
      %487 = vmatpush1.msra.mxu0 0.0
      %488 = vmatprep.subr.mxu0 0.0
      %489 = vmatpush1.msra.mxu0 0.0
      %490 = vmatprep.subr.mxu0 0.0
      %491 = vmatpush1.msra.mxu0 0.0
      %492 = vmatprep.subr.mxu0 0.0
      %493 = vmatpush1.msra.mxu0 0.0
      %494 = vmatprep.subr.mxu0 0.0
      %495 = vmatpush1.msra.mxu0 0.0
      %496 = vmatprep.subr.mxu0 0.0
      %497 = vmatpush1.msra.mxu0 0.0
      %498 = vmatprep.subr.mxu0 0.0
      %499 = vmatpush1.msra.mxu0 %v473
      %500 = vmatprep.subr.mxu0 0.0
      %501 = vmatpush1.msra.mxu0 %v472
      %502 = vmatprep.subr.mxu0 0.0
      %503 = vmatpush1.msra.mxu0 %v471
      %504 = vmatprep.subr.mxu0 0.0
      %505 = vmatpush1.msra.mxu0 %v470
      %506 = vmatprep.subr.mxu0 0.0
      %507 = vmatpush2.msra.mxu0 0.0
      %508 = vmatprep.subr.mxu0 0.0
      %509 = vmatpush2.msra.mxu0 0.0
      %510 = vmatprep.subr.mxu0 0.0
      %511 = vmatpush2.msra.mxu0 0.0
      %512 = vmatprep.subr.mxu0 0.0
      %513 = vmatpush2.msra.mxu0 0.0
      %514 = vmatprep.subr.mxu0 0.0
      %515 = vmatpush2.msra.mxu0 0.0
      %516 = vmatprep.subr.mxu0 0.0
      %517 = vmatpush2.msra.mxu0 0.0
      %518 = vmatprep.subr.mxu0 0.0
      %519 = vmatpush2.msra.mxu0 0.0
      %520 = vmatprep.subr.mxu0 0.0
      %521 = vmatpush2.msra.mxu0 0.0
      %522 = vmatprep.subr.mxu0 0.0
      %523 = vmatpush2.msra.mxu0 0.0
      %524 = vmatprep.subr.mxu0 0.0
      %525 = vmatpush2.msra.mxu0 0.0
      %526 = vmatprep.subr.mxu0 0.0
      %527 = vmatpush2.msra.mxu0 0.0
      %528 = vmatprep.subr.mxu0 0.0
      %529 = vmatpush2.msra.mxu0 0.0
      %530 = vmatprep.subr.mxu0 0.0
      %531 = vmatpush2.msra.mxu0 0.0
      %532 = vmatprep.subr.mxu0 0.0
      %533 = vmatpush2.msra.mxu0 0.0
      %534 = vmatprep.subr.mxu0 0.0
      %535 = vmatpush2.msra.mxu0 0.0
      %536 = vmatprep.subr.mxu0 0.0
      %537 = vmatpush2.msra.mxu0 0.0
      %538 = vmatprep.mubr.f32.mxu0 0.0
      %539 = vmatmul.mubr.f32.gmra.mxu0 %v236
      %v540 = vpop.f32.mrf.mxu0
      %v541 = vadd.f32 0.0, %v540
      %v542 = vpop.f32.mrf.mxu0
      %543 = vdwg.mxu0
      %v544 = vld [vmem:[#allocation2 + $0x5] sm:$0xf]
      %v545 = vadd.f32 %v544, %v541
      %vm546 = vcmask 257024
      %547 = vst.msk [vmem:[#allocation2 + $0x5] sm:$0xf] %vm546, %v545
      %s548 = scalar_lea.vmem %s1, 128
      %v549 = vld [vmem:[%s548] sm:$0xff]
      %v550 = vld [vmem:[%s548 + $0x8] sm:$0xff]
      %v551 = vld [vmem:[%s548 + $0x10] sm:$0xff]
      %v552 = vld [vmem:[%s548 + $0x18] sm:$0xff]
      %553 = vmatprep.subr.mxu0 0.0
      %554 = vmatpush1.msra.mxu0 0.0
      %555 = vmatprep.subr.mxu0 0.0
      %556 = vmatpush1.msra.mxu0 0.0
      %557 = vmatprep.subr.mxu0 0.0
      %558 = vmatpush1.msra.mxu0 0.0
      %559 = vmatprep.subr.mxu0 0.0
      %560 = vmatpush1.msra.mxu0 0.0
      %561 = vmatprep.subr.mxu0 0.0
      %562 = vmatpush1.msra.mxu0 0.0
      %563 = vmatprep.subr.mxu0 0.0
      %564 = vmatpush1.msra.mxu0 0.0
      %565 = vmatprep.subr.mxu0 0.0
      %566 = vmatpush1.msra.mxu0 0.0
      %567 = vmatprep.subr.mxu0 0.0
      %568 = vmatpush1.msra.mxu0 0.0
      %569 = vmatprep.subr.mxu0 0.0
      %570 = vmatpush1.msra.mxu0 0.0
      %571 = vmatprep.subr.mxu0 0.0
      %572 = vmatpush1.msra.mxu0 0.0
      %573 = vmatprep.subr.mxu0 0.0
      %574 = vmatpush1.msra.mxu0 0.0
      %575 = vmatprep.subr.mxu0 0.0
      %576 = vmatpush1.msra.mxu0 0.0
      %577 = vmatprep.subr.mxu0 0.0
      %578 = vmatpush1.msra.mxu0 %v552
      %579 = vmatprep.subr.mxu0 0.0
      %580 = vmatpush1.msra.mxu0 %v551
      %581 = vmatprep.subr.mxu0 0.0
      %582 = vmatpush1.msra.mxu0 %v550
      %583 = vmatprep.subr.mxu0 0.0
      %584 = vmatpush1.msra.mxu0 %v549
      %585 = vmatprep.subr.mxu0 0.0
      %586 = vmatpush2.msra.mxu0 0.0
      %587 = vmatprep.subr.mxu0 0.0
      %588 = vmatpush2.msra.mxu0 0.0
      %589 = vmatprep.subr.mxu0 0.0
      %590 = vmatpush2.msra.mxu0 0.0
      %591 = vmatprep.subr.mxu0 0.0
      %592 = vmatpush2.msra.mxu0 0.0
      %593 = vmatprep.subr.mxu0 0.0
      %594 = vmatpush2.msra.mxu0 0.0
      %595 = vmatprep.subr.mxu0 0.0
      %596 = vmatpush2.msra.mxu0 0.0
      %597 = vmatprep.subr.mxu0 0.0
      %598 = vmatpush2.msra.mxu0 0.0
      %599 = vmatprep.subr.mxu0 0.0
      %600 = vmatpush2.msra.mxu0 0.0
      %601 = vmatprep.subr.mxu0 0.0
      %602 = vmatpush2.msra.mxu0 0.0
      %603 = vmatprep.subr.mxu0 0.0
      %604 = vmatpush2.msra.mxu0 0.0
      %605 = vmatprep.subr.mxu0 0.0
      %606 = vmatpush2.msra.mxu0 0.0
      %607 = vmatprep.subr.mxu0 0.0
      %608 = vmatpush2.msra.mxu0 0.0
      %609 = vmatprep.subr.mxu0 0.0
      %610 = vmatpush2.msra.mxu0 0.0
      %611 = vmatprep.subr.mxu0 0.0
      %612 = vmatpush2.msra.mxu0 0.0
      %613 = vmatprep.subr.mxu0 0.0
      %614 = vmatpush2.msra.mxu0 0.0
      %615 = vmatprep.subr.mxu0 0.0
      %616 = vmatpush2.msra.mxu0 0.0
      %617 = vmatprep.mubr.f32.mxu0 0.0
      %618 = vmatmul.mubr.f32.gmra.mxu0 %v236
      %v619 = vpop.f32.mrf.mxu0
      %v620 = vadd.f32 0.0, %v619
      %v621 = vpop.f32.mrf.mxu0
      %622 = vdwg.mxu0
      %v623 = vld [vmem:[#allocation2 + $0x4] sm:$0x1f]
      %v624 = vadd.f32 %v623, %v620
      %vm625 = vcmask 258048
      %626 = vst.msk [vmem:[#allocation2 + $0x4] sm:$0x1f] %vm625, %v624
      %s627 = scalar_lea.vmem %s1, 160
      %v628 = vld [vmem:[%s627] sm:$0xff]
      %v629 = vld [vmem:[%s627 + $0x8] sm:$0xff]
      %v630 = vld [vmem:[%s627 + $0x10] sm:$0xff]
      %v631 = vld [vmem:[%s627 + $0x18] sm:$0xff]
      %632 = vmatprep.subr.mxu0 0.0
      %633 = vmatpush1.msra.mxu0 0.0
      %634 = vmatprep.subr.mxu0 0.0
      %635 = vmatpush1.msra.mxu0 0.0
      %636 = vmatprep.subr.mxu0 0.0
      %637 = vmatpush1.msra.mxu0 0.0
      %638 = vmatprep.subr.mxu0 0.0
      %639 = vmatpush1.msra.mxu0 0.0
      %640 = vmatprep.subr.mxu0 0.0
      %641 = vmatpush1.msra.mxu0 0.0
      %642 = vmatprep.subr.mxu0 0.0
      %643 = vmatpush1.msra.mxu0 0.0
      %644 = vmatprep.subr.mxu0 0.0
      %645 = vmatpush1.msra.mxu0 0.0
      %646 = vmatprep.subr.mxu0 0.0
      %647 = vmatpush1.msra.mxu0 0.0
      %648 = vmatprep.subr.mxu0 0.0
      %649 = vmatpush1.msra.mxu0 0.0
      %650 = vmatprep.subr.mxu0 0.0
      %651 = vmatpush1.msra.mxu0 0.0
      %652 = vmatprep.subr.mxu0 0.0
      %653 = vmatpush1.msra.mxu0 0.0
      %654 = vmatprep.subr.mxu0 0.0
      %655 = vmatpush1.msra.mxu0 0.0
      %656 = vmatprep.subr.mxu0 0.0
      %657 = vmatpush1.msra.mxu0 %v631
      %658 = vmatprep.subr.mxu0 0.0
      %659 = vmatpush1.msra.mxu0 %v630
      %660 = vmatprep.subr.mxu0 0.0
      %661 = vmatpush1.msra.mxu0 %v629
      %662 = vmatprep.subr.mxu0 0.0
      %663 = vmatpush1.msra.mxu0 %v628
      %664 = vmatprep.subr.mxu0 0.0
      %665 = vmatpush2.msra.mxu0 0.0
      %666 = vmatprep.subr.mxu0 0.0
      %667 = vmatpush2.msra.mxu0 0.0
      %668 = vmatprep.subr.mxu0 0.0
      %669 = vmatpush2.msra.mxu0 0.0
      %670 = vmatprep.subr.mxu0 0.0
      %671 = vmatpush2.msra.mxu0 0.0
      %672 = vmatprep.subr.mxu0 0.0
      %673 = vmatpush2.msra.mxu0 0.0
      %674 = vmatprep.subr.mxu0 0.0
      %675 = vmatpush2.msra.mxu0 0.0
      %676 = vmatprep.subr.mxu0 0.0
      %677 = vmatpush2.msra.mxu0 0.0
      %678 = vmatprep.subr.mxu0 0.0
      %679 = vmatpush2.msra.mxu0 0.0
      %680 = vmatprep.subr.mxu0 0.0
      %681 = vmatpush2.msra.mxu0 0.0
      %682 = vmatprep.subr.mxu0 0.0
      %683 = vmatpush2.msra.mxu0 0.0
      %684 = vmatprep.subr.mxu0 0.0
      %685 = vmatpush2.msra.mxu0 0.0
      %686 = vmatprep.subr.mxu0 0.0
      %687 = vmatpush2.msra.mxu0 0.0
      %688 = vmatprep.subr.mxu0 0.0
      %689 = vmatpush2.msra.mxu0 0.0
      %690 = vmatprep.subr.mxu0 0.0
      %691 = vmatpush2.msra.mxu0 0.0
      %692 = vmatprep.subr.mxu0 0.0
      %693 = vmatpush2.msra.mxu0 0.0
      %694 = vmatprep.subr.mxu0 0.0
      %695 = vmatpush2.msra.mxu0 0.0
      %696 = vmatprep.mubr.f32.mxu0 0.0
      %697 = vmatmul.mubr.f32.gmra.mxu0 %v236
      %v698 = vpop.f32.mrf.mxu0
      %v699 = vadd.f32 0.0, %v698
      %v700 = vpop.f32.mrf.mxu0
      %701 = vdwg.mxu0
      %v702 = vld [vmem:[#allocation2 + $0x3] sm:$0x3f]
      %v703 = vadd.f32 %v702, %v699
      %vm704 = vcmask 259072
      %705 = vst.msk [vmem:[#allocation2 + $0x3] sm:$0x3f] %vm704, %v703
      %s706 = scalar_lea.vmem %s1, 192
      %v707 = vld [vmem:[%s706] sm:$0xff]
      %v708 = vld [vmem:[%s706 + $0x8] sm:$0xff]
      %v709 = vld [vmem:[%s706 + $0x10] sm:$0xff]
      %v710 = vld [vmem:[%s706 + $0x18] sm:$0xff]
      %711 = vmatprep.subr.mxu0 0.0
      %712 = vmatpush1.msra.mxu0 0.0
      %713 = vmatprep.subr.mxu0 0.0
      %714 = vmatpush1.msra.mxu0 0.0
      %715 = vmatprep.subr.mxu0 0.0
      %716 = vmatpush1.msra.mxu0 0.0
      %717 = vmatprep.subr.mxu0 0.0
      %718 = vmatpush1.msra.mxu0 0.0
      %719 = vmatprep.subr.mxu0 0.0
      %720 = vmatpush1.msra.mxu0 0.0
      %721 = vmatprep.subr.mxu0 0.0
      %722 = vmatpush1.msra.mxu0 0.0
      %723 = vmatprep.subr.mxu0 0.0
      %724 = vmatpush1.msra.mxu0 0.0
      %725 = vmatprep.subr.mxu0 0.0
      %726 = vmatpush1.msra.mxu0 0.0
      %727 = vmatprep.subr.mxu0 0.0
      %728 = vmatpush1.msra.mxu0 0.0
      %729 = vmatprep.subr.mxu0 0.0
      %730 = vmatpush1.msra.mxu0 0.0
      %731 = vmatprep.subr.mxu0 0.0
      %732 = vmatpush1.msra.mxu0 0.0
      %733 = vmatprep.subr.mxu0 0.0
      %734 = vmatpush1.msra.mxu0 0.0
      %735 = vmatprep.subr.mxu0 0.0
      %736 = vmatpush1.msra.mxu0 %v710
      %737 = vmatprep.subr.mxu0 0.0
      %738 = vmatpush1.msra.mxu0 %v709
      %739 = vmatprep.subr.mxu0 0.0
      %740 = vmatpush1.msra.mxu0 %v708
      %741 = vmatprep.subr.mxu0 0.0
      %742 = vmatpush1.msra.mxu0 %v707
      %743 = vmatprep.subr.mxu0 0.0
      %744 = vmatpush2.msra.mxu0 0.0
      %745 = vmatprep.subr.mxu0 0.0
      %746 = vmatpush2.msra.mxu0 0.0
      %747 = vmatprep.subr.mxu0 0.0
      %748 = vmatpush2.msra.mxu0 0.0
      %749 = vmatprep.subr.mxu0 0.0
      %750 = vmatpush2.msra.mxu0 0.0
      %751 = vmatprep.subr.mxu0 0.0
      %752 = vmatpush2.msra.mxu0 0.0
      %753 = vmatprep.subr.mxu0 0.0
      %754 = vmatpush2.msra.mxu0 0.0
      %755 = vmatprep.subr.mxu0 0.0
      %756 = vmatpush2.msra.mxu0 0.0
      %757 = vmatprep.subr.mxu0 0.0
      %758 = vmatpush2.msra.mxu0 0.0
      %759 = vmatprep.subr.mxu0 0.0
      %760 = vmatpush2.msra.mxu0 0.0
      %761 = vmatprep.subr.mxu0 0.0
      %762 = vmatpush2.msra.mxu0 0.0
      %763 = vmatprep.subr.mxu0 0.0
      %764 = vmatpush2.msra.mxu0 0.0
      %765 = vmatprep.subr.mxu0 0.0
      %766 = vmatpush2.msra.mxu0 0.0
      %767 = vmatprep.subr.mxu0 0.0
      %768 = vmatpush2.msra.mxu0 0.0
      %769 = vmatprep.subr.mxu0 0.0
      %770 = vmatpush2.msra.mxu0 0.0
      %771 = vmatprep.subr.mxu0 0.0
      %772 = vmatpush2.msra.mxu0 0.0
      %773 = vmatprep.subr.mxu0 0.0
      %774 = vmatpush2.msra.mxu0 0.0
      %775 = vmatprep.mubr.f32.mxu0 0.0
      %776 = vmatmul.mubr.f32.gmra.mxu0 %v236
      %v777 = vpop.f32.mrf.mxu0
      %v778 = vadd.f32 0.0, %v777
      %v779 = vpop.f32.mrf.mxu0
      %780 = vdwg.mxu0
      %v781 = vld [vmem:[#allocation2 + $0x2] sm:$0x7f]
      %v782 = vadd.f32 %v781, %v778
      %vm783 = vcmask 260096
      %784 = vst.msk [vmem:[#allocation2 + $0x2] sm:$0x7f] %vm783, %v782
      %s785 = scalar_lea.vmem %s1, 224
      %v786 = vld [vmem:[%s785] sm:$0xff]
      %v787 = vld [vmem:[%s785 + $0x8] sm:$0xff]
      %v788 = vld [vmem:[%s785 + $0x10] sm:$0xff]
      %v789 = vld [vmem:[%s785 + $0x18] sm:$0xff]
      %790 = vmatprep.subr.mxu0 0.0
      %791 = vmatpush1.msra.mxu0 0.0
      %792 = vmatprep.subr.mxu0 0.0
      %793 = vmatpush1.msra.mxu0 0.0
      %794 = vmatprep.subr.mxu0 0.0
      %795 = vmatpush1.msra.mxu0 0.0
      %796 = vmatprep.subr.mxu0 0.0
      %797 = vmatpush1.msra.mxu0 0.0
      %798 = vmatprep.subr.mxu0 0.0
      %799 = vmatpush1.msra.mxu0 0.0
      %800 = vmatprep.subr.mxu0 0.0
      %801 = vmatpush1.msra.mxu0 0.0
      %802 = vmatprep.subr.mxu0 0.0
      %803 = vmatpush1.msra.mxu0 0.0
      %804 = vmatprep.subr.mxu0 0.0
      %805 = vmatpush1.msra.mxu0 0.0
      %806 = vmatprep.subr.mxu0 0.0
      %807 = vmatpush1.msra.mxu0 0.0
      %808 = vmatprep.subr.mxu0 0.0
      %809 = vmatpush1.msra.mxu0 0.0
      %810 = vmatprep.subr.mxu0 0.0
      %811 = vmatpush1.msra.mxu0 0.0
      %812 = vmatprep.subr.mxu0 0.0
      %813 = vmatpush1.msra.mxu0 0.0
      %814 = vmatprep.subr.mxu0 0.0
      %815 = vmatpush1.msra.mxu0 %v789
      %816 = vmatprep.subr.mxu0 0.0
      %817 = vmatpush1.msra.mxu0 %v788
      %818 = vmatprep.subr.mxu0 0.0
      %819 = vmatpush1.msra.mxu0 %v787
      %820 = vmatprep.subr.mxu0 0.0
      %821 = vmatpush1.msra.mxu0 %v786
      %822 = vmatprep.subr.mxu0 0.0
      %823 = vmatpush2.msra.mxu0 0.0
      %824 = vmatprep.subr.mxu0 0.0
      %825 = vmatpush2.msra.mxu0 0.0
      %826 = vmatprep.subr.mxu0 0.0
      %827 = vmatpush2.msra.mxu0 0.0
      %828 = vmatprep.subr.mxu0 0.0
      %829 = vmatpush2.msra.mxu0 0.0
      %830 = vmatprep.subr.mxu0 0.0
      %831 = vmatpush2.msra.mxu0 0.0
      %832 = vmatprep.subr.mxu0 0.0
      %833 = vmatpush2.msra.mxu0 0.0
      %834 = vmatprep.subr.mxu0 0.0
      %835 = vmatpush2.msra.mxu0 0.0
      %836 = vmatprep.subr.mxu0 0.0
      %837 = vmatpush2.msra.mxu0 0.0
      %838 = vmatprep.subr.mxu0 0.0
      %839 = vmatpush2.msra.mxu0 0.0
      %840 = vmatprep.subr.mxu0 0.0
      %841 = vmatpush2.msra.mxu0 0.0
      %842 = vmatprep.subr.mxu0 0.0
      %843 = vmatpush2.msra.mxu0 0.0
      %844 = vmatprep.subr.mxu0 0.0
      %845 = vmatpush2.msra.mxu0 0.0
      %846 = vmatprep.subr.mxu0 0.0
      %847 = vmatpush2.msra.mxu0 0.0
      %848 = vmatprep.subr.mxu0 0.0
      %849 = vmatpush2.msra.mxu0 0.0
      %850 = vmatprep.subr.mxu0 0.0
      %851 = vmatpush2.msra.mxu0 0.0
      %852 = vmatprep.subr.mxu0 0.0
      %853 = vmatpush2.msra.mxu0 0.0
      %854 = vmatprep.mubr.f32.mxu0 0.0
      %855 = vmatmul.mubr.f32.gmra.mxu0 %v236
      %v856 = vpop.f32.mrf.mxu0
      %v857 = vadd.f32 0.0, %v856
      %v858 = vpop.f32.mrf.mxu0
      %859 = vdwg.mxu0
      %v860 = vld [vmem:[#allocation2 + $0x1] sm:$0xff]
      %v861 = vadd.f32 %v860, %v857
      %862 = vst.msk [vmem:[#allocation2 + $0x1] sm:$0xff] %vm227, %v861
      %s863 = scalar_lea.vmem %s1, 256
      %v864 = vld [vmem:[%s863] sm:$0xff]
      %v865 = vld [vmem:[%s863 + $0x8] sm:$0xff]
      %v866 = vld [vmem:[%s863 + $0x10] sm:$0xff]
      %v867 = vld [vmem:[%s863 + $0x18] sm:$0xff]
      %v869 = vsel %vm227, %v226, 0
      %871 = vmatprep.subr.mxu0 0.0
      %872 = vmatpush1.msra.mxu0 0.0
      %873 = vmatprep.subr.mxu0 0.0
      %874 = vmatpush1.msra.mxu0 0.0
      %875 = vmatprep.subr.mxu0 0.0
      %876 = vmatpush1.msra.mxu0 0.0
      %877 = vmatprep.subr.mxu0 0.0
      %878 = vmatpush1.msra.mxu0 0.0
      %879 = vmatprep.subr.mxu0 0.0
      %880 = vmatpush1.msra.mxu0 0.0
      %881 = vmatprep.subr.mxu0 0.0
      %882 = vmatpush1.msra.mxu0 0.0
      %883 = vmatprep.subr.mxu0 0.0
      %884 = vmatpush1.msra.mxu0 0.0
      %885 = vmatprep.subr.mxu0 0.0
      %886 = vmatpush1.msra.mxu0 0.0
      %887 = vmatprep.subr.mxu0 0.0
      %888 = vmatpush1.msra.mxu0 0.0
      %889 = vmatprep.subr.mxu0 0.0
      %890 = vmatpush1.msra.mxu0 0.0
      %891 = vmatprep.subr.mxu0 0.0
      %892 = vmatpush1.msra.mxu0 0.0
      %893 = vmatprep.subr.mxu0 0.0
      %894 = vmatpush1.msra.mxu0 0.0
      %895 = vmatprep.subr.mxu0 0.0
      %896 = vmatpush1.msra.mxu0 %v867
      %897 = vmatprep.subr.mxu0 0.0
      %898 = vmatpush1.msra.mxu0 %v866
      %899 = vmatprep.subr.mxu0 0.0
      %900 = vmatpush1.msra.mxu0 %v865
      %901 = vmatprep.subr.mxu0 0.0
      %902 = vmatpush1.msra.mxu0 %v864
      %903 = vmatprep.subr.mxu0 0.0
      %904 = vmatpush2.msra.mxu0 0.0
      %905 = vmatprep.subr.mxu0 0.0
      %906 = vmatpush2.msra.mxu0 0.0
      %907 = vmatprep.subr.mxu0 0.0
      %908 = vmatpush2.msra.mxu0 0.0
      %909 = vmatprep.subr.mxu0 0.0
      %910 = vmatpush2.msra.mxu0 0.0
      %911 = vmatprep.subr.mxu0 0.0
      %912 = vmatpush2.msra.mxu0 0.0
      %913 = vmatprep.subr.mxu0 0.0
      %914 = vmatpush2.msra.mxu0 0.0
      %915 = vmatprep.subr.mxu0 0.0
      %916 = vmatpush2.msra.mxu0 0.0
      %917 = vmatprep.subr.mxu0 0.0
      %918 = vmatpush2.msra.mxu0 0.0
      %919 = vmatprep.subr.mxu0 0.0
      %920 = vmatpush2.msra.mxu0 0.0
      %921 = vmatprep.subr.mxu0 0.0
      %922 = vmatpush2.msra.mxu0 0.0
      %923 = vmatprep.subr.mxu0 0.0
      %924 = vmatpush2.msra.mxu0 0.0
      %925 = vmatprep.subr.mxu0 0.0
      %926 = vmatpush2.msra.mxu0 0.0
      %927 = vmatprep.subr.mxu0 0.0
      %928 = vmatpush2.msra.mxu0 0.0
      %929 = vmatprep.subr.mxu0 0.0
      %930 = vmatpush2.msra.mxu0 0.0
      %931 = vmatprep.subr.mxu0 0.0
      %932 = vmatpush2.msra.mxu0 0.0
      %933 = vmatprep.subr.mxu0 0.0
      %934 = vmatpush2.msra.mxu0 0.0
      %935 = vmatprep.mubr.f32.mxu0 0.0
      %936 = vmatmul.mubr.f32.gmra.mxu0 %v236
      %v937 = vpop.f32.mrf.mxu0
      %v938 = vadd.f32 0.0, %v937
      %v939 = vpop.f32.mrf.mxu0
      %940 = vmatprep.mubr.f32.mxu0 0.0
      %941 = vmatmul.mubr.f32.gmra.mxu0 %v869
      %v942 = vpop.f32.mrf.mxu0
      %v943 = vadd.f32 0.0, %v942
      %v944 = vpop.f32.mrf.mxu0
      %945 = vdwg.mxu0
      %v946 = vld [vmem:[#allocation2] sm:$0xff]
      %v947 = vld [vmem:[#allocation2 + $0x8] sm:$0x1]
      %v948 = vadd.f32 %v946, %v938
      %v949 = vadd.f32 %v947, %v943
      %950 = vst.msk [vmem:[#allocation2] sm:$0xff] %vm227, %v948
      %951 = vst.msk [vmem:[#allocation2 + $0x8] sm:$0x1] %vm229, %v949
      %v952 = vld [vmem:[#allocation2] sm:$0xff]
      %v953 = vld [vmem:[#allocation2 + $0x8] sm:$0x1]
      %v954 = vld [vmem:[%s2] sm:$0x1]
      %v956 = vlaneseq
      %v957 = vshrl.u32 %v956, 7
      %v958 = vsub.s32 0, %v957
      %v959 = vrot.slane %v954, %v958
      %v961 = vadd.f32 %v952, %v959
      %v962 = vadd.f32 %v953, %v959
      %v963 = vtanh.pop %v961
      %v964 = vtanh.pop %v962
      %v965 = vadd.f32 %v963, %v225
      %v966 = vadd.f32 %v964, %v226
      %v967 = vld [vmem:[%s3] sm:$0x1]
      %v968 = vld [vmem:[%s4] sm:$0x1]
      %v969 = vsel %vm227, %v965, 0.0
      %970 = vadd.xlane.f32.xlu0 %v969
      %v971 = vpop.xlane.xlu0 %970
      %v972 = vsel %vm229, %v966, 0.0
      %973 = vadd.xlane.f32.xlu0 %v972
      %v974 = vpop.xlane.xlu0 %973
      %v975 = vrcp.pop 32.0
      %v976 = vmul.f32 %v971, %v975
      %v977 = vmul.f32 %v974, %v975
      %v978 = vsub.f32 %v965, %v976
      %v979 = vsub.f32 %v966, %v977
      %v980 = vmul.f32 %v978, %v978
      %v981 = vmul.f32 %v979, %v979
      %v982 = vsel %vm227, %v980, 0.0
      %983 = vadd.xlane.f32.xlu0 %v982
      %v984 = vpop.xlane.xlu0 %983
      %v985 = vsel %vm229, %v981, 0.0
      %986 = vadd.xlane.f32.xlu0 %v985
      %v987 = vpop.xlane.xlu0 %986
      %v988 = vmul.f32 %v984, %v975
      %v989 = vmul.f32 %v987, %v975
      %v990 = vadd.f32 %v988, 1e-05
      %v991 = vadd.f32 %v989, 1e-05
      %v992 = vrsqrt.pop %v990
      %v993 = vrsqrt.pop %v991
      %v994 = vmul.f32 %v978, %v992
      %v995 = vmul.f32 %v979, %v993
      %v997 = vlaneseq
      %v998 = vshrl.u32 %v997, 7
      %v999 = vsub.s32 0, %v998
      %v1000 = vrot.slane %v967, %v999
      %v1002 = vmul.f32 %v994, %v1000
      %v1003 = vmul.f32 %v995, %v1000
      %v1005 = vlaneseq
      %v1006 = vshrl.u32 %v1005, 7
      %v1007 = vsub.s32 0, %v1006
      %v1008 = vrot.slane %v968, %v1007
      %v1010 = vadd.f32 %v1002, %v1008
      %v1011 = vadd.f32 %v1003, %v1008
      %1012 = vst.msk [vmem:[%s224] sm:$0xff] %vm227, %v1010
      %1013 = vst.msk [vmem:[%s224 + $0x8] sm:$0x1] %vm229, %v1011
      %p1014 = scmp.lt.s32.totalorder %s16, 1
      %s1015 = scalar_select %p1014, %s16, 1
      %s1016 = smul.addr %s1015, 2
      %s1017 = smul.addr %s1016, 8
      %s1018 = scalar_lea.vmem %s5, %s1017
      // Predicated region
      $region41: #{_lambda_.15} parent=39 // pred_check
        %p1019 = pneg %p144
      $region42: #{_lambda_.15} parent=39 // pred_check_branch
        %1021 = sbr.rel (%p1019) target = $region44
      $region43: #{_lambda_.15} parent=39 // pred_region
        _
      $region44: #{_lambda_.15} parent=39 // pred_fallthru
        _
    $region40: #{_lambda_.15} parent=5 // pred_fallthru
      _
    %p1022 = scmp.le.s32.totalorder 2, %s11
    // Predicated region
    $region45: #{_lambda_.15} parent=5 // pred_check
      %p1023 = pneg %p1022
    $region46: #{_lambda_.15} parent=5 // pred_check_branch
      %1025 = sbr.rel (%p1023) target = $region48
    $region47: #{_lambda_.15} parent=5 // pred_region
      %s1026 = ssub.s32 %s11, 2
      // Predicated region
      $region49: #{_lambda_.15} parent=47 // pred_check
        %p1027 = pneg %p150
      $region50: #{_lambda_.15} parent=47 // pred_check_branch
        %1029 = sbr.rel (%p1027) target = $region52
      $region51: #{_lambda_.15} parent=47 // pred_region
        %p1030 = scmp.lt.s32.totalorder %s17, 1
        %s1031 = scalar_select %p1030, %s17, 1
        %s1032 = smul.addr %s1031, 2
        %s1033 = smul.addr %s1032, 8
        %s1034 = scalar_lea.vmem %s5, %s1033
      $region52: #{_lambda_.15} parent=47 // pred_fallthru
        _
    $region48: #{_lambda_.15} parent=5 // pred_fallthru
      _
  $region6: #{_lambda_.15} parent=0 // loop_footer
    %s15 = sadd.s32 1, %s11
  $region7: #{_lambda_.15} parent=0 // loop_footer_branch
    %10 = sbr.rel target = $region3
  $region8: #{_lambda_.15} parent=0 // loop_exit
    _

// kernel: _lambda_.23
$region0: #{_lambda_.23}
  #allocation0 [shape = 'u32[]', space=smem, size = 0x4, offset = 0x4, fixed_abs, tag = 'smem constant byte address 0x4 - core index']
  #allocation1 [shape = 'u32[144,128]{1,0:T(1,128)}', space=vmem, size = 0x12000, scoped, tag = 'internal scratch']
  #allocation2 [shape = 'f32[32,32]{1,0:T(8,128)}', space=vmem, size = 0x4000, scoped, tag = 'scratch operand']
  %s0 = inlined_call_operand.vmem [shape: f32[2,32,32], index: 0, kind: input, shape index: {}]
  %s1 = inlined_call_operand.vmem [shape: f32[2,32,32], index: 1, kind: input, shape index: {}]
  %s2 = inlined_call_operand.vmem [shape: f32[1,32], index: 2, kind: input, shape index: {}]
  %s3 = inlined_call_operand.vmem [shape: f32[32,32], index: 3, kind: output, shape index: {}]
  %s4 = sld [smem:[#allocation0]]
  $region53: #{_lambda_.23} parent=0
    _
  %s6 = ssub.s32 1, %s4
  %s7 = scalar_select 0, %s6, %s4
  loop: start=0, step=1, limit=4
  $region2: #{_lambda_.23} parent=0 // loop_pre_header
    _
  $region3: #{_lambda_.23} parent=0 // loop_header
    %s9 = sphi 0, %s13
    %p10 = scmp.ge.s32.totalorder %s9, 4
    %s16 = sphi 0, %s28
    %s17 = sphi 0, %s24
    %s18 = sphi 0, %s16
    %s19 = sphi 0, %s17
    %s20 = sphi 0, %s18
    %s21 = sphi 0, %s19
    %s33 = sphi 0, %s35
    %s36 = sphi 0, %s33
    %s37 = sphi 0, %s36
    %s53 = sphi 0, %s37
    %s59 = sphi 0, %s61
    %s62 = sphi 0, %s59
    %s63 = sphi 0, %s62
    %s79 = sphi 0, %s63
    %s83 = sphi 0, %s83
    %s85 = sphi 0, %s83
    %s86 = sphi 0, %s85
    %s100 = sphi 0, %s86
    %s106 = sphi 0, %s108
    %s109 = sphi 0, %s106
    %s110 = sphi 0, %s109
    %s126 = sphi 0, %s110
  $region4: #{_lambda_.23} parent=0 // loop_header_branch
    %12 = sbr.rel (%p10) target = $region8
  $region5: #{_lambda_.23} parent=0 // loop_body
    %s14 = ssub.s32 %s9, 1
    %s15 = ssub.s32 %s9, 2
    %s22 = sadd.s32 1, %s17
    %p23 = scmp.ge.s32.totalorder %s22, 2
    %s24 = scalar_select %p23, 0, %s22
    %s25 = sadd.s32 1, %s16
    %s26 = scalar_select %p23, %s25, %s16
    %p27 = scmp.ge.s32.totalorder %s26, 1
    %s28 = scalar_select %p27, 0, %s26
    %s29 = ssub.s32 %s17, %s24
    %s30 = ssub.s32 %s16, %s28
    %s31 = sor.u32 %s29, %s30
    %p32 = scmp.eq.s32.totalorder %s31, 0
    %s34 = sadd.s32 %s33, 1
    %s35 = scalar_select %p32, %s33, %s34
    %p38 = pneg %p32
    %p39 = scmp.eq.s32.totalorder %s9, 1
    %p40 = por %p38, %p39
    %p41 = scmp.ne.s32.totalorder %s33, %s36
    %p42 = scmp.eq.s32.totalorder %s9, 0
    %p43 = por %p41, %p42
    %p44 = scmp.ne.s32.totalorder %s33, %s36
    %p45 = scmp.eq.s32.totalorder %s14, 1
    %p46 = por %p44, %p45
    %p47 = scmp.ne.s32.totalorder %s36, %s37
    %p48 = scmp.eq.s32.totalorder %s14, 0
    %p49 = por %p47, %p48
    %p50 = scmp.ne.s32.totalorder %s36, %s37
    %p51 = scmp.eq.s32.totalorder %s15, 1
    %p52 = por %p50, %p51
    %p54 = scmp.ne.s32.totalorder %s37, %s53
    %p55 = scmp.eq.s32.totalorder %s15, 0
    %p56 = por %p54, %p55
    %s57 = ssub.s32 %s17, %s24
    %p58 = scmp.eq.s32.totalorder %s57, 0
    %s60 = sadd.s32 %s59, 1
    %s61 = scalar_select %p58, %s59, %s60
    %p64 = pneg %p58
    %p65 = scmp.eq.s32.totalorder %s9, 1
    %p66 = por %p64, %p65
    %p67 = scmp.ne.s32.totalorder %s59, %s62
    %p68 = scmp.eq.s32.totalorder %s9, 0
    %p69 = por %p67, %p68
    %p70 = scmp.ne.s32.totalorder %s59, %s62
    %p71 = scmp.eq.s32.totalorder %s14, 1
    %p72 = por %p70, %p71
    %p73 = scmp.ne.s32.totalorder %s62, %s63
    %p74 = scmp.eq.s32.totalorder %s14, 0
    %p75 = por %p73, %p74
    %p76 = scmp.ne.s32.totalorder %s62, %s63
    %p77 = scmp.eq.s32.totalorder %s15, 1
    %p78 = por %p76, %p77
    %p80 = scmp.ne.s32.totalorder %s63, %s79
    %p81 = scmp.eq.s32.totalorder %s15, 0
    %p82 = por %p80, %p81
    %s84 = sadd.s32 %s83, 1
    %p87 = scmp.eq.s32.totalorder %s9, 1
    %p88 = scmp.ne.s32.totalorder %s83, %s85
    %p89 = scmp.eq.s32.totalorder %s9, 0
    %p90 = por %p88, %p89
    %p91 = scmp.ne.s32.totalorder %s83, %s85
    %p92 = scmp.eq.s32.totalorder %s14, 1
    %p93 = por %p91, %p92
    %p94 = scmp.ne.s32.totalorder %s85, %s86
    %p95 = scmp.eq.s32.totalorder %s14, 0
    %p96 = por %p94, %p95
    %p97 = scmp.ne.s32.totalorder %s85, %s86
    %p98 = scmp.eq.s32.totalorder %s15, 1
    %p99 = por %p97, %p98
    %p101 = scmp.ne.s32.totalorder %s86, %s100
    %p102 = scmp.eq.s32.totalorder %s15, 0
    %p103 = por %p101, %p102
    %s104 = ssub.s32 %s16, %s28
    %p105 = scmp.eq.s32.totalorder %s104, 0
    %s107 = sadd.s32 %s106, 1
    %s108 = scalar_select %p105, %s106, %s107
    %p111 = pneg %p105
    %p112 = scmp.eq.s32.totalorder %s9, 1
    %p113 = por %p111, %p112
    %p114 = scmp.ne.s32.totalorder %s106, %s109
    %p115 = scmp.eq.s32.totalorder %s9, 0
    %p116 = por %p114, %p115
    %p117 = scmp.ne.s32.totalorder %s106, %s109
    %p118 = scmp.eq.s32.totalorder %s14, 1
    %p119 = por %p117, %p118
    %p120 = scmp.ne.s32.totalorder %s109, %s110
    %p121 = scmp.eq.s32.totalorder %s14, 0
    %p122 = por %p120, %p121
    %p123 = scmp.ne.s32.totalorder %s109, %s110
    %p124 = scmp.eq.s32.totalorder %s15, 1
    %p125 = por %p123, %p124
    %p127 = scmp.ne.s32.totalorder %s110, %s126
    %p128 = scmp.eq.s32.totalorder %s15, 0
    %p129 = por %p127, %p128
    %p130 = scmp.le.s32.totalorder 1, %s9
    %p131 = scmp.lt.s32.totalorder %s9, 3
    %p132 = pnand %p130, %p131
    %p133 = pneg %p132
    // Predicated region
    $region9: #{_lambda_.23} parent=5 // pred_check
      _
    $region10: #{_lambda_.23} parent=5 // pred_check_branch
      %135 = sbr.rel (%p132) target = $region12
    $region11: #{_lambda_.23} parent=5 // pred_region
      %s136 = ssub.s32 %s9, 1
      // Predicated region
      $region13: #{_lambda_.23} parent=11 // pred_check
        %p137 = pneg %p96
      $region14: #{_lambda_.23} parent=11 // pred_check_branch
        %139 = sbr.rel (%p137) target = $region16
      $region15: #{_lambda_.23} parent=11 // pred_region
        _
      $region16: #{_lambda_.23} parent=11 // pred_fallthru
        _
    $region12: #{_lambda_.23} parent=5 // pred_fallthru
      _
    %p140 = scmp.lt.s32.totalorder %s9, 2
    // Predicated region
    $region17: #{_lambda_.23} parent=5 // pred_check
      %p141 = pneg %p140
    $region18: #{_lambda_.23} parent=5 // pred_check_branch
      %143 = sbr.rel (%p141) target = $region20
    $region19: #{_lambda_.23} parent=5 // pred_region
      // Predicated region
      $region21: #{_lambda_.23} parent=19 // pred_check
        %p144 = pneg %p43
      $region22: #{_lambda_.23} parent=19 // pred_check_branch
        %146 = sbr.rel (%p144) target = $region24
      $region23: #{_lambda_.23} parent=19 // pred_region
        %s147 = smul.u32 4, %s16
        %p148 = scmp.lt.s32.totalorder %s17, 1
        %s149 = scalar_select %p148, %s17, 1
        %p150 = scmp.lt.s32.totalorder %s147, 3
        %s151 = scalar_select %p150, %s147, 3
        %s152 = smul.addr %s149, 4
        %s153 = sadd.s32 %s151, %s152
        %s154 = smul.addr %s153, 8
        %s155 = scalar_lea.vmem %s0, %s154
        %s156 = smul.u32 4, %s16
      $region24: #{_lambda_.23} parent=19 // pred_fallthru
        _
      // Predicated region
      $region25: #{_lambda_.23} parent=19 // pred_check
        %p157 = pneg %p69
      $region26: #{_lambda_.23} parent=19 // pred_check_branch
        %159 = sbr.rel (%p157) target = $region28
      $region27: #{_lambda_.23} parent=19 // pred_region
        %p160 = scmp.lt.s32.totalorder %s17, 1
        %s161 = scalar_select %p160, %s17, 1
        %s162 = smul.addr %s161, 4
        %s163 = smul.addr %s162, 8
        %s164 = scalar_lea.vmem %s1, %s163
      $region28: #{_lambda_.23} parent=19 // pred_fallthru
        _
    $region20: #{_lambda_.23} parent=5 // pred_fallthru
      _
    %p165 = scmp.le.s32.totalorder 1, %s9
    %p166 = scmp.lt.s32.totalorder %s9, 3
    %p167 = pnand %p165, %p166
    %p168 = pneg %p167
    // Predicated region
    $region29: #{_lambda_.23} parent=5 // pred_check
      _
    $region30: #{_lambda_.23} parent=5 // pred_check_branch
      %170 = sbr.rel (%p167) target = $region32
    $region31: #{_lambda_.23} parent=5 // pred_region
      %s171 = ssub.s32 %s9, 1
      %s172 = smul.u32 4, %s18
      %p173 = scmp.lt.s32.totalorder %s19, 1
      %s174 = scalar_select %p173, %s19, 1
      %p175 = scmp.lt.s32.totalorder %s172, 3
      %s176 = scalar_select %p175, %s172, 3
      %s177 = smul.addr %s174, 4
      %s178 = sadd.s32 %s176, %s177
      %s179 = smul.addr %s178, 8
      %s180 = scalar_lea.vmem %s0, %s179
      %p181 = pneg %p49
      %p182 = pneg %p46
      %p183 = scmp.lt.s32.totalorder %s19, 1
      %s184 = scalar_select %p183, %s19, 1
      %s185 = smul.addr %s184, 4
      %s186 = smul.addr %s185, 8
      %s187 = scalar_lea.vmem %s1, %s186
      %p188 = pneg %p75
      %p189 = pneg %p72
      %p190 = pneg %p96
      %p191 = pneg %p93
      %p192 = pneg %p122
      %p193 = pneg %p119
      %s194 = smul.u32 4, %s18
      %p195 = scmp.lt.s32.totalorder %s194, 3
      %s196 = scalar_select %p195, %s194, 3
      %s197 = smul.addr %s196, 8
      %s198 = scalar_lea.vmem %s3, %s197
      %s199 = smul.u32 4, %s18
      %p200 = scmp.lt.s32.totalorder %s19, 1
      %s201 = scalar_select %p200, %s19, 1
      %p202 = scmp.lt.s32.totalorder %s199, 3
      %s203 = scalar_select %p202, %s199, 3
      %s204 = smul.addr %s201, 4
      %s205 = sadd.s32 %s203, %s204
      %s206 = smul.addr %s205, 8
      %s207 = scalar_lea.vmem %s0, %s206
      %s208 = smul.u32 4, %s18
      %p209 = scmp.lt.s32.totalorder %s19, 1
      %s210 = scalar_select %p209, %s19, 1
      %s211 = smul.addr %s210, 4
      %s212 = smul.addr %s211, 8
      %s213 = scalar_lea.vmem %s1, %s212
      %s214 = smul.u32 4, %s18
      %p215 = scmp.lt.s32.totalorder %s214, 3
      %s216 = scalar_select %p215, %s214, 3
      %s217 = smul.addr %s216, 8
      %s218 = scalar_lea.vmem %s3, %s217
      %s219 = smul.u32 4, %s18
      %p220 = scmp.eq.s32.totalorder %s19, 0
      // Predicated region
      $region33: #{_lambda_.23} parent=31 // pred_check
        %p221 = pneg %p220
      $region34: #{_lambda_.23} parent=31 // pred_check_branch
        %223 = sbr.rel (%p221) target = $region36
      $region35: #{_lambda_.23} parent=31 // pred_region
        %vm224 = vcmask 261120
        %225 = vst.msk [vmem:[#allocation2] sm:$0xff] %vm224, 0.0
        %226 = vst.msk [vmem:[#allocation2 + $0x8] sm:$0xff] %vm224, 0.0
        %227 = vst.msk [vmem:[#allocation2 + $0x10] sm:$0xff] %vm224, 0.0
        %228 = vst.msk [vmem:[#allocation2 + $0x18] sm:$0xff] %vm224, 0.0
      $region36: #{_lambda_.23} parent=31 // pred_fallthru
        _
      %v229 = vld [vmem:[#allocation2] sm:$0xff]
      %v230 = vld [vmem:[#allocation2 + $0x8] sm:$0xff]
      %v231 = vld [vmem:[#allocation2 + $0x10] sm:$0xff]
      %v232 = vld [vmem:[#allocation2 + $0x18] sm:$0xff]
      %v233 = vld [vmem:[%s207] sm:$0xff]
      %v234 = vld [vmem:[%s207 + $0x8] sm:$0xff]
      %v235 = vld [vmem:[%s207 + $0x10] sm:$0xff]
      %v236 = vld [vmem:[%s207 + $0x18] sm:$0xff]
      %v237 = vld [vmem:[%s213] sm:$0xff]
      %v238 = vld [vmem:[%s213 + $0x8] sm:$0xff]
      %v239 = vld [vmem:[%s213 + $0x10] sm:$0xff]
      %v240 = vld [vmem:[%s213 + $0x18] sm:$0xff]
      %vm241 = vcmask 261120
      %v243 = vsel %vm241, %v233, 0
      %v246 = vsel %vm241, %v234, 0
      %v249 = vsel %vm241, %v235, 0
      %v252 = vsel %vm241, %v236, 0
      %254 = vmatprep.subr.mxu0 0.0
      %255 = vmatpush1.msra.mxu0 0.0
      %256 = vmatprep.subr.mxu0 0.0
      %257 = vmatpush1.msra.mxu0 0.0
      %258 = vmatprep.subr.mxu0 0.0
      %259 = vmatpush1.msra.mxu0 0.0
      %260 = vmatprep.subr.mxu0 0.0
      %261 = vmatpush1.msra.mxu0 0.0
      %262 = vmatprep.subr.mxu0 0.0
      %263 = vmatpush1.msra.mxu0 0.0
      %264 = vmatprep.subr.mxu0 0.0
      %265 = vmatpush1.msra.mxu0 0.0
      %266 = vmatprep.subr.mxu0 0.0
      %267 = vmatpush1.msra.mxu0 0.0
      %268 = vmatprep.subr.mxu0 0.0
      %269 = vmatpush1.msra.mxu0 0.0
      %270 = vmatprep.subr.mxu0 0.0
      %271 = vmatpush1.msra.mxu0 0.0
      %272 = vmatprep.subr.mxu0 0.0
      %273 = vmatpush1.msra.mxu0 0.0
      %274 = vmatprep.subr.mxu0 0.0
      %275 = vmatpush1.msra.mxu0 0.0
      %276 = vmatprep.subr.mxu0 0.0
      %277 = vmatpush1.msra.mxu0 0.0
      %278 = vmatprep.subr.mxu0 0.0
      %279 = vmatpush1.msra.mxu0 %v240
      %280 = vmatprep.subr.mxu0 0.0
      %281 = vmatpush1.msra.mxu0 %v239
      %282 = vmatprep.subr.mxu0 0.0
      %283 = vmatpush1.msra.mxu0 %v238
      %284 = vmatprep.subr.mxu0 0.0
      %285 = vmatpush1.msra.mxu0 %v237
      %286 = vmatprep.subr.mxu0 0.0
      %287 = vmatpush2.msra.mxu0 0.0
      %288 = vmatprep.subr.mxu0 0.0
      %289 = vmatpush2.msra.mxu0 0.0
      %290 = vmatprep.subr.mxu0 0.0
      %291 = vmatpush2.msra.mxu0 0.0
      %292 = vmatprep.subr.mxu0 0.0
      %293 = vmatpush2.msra.mxu0 0.0
      %294 = vmatprep.subr.mxu0 0.0
      %295 = vmatpush2.msra.mxu0 0.0
      %296 = vmatprep.subr.mxu0 0.0
      %297 = vmatpush2.msra.mxu0 0.0
      %298 = vmatprep.subr.mxu0 0.0
      %299 = vmatpush2.msra.mxu0 0.0
      %300 = vmatprep.subr.mxu0 0.0
      %301 = vmatpush2.msra.mxu0 0.0
      %302 = vmatprep.subr.mxu0 0.0
      %303 = vmatpush2.msra.mxu0 0.0
      %304 = vmatprep.subr.mxu0 0.0
      %305 = vmatpush2.msra.mxu0 0.0
      %306 = vmatprep.subr.mxu0 0.0
      %307 = vmatpush2.msra.mxu0 0.0
      %308 = vmatprep.subr.mxu0 0.0
      %309 = vmatpush2.msra.mxu0 0.0
      %310 = vmatprep.subr.mxu0 0.0
      %311 = vmatpush2.msra.mxu0 0.0
      %312 = vmatprep.subr.mxu0 0.0
      %313 = vmatpush2.msra.mxu0 0.0
      %314 = vmatprep.subr.mxu0 0.0
      %315 = vmatpush2.msra.mxu0 0.0
      %316 = vmatprep.subr.mxu0 0.0
      %317 = vmatpush2.msra.mxu0 0.0
      %318 = vmatprep.mubr.f32.mxu0 0.0
      %319 = vmatmul.mubr.f32.gmra.mxu0 %v243
      %v320 = vpop.f32.mrf.mxu0
      %v321 = vadd.f32 0.0, %v320
      %v322 = vpop.f32.mrf.mxu0
      %323 = vmatprep.mubr.f32.mxu0 0.0
      %324 = vmatmul.mubr.f32.gmra.mxu0 %v246
      %v325 = vpop.f32.mrf.mxu0
      %v326 = vadd.f32 0.0, %v325
      %v327 = vpop.f32.mrf.mxu0
      %328 = vmatprep.mubr.f32.mxu0 0.0
      %329 = vmatmul.mubr.f32.gmra.mxu0 %v249
      %v330 = vpop.f32.mrf.mxu0
      %v331 = vadd.f32 0.0, %v330
      %v332 = vpop.f32.mrf.mxu0
      %333 = vmatprep.mubr.f32.mxu0 0.0
      %334 = vmatmul.mubr.f32.gmra.mxu0 %v252
      %v335 = vpop.f32.mrf.mxu0
      %v336 = vadd.f32 0.0, %v335
      %v337 = vpop.f32.mrf.mxu0
      %338 = vdwg.mxu0
      %v339 = vadd.f32 %v229, %v321
      %v340 = vadd.f32 %v230, %v326
      %v341 = vadd.f32 %v231, %v331
      %v342 = vadd.f32 %v232, %v336
      %343 = vst.msk [vmem:[#allocation2] sm:$0xff] %vm241, %v339
      %344 = vst.msk [vmem:[#allocation2 + $0x8] sm:$0xff] %vm241, %v340
      %345 = vst.msk [vmem:[#allocation2 + $0x10] sm:$0xff] %vm241, %v341
      %346 = vst.msk [vmem:[#allocation2 + $0x18] sm:$0xff] %vm241, %v342
      %p347 = scmp.eq.s32.totalorder %s19, 1
      // Predicated region
      $region37: #{_lambda_.23} parent=31 // pred_check
        %p348 = pneg %p347
      $region38: #{_lambda_.23} parent=31 // pred_check_branch
        %350 = sbr.rel (%p348) target = $region40
      $region39: #{_lambda_.23} parent=31 // pred_region
        %v351 = vld [vmem:[#allocation2] sm:$0xff]
        %v352 = vld [vmem:[#allocation2 + $0x8] sm:$0xff]
        %v353 = vld [vmem:[#allocation2 + $0x10] sm:$0xff]
        %v354 = vld [vmem:[#allocation2 + $0x18] sm:$0xff]
        %v355 = vld [vmem:[%s2] sm:$0x1]
        %v357 = vlaneseq
        %v358 = vshrl.u32 %v357, 7
        %v359 = vsub.s32 0, %v358
        %v360 = vrot.slane %v355, %v359
        %v362 = vadd.f32 %v351, %v360
        %v363 = vadd.f32 %v352, %v360
        %v364 = vadd.f32 %v353, %v360
        %v365 = vadd.f32 %v354, %v360
        %366 = vst.msk [vmem:[%s218] sm:$0xff] %vm241, %v362
        %367 = vst.msk [vmem:[%s218 + $0x8] sm:$0xff] %vm241, %v363
        %368 = vst.msk [vmem:[%s218 + $0x10] sm:$0xff] %vm241, %v364
        %369 = vst.msk [vmem:[%s218 + $0x18] sm:$0xff] %vm241, %v365
      $region40: #{_lambda_.23} parent=31 // pred_fallthru
        _
      %s370 = smul.u32 4, %s18
      %p371 = scmp.lt.s32.totalorder %s370, 3
      %s372 = scalar_select %p371, %s370, 3
      %s373 = smul.addr %s372, 8
      %s374 = scalar_lea.vmem %s3, %s373
      // Predicated region
      $region41: #{_lambda_.23} parent=31 // pred_check
        %p375 = pneg %p119
      $region42: #{_lambda_.23} parent=31 // pred_check_branch
        %377 = sbr.rel (%p375) target = $region44
      $region43: #{_lambda_.23} parent=31 // pred_region
        %s378 = smul.u32 4, %s18
      $region44: #{_lambda_.23} parent=31 // pred_fallthru
        _
      // Predicated region
      $region45: #{_lambda_.23} parent=31 // pred_check
        %p379 = pneg %p119
      $region46: #{_lambda_.23} parent=31 // pred_check_branch
        %381 = sbr.rel (%p379) target = $region48
      $region47: #{_lambda_.23} parent=31 // pred_region
        %s382 = smul.u32 4, %s18
        %p383 = scmp.lt.s32.totalorder %s382, 3
        %s384 = scalar_select %p383, %s382, 3
        %s385 = smul.addr %s384, 8
        %s386 = scalar_lea.vmem %s3, %s385
      $region48: #{_lambda_.23} parent=31 // pred_fallthru
        _
    $region32: #{_lambda_.23} parent=5 // pred_fallthru
      _
    %p387 = scmp.le.s32.totalorder 2, %s9
    // Predicated region
    $region49: #{_lambda_.23} parent=5 // pred_check
      %p388 = pneg %p387
    $region50: #{_lambda_.23} parent=5 // pred_check_branch
      %390 = sbr.rel (%p388) target = $region52
    $region51: #{_lambda_.23} parent=5 // pred_region
      %s391 = ssub.s32 %s9, 2
    $region52: #{_lambda_.23} parent=5 // pred_fallthru
      _
  $region6: #{_lambda_.23} parent=0 // loop_footer
    %s13 = sadd.s32 1, %s9
  $region7: #{_lambda_.23} parent=0 // loop_footer_branch
    %8 = sbr.rel target = $region3
  $region8: #{_lambda_.23} parent=0 // loop_exit
    _

// kernel: _lambda_.24
$region0: #{_lambda_.24}
  #allocation0 [shape = 'u32[]', space=smem, size = 0x4, offset = 0x4, fixed_abs, tag = 'smem constant byte address 0x4 - core index']
  #allocation1 [shape = 'u32[144,128]{1,0:T(1,128)}', space=vmem, size = 0x12000, scoped, tag = 'internal scratch']
  %s0 = inlined_call_operand.vmem [shape: f32[32,32], index: 0, kind: input, shape index: {}]
  %s1 = inlined_call_operand.vmem [shape: f32[1,32], index: 1, kind: input, shape index: {}, may-alias: {1,7}]
  %s2 = inlined_call_operand.vmem [shape: f32[1,32], index: 2, kind: input, shape index: {}, may-alias: {2,8}]
  %s3 = inlined_call_operand.vmem [shape: f32[32,128], index: 3, kind: input, shape index: {}]
  %s4 = inlined_call_operand.vmem [shape: f32[1,128], index: 4, kind: input, shape index: {}]
  %s5 = inlined_call_operand.vmem [shape: f32[128,32], index: 5, kind: input, shape index: {}]
  %s6 = inlined_call_operand.vmem [shape: f32[1,32], index: 6, kind: input, shape index: {}]
  %s7 = inlined_call_operand.vmem [shape: f32[1,32], index: 7, kind: input, shape index: {}, may-alias: {1,7}]
  %s8 = inlined_call_operand.vmem [shape: f32[1,32], index: 8, kind: input, shape index: {}, may-alias: {2,8}]
  %s9 = inlined_call_operand.vmem [shape: f32[32,32], index: 9, kind: output, shape index: {}]
  %s10 = sld [smem:[#allocation0]]
  $region46: #{_lambda_.24} parent=0
    _
  %s12 = ssub.s32 1, %s10
  %s13 = scalar_select 0, %s12, %s10
  // Predicated region
  $region2: #{_lambda_.24} parent=0 // pred_check
    _
  $region3: #{_lambda_.24} parent=0 // pred_check_branch
    %15 = sbr.rel (0) target = $region5
  $region4: #{_lambda_.24} parent=0 // pred_region
    _
  $region5: #{_lambda_.24} parent=0 // pred_fallthru
    _
  // Predicated region
  $region6: #{_lambda_.24} parent=0 // pred_check
    _
  $region7: #{_lambda_.24} parent=0 // pred_check_branch
    %17 = sbr.rel (0) target = $region9
  $region8: #{_lambda_.24} parent=0 // pred_region
    _
  $region9: #{_lambda_.24} parent=0 // pred_fallthru
    _
  // Predicated region
  $region10: #{_lambda_.24} parent=0 // pred_check
    _
  $region11: #{_lambda_.24} parent=0 // pred_check_branch
    %19 = sbr.rel (0) target = $region13
  $region12: #{_lambda_.24} parent=0 // pred_region
    _
  $region13: #{_lambda_.24} parent=0 // pred_fallthru
    _
  // Predicated region
  $region14: #{_lambda_.24} parent=0 // pred_check
    _
  $region15: #{_lambda_.24} parent=0 // pred_check_branch
    %21 = sbr.rel (0) target = $region17
  $region16: #{_lambda_.24} parent=0 // pred_region
    _
  $region17: #{_lambda_.24} parent=0 // pred_fallthru
    _
  // Predicated region
  $region18: #{_lambda_.24} parent=0 // pred_check
    _
  $region19: #{_lambda_.24} parent=0 // pred_check_branch
    %23 = sbr.rel (0) target = $region21
  $region20: #{_lambda_.24} parent=0 // pred_region
    _
  $region21: #{_lambda_.24} parent=0 // pred_fallthru
    _
  // Predicated region
  $region22: #{_lambda_.24} parent=0 // pred_check
    _
  $region23: #{_lambda_.24} parent=0 // pred_check_branch
    %25 = sbr.rel (0) target = $region25
  $region24: #{_lambda_.24} parent=0 // pred_region
    _
  $region25: #{_lambda_.24} parent=0 // pred_fallthru
    _
  // Predicated region
  $region26: #{_lambda_.24} parent=0 // pred_check
    _
  $region27: #{_lambda_.24} parent=0 // pred_check_branch
    %27 = sbr.rel (0) target = $region29
  $region28: #{_lambda_.24} parent=0 // pred_region
    _
  $region29: #{_lambda_.24} parent=0 // pred_fallthru
    _
  // Predicated region
  $region30: #{_lambda_.24} parent=0 // pred_check
    _
  $region31: #{_lambda_.24} parent=0 // pred_check_branch
    %29 = sbr.rel (0) target = $region33
  $region32: #{_lambda_.24} parent=0 // pred_region
    _
  $region33: #{_lambda_.24} parent=0 // pred_fallthru
    _
  // Predicated region
  $region34: #{_lambda_.24} parent=0 // pred_check
    _
  $region35: #{_lambda_.24} parent=0 // pred_check_branch
    %31 = sbr.rel (0) target = $region37
  $region36: #{_lambda_.24} parent=0 // pred_region
    _
  $region37: #{_lambda_.24} parent=0 // pred_fallthru
    _
  %v32 = vld [vmem:[%s0] sm:$0xff]
  %v33 = vld [vmem:[%s0 + $0x8] sm:$0xff]
  %v34 = vld [vmem:[%s0 + $0x10] sm:$0xff]
  %v35 = vld [vmem:[%s0 + $0x18] sm:$0xff]
  %v36 = vld [vmem:[%s1] sm:$0x1]
  %v37 = vld [vmem:[%s2] sm:$0x1]
  %vm38 = vcmask 261120
  %v39 = vsel %vm38, %v32, 0.0
  %40 = vadd.xlane.f32.xlu0 %v39
  %v41 = vpop.xlane.xlu0 %40
  %v42 = vsel %vm38, %v33, 0.0
  %43 = vadd.xlane.f32.xlu0 %v42
  %v44 = vpop.xlane.xlu0 %43
  %v45 = vsel %vm38, %v34, 0.0
  %46 = vadd.xlane.f32.xlu0 %v45
  %v47 = vpop.xlane.xlu0 %46
  %v48 = vsel %vm38, %v35, 0.0
  %49 = vadd.xlane.f32.xlu0 %v48
  %v50 = vpop.xlane.xlu0 %49
  %v51 = vrcp.pop 32.0
  %v52 = vmul.f32 %v41, %v51
  %v53 = vmul.f32 %v44, %v51
  %v54 = vmul.f32 %v47, %v51
  %v55 = vmul.f32 %v50, %v51
  %v56 = vsub.f32 %v32, %v52
  %v57 = vsub.f32 %v33, %v53
  %v58 = vsub.f32 %v34, %v54
  %v59 = vsub.f32 %v35, %v55
  %v60 = vmul.f32 %v56, %v56
  %v61 = vmul.f32 %v57, %v57
  %v62 = vmul.f32 %v58, %v58
  %v63 = vmul.f32 %v59, %v59
  %v64 = vsel %vm38, %v60, 0.0
  %65 = vadd.xlane.f32.xlu0 %v64
  %v66 = vpop.xlane.xlu0 %65
  %v67 = vsel %vm38, %v61, 0.0
  %68 = vadd.xlane.f32.xlu0 %v67
  %v69 = vpop.xlane.xlu0 %68
  %v70 = vsel %vm38, %v62, 0.0
  %71 = vadd.xlane.f32.xlu0 %v70
  %v72 = vpop.xlane.xlu0 %71
  %v73 = vsel %vm38, %v63, 0.0
  %74 = vadd.xlane.f32.xlu0 %v73
  %v75 = vpop.xlane.xlu0 %74
  %v76 = vmul.f32 %v66, %v51
  %v77 = vmul.f32 %v69, %v51
  %v78 = vmul.f32 %v72, %v51
  %v79 = vmul.f32 %v75, %v51
  %v80 = vadd.f32 %v76, 1e-05
  %v81 = vadd.f32 %v77, 1e-05
  %v82 = vadd.f32 %v78, 1e-05
  %v83 = vadd.f32 %v79, 1e-05
  %v84 = vrsqrt.pop %v80
  %v85 = vrsqrt.pop %v81
  %v86 = vrsqrt.pop %v82
  %v87 = vrsqrt.pop %v83
  %v88 = vmul.f32 %v56, %v84
  %v89 = vmul.f32 %v57, %v85
  %v90 = vmul.f32 %v58, %v86
  %v91 = vmul.f32 %v59, %v87
  %v93 = vlaneseq
  %v94 = vshrl.u32 %v93, 7
  %v95 = vsub.s32 0, %v94
  %v96 = vrot.slane %v36, %v95
  %v98 = vmul.f32 %v88, %v96
  %v99 = vmul.f32 %v89, %v96
  %v100 = vmul.f32 %v90, %v96
  %v101 = vmul.f32 %v91, %v96
  %v103 = vlaneseq
  %v104 = vshrl.u32 %v103, 7
  %v105 = vsub.s32 0, %v104
  %v106 = vrot.slane %v37, %v105
  %v108 = vadd.f32 %v98, %v106
  %v109 = vadd.f32 %v99, %v106
  %v110 = vadd.f32 %v100, %v106
  %v111 = vadd.f32 %v101, %v106
  %v112 = vld [vmem:[%s3] sm:$0xff]
  %v113 = vld [vmem:[%s3 + $0x8] sm:$0xff]
  %v114 = vld [vmem:[%s3 + $0x10] sm:$0xff]
  %v115 = vld [vmem:[%s3 + $0x18] sm:$0xff]
  %v116 = vld [vmem:[%s4] sm:$0x1]
  %v118 = vlaneseq
  %v119 = vshrl.u32 %v118, 7
  %v120 = vsub.s32 0, %v119
  %v121 = vrot.slane %v116, %v120
  %v124 = vsel %vm38, %v108, 0
  %v127 = vsel %vm38, %v109, 0
  %v130 = vsel %vm38, %v110, 0
  %v133 = vsel %vm38, %v111, 0
  %135 = vmatprep.subr.mxu0 0.0
  %136 = vmatpush1.msra.mxu0 0.0
  %137 = vmatprep.subr.mxu0 0.0
  %138 = vmatpush1.msra.mxu0 0.0
  %139 = vmatprep.subr.mxu0 0.0
  %140 = vmatpush1.msra.mxu0 0.0
  %141 = vmatprep.subr.mxu0 0.0
  %142 = vmatpush1.msra.mxu0 0.0
  %143 = vmatprep.subr.mxu0 0.0
  %144 = vmatpush1.msra.mxu0 0.0
  %145 = vmatprep.subr.mxu0 0.0
  %146 = vmatpush1.msra.mxu0 0.0
  %147 = vmatprep.subr.mxu0 0.0
  %148 = vmatpush1.msra.mxu0 0.0
  %149 = vmatprep.subr.mxu0 0.0
  %150 = vmatpush1.msra.mxu0 0.0
  %151 = vmatprep.subr.mxu0 0.0
  %152 = vmatpush1.msra.mxu0 0.0
  %153 = vmatprep.subr.mxu0 0.0
  %154 = vmatpush1.msra.mxu0 0.0
  %155 = vmatprep.subr.mxu0 0.0
  %156 = vmatpush1.msra.mxu0 0.0
  %157 = vmatprep.subr.mxu0 0.0
  %158 = vmatpush1.msra.mxu0 0.0
  %159 = vmatprep.subr.mxu0 0.0
  %160 = vmatpush1.msra.mxu0 %v115
  %161 = vmatprep.subr.mxu0 0.0
  %162 = vmatpush1.msra.mxu0 %v114
  %163 = vmatprep.subr.mxu0 0.0
  %164 = vmatpush1.msra.mxu0 %v113
  %165 = vmatprep.subr.mxu0 0.0
  %166 = vmatpush1.msra.mxu0 %v112
  %167 = vmatprep.subr.mxu0 0.0
  %168 = vmatpush2.msra.mxu0 0.0
  %169 = vmatprep.subr.mxu0 0.0
  %170 = vmatpush2.msra.mxu0 0.0
  %171 = vmatprep.subr.mxu0 0.0
  %172 = vmatpush2.msra.mxu0 0.0
  %173 = vmatprep.subr.mxu0 0.0
  %174 = vmatpush2.msra.mxu0 0.0
  %175 = vmatprep.subr.mxu0 0.0
  %176 = vmatpush2.msra.mxu0 0.0
  %177 = vmatprep.subr.mxu0 0.0
  %178 = vmatpush2.msra.mxu0 0.0
  %179 = vmatprep.subr.mxu0 0.0
  %180 = vmatpush2.msra.mxu0 0.0
  %181 = vmatprep.subr.mxu0 0.0
  %182 = vmatpush2.msra.mxu0 0.0
  %183 = vmatprep.subr.mxu0 0.0
  %184 = vmatpush2.msra.mxu0 0.0
  %185 = vmatprep.subr.mxu0 0.0
  %186 = vmatpush2.msra.mxu0 0.0
  %187 = vmatprep.subr.mxu0 0.0
  %188 = vmatpush2.msra.mxu0 0.0
  %189 = vmatprep.subr.mxu0 0.0
  %190 = vmatpush2.msra.mxu0 0.0
  %191 = vmatprep.subr.mxu0 0.0
  %192 = vmatpush2.msra.mxu0 0.0
  %193 = vmatprep.subr.mxu0 0.0
  %194 = vmatpush2.msra.mxu0 0.0
  %195 = vmatprep.subr.mxu0 0.0
  %196 = vmatpush2.msra.mxu0 0.0
  %197 = vmatprep.subr.mxu0 0.0
  %198 = vmatpush2.msra.mxu0 0.0
  %199 = vmatprep.mubr.f32.mxu0 0.0
  %200 = vmatmul.mubr.f32.gmra.mxu0 %v124
  %v201 = vpop.f32.mrf.mxu0
  %v202 = vadd.f32 %v121, %v201
  %v203 = vpop.f32.mrf.mxu0
  %204 = vmatprep.mubr.f32.mxu0 0.0
  %205 = vmatmul.mubr.f32.gmra.mxu0 %v127
  %v206 = vpop.f32.mrf.mxu0
  %v207 = vadd.f32 %v121, %v206
  %v208 = vpop.f32.mrf.mxu0
  %209 = vmatprep.mubr.f32.mxu0 0.0
  %210 = vmatmul.mubr.f32.gmra.mxu0 %v130
  %v211 = vpop.f32.mrf.mxu0
  %v212 = vadd.f32 %v121, %v211
  %v213 = vpop.f32.mrf.mxu0
  %214 = vmatprep.mubr.f32.mxu0 0.0
  %215 = vmatmul.mubr.f32.gmra.mxu0 %v133
  %v216 = vpop.f32.mrf.mxu0
  %v217 = vadd.f32 %v121, %v216
  %v218 = vpop.f32.mrf.mxu0
  %219 = vdwg.mxu0
  %v220 = vld [vmem:[%s5] sm:$0xff]
  %v221 = vld [vmem:[%s5 + $0x8] sm:$0xff]
  %v222 = vld [vmem:[%s5 + $0x10] sm:$0xff]
  %v223 = vld [vmem:[%s5 + $0x18] sm:$0xff]
  %v224 = vld [vmem:[%s5 + $0x20] sm:$0xff]
  %v225 = vld [vmem:[%s5 + $0x28] sm:$0xff]
  %v226 = vld [vmem:[%s5 + $0x30] sm:$0xff]
  %v227 = vld [vmem:[%s5 + $0x38] sm:$0xff]
  %v228 = vld [vmem:[%s5 + $0x40] sm:$0xff]
  %v229 = vld [vmem:[%s5 + $0x48] sm:$0xff]
  %v230 = vld [vmem:[%s5 + $0x50] sm:$0xff]
  %v231 = vld [vmem:[%s5 + $0x58] sm:$0xff]
  %v232 = vld [vmem:[%s5 + $0x60] sm:$0xff]
  %v233 = vld [vmem:[%s5 + $0x68] sm:$0xff]
  %v234 = vld [vmem:[%s5 + $0x70] sm:$0xff]
  %v235 = vld [vmem:[%s5 + $0x78] sm:$0xff]
  %v236 = vld [vmem:[%s6] sm:$0x1]
  %v238 = vlaneseq
  %v239 = vshrl.u32 %v238, 7
  %v240 = vsub.s32 0, %v239
  %v241 = vrot.slane %v236, %v240
  %243 = vmatprep.subr.mxu0 0.0
  %244 = vmatpush1.msra.mxu0 %v235
  %245 = vmatprep.subr.mxu0 0.0
  %246 = vmatpush1.msra.mxu0 %v234
  %247 = vmatprep.subr.mxu0 0.0
  %248 = vmatpush1.msra.mxu0 %v233
  %249 = vmatprep.subr.mxu0 0.0
  %250 = vmatpush1.msra.mxu0 %v232
  %251 = vmatprep.subr.mxu0 0.0
  %252 = vmatpush1.msra.mxu0 %v231
  %253 = vmatprep.subr.mxu0 0.0
  %254 = vmatpush1.msra.mxu0 %v230
  %255 = vmatprep.subr.mxu0 0.0
  %256 = vmatpush1.msra.mxu0 %v229
  %257 = vmatprep.subr.mxu0 0.0
  %258 = vmatpush1.msra.mxu0 %v228
  %259 = vmatprep.subr.mxu0 0.0
  %260 = vmatpush1.msra.mxu0 %v227
  %261 = vmatprep.subr.mxu0 0.0
  %262 = vmatpush1.msra.mxu0 %v226
  %263 = vmatprep.subr.mxu0 0.0
  %264 = vmatpush1.msra.mxu0 %v225
  %265 = vmatprep.subr.mxu0 0.0
  %266 = vmatpush1.msra.mxu0 %v224
  %267 = vmatprep.subr.mxu0 0.0
  %268 = vmatpush1.msra.mxu0 %v223
  %269 = vmatprep.subr.mxu0 0.0
  %270 = vmatpush1.msra.mxu0 %v222
  %271 = vmatprep.subr.mxu0 0.0
  %272 = vmatpush1.msra.mxu0 %v221
  %273 = vmatprep.subr.mxu0 0.0
  %274 = vmatpush1.msra.mxu0 %v220
  %275 = vmatprep.subr.mxu0 0.0
  %276 = vmatpush2.msra.mxu0 0.0
  %277 = vmatprep.subr.mxu0 0.0
  %278 = vmatpush2.msra.mxu0 0.0
  %279 = vmatprep.subr.mxu0 0.0
  %280 = vmatpush2.msra.mxu0 0.0
  %281 = vmatprep.subr.mxu0 0.0
  %282 = vmatpush2.msra.mxu0 0.0
  %283 = vmatprep.subr.mxu0 0.0
  %284 = vmatpush2.msra.mxu0 0.0
  %285 = vmatprep.subr.mxu0 0.0
  %286 = vmatpush2.msra.mxu0 0.0
  %287 = vmatprep.subr.mxu0 0.0
  %288 = vmatpush2.msra.mxu0 0.0
  %289 = vmatprep.subr.mxu0 0.0
  %290 = vmatpush2.msra.mxu0 0.0
  %291 = vmatprep.subr.mxu0 0.0
  %292 = vmatpush2.msra.mxu0 0.0
  %293 = vmatprep.subr.mxu0 0.0
  %294 = vmatpush2.msra.mxu0 0.0
  %295 = vmatprep.subr.mxu0 0.0
  %296 = vmatpush2.msra.mxu0 0.0
  %297 = vmatprep.subr.mxu0 0.0
  %298 = vmatpush2.msra.mxu0 0.0
  %299 = vmatprep.subr.mxu0 0.0
  %300 = vmatpush2.msra.mxu0 0.0
  %301 = vmatprep.subr.mxu0 0.0
  %302 = vmatpush2.msra.mxu0 0.0
  %303 = vmatprep.subr.mxu0 0.0
  %304 = vmatpush2.msra.mxu0 0.0
  %305 = vmatprep.subr.mxu0 0.0
  %306 = vmatpush2.msra.mxu0 0.0
  %307 = vmatprep.mubr.f32.mxu0 0.0
  %308 = vmatmul.mubr.f32.gmra.mxu0 %v202
  %v309 = vpop.f32.mrf.mxu0
  %v310 = vadd.f32 %v241, %v309
  %v311 = vpop.f32.mrf.mxu0
  %312 = vmatprep.mubr.f32.mxu0 0.0
  %313 = vmatmul.mubr.f32.gmra.mxu0 %v207
  %v314 = vpop.f32.mrf.mxu0
  %v315 = vadd.f32 %v241, %v314
  %v316 = vpop.f32.mrf.mxu0
  %317 = vmatprep.mubr.f32.mxu0 0.0
  %318 = vmatmul.mubr.f32.gmra.mxu0 %v212
  %v319 = vpop.f32.mrf.mxu0
  %v320 = vadd.f32 %v241, %v319
  %v321 = vpop.f32.mrf.mxu0
  %322 = vmatprep.mubr.f32.mxu0 0.0
  %323 = vmatmul.mubr.f32.gmra.mxu0 %v217
  %v324 = vpop.f32.mrf.mxu0
  %v325 = vadd.f32 %v241, %v324
  %v326 = vpop.f32.mrf.mxu0
  %327 = vdwg.mxu0
  %v328 = vadd.f32 %v32, %v310
  %v329 = vadd.f32 %v33, %v315
  %v330 = vadd.f32 %v34, %v320
  %v331 = vadd.f32 %v35, %v325
  %v332 = vld [vmem:[%s7] sm:$0x1]
  %v333 = vld [vmem:[%s8] sm:$0x1]
  %v334 = vsel %vm38, %v328, 0.0
  %335 = vadd.xlane.f32.xlu0 %v334
  %v336 = vpop.xlane.xlu0 %335
  %v337 = vsel %vm38, %v329, 0.0
  %338 = vadd.xlane.f32.xlu0 %v337
  %v339 = vpop.xlane.xlu0 %338
  %v340 = vsel %vm38, %v330, 0.0
  %341 = vadd.xlane.f32.xlu0 %v340
  %v342 = vpop.xlane.xlu0 %341
  %v343 = vsel %vm38, %v331, 0.0
  %344 = vadd.xlane.f32.xlu0 %v343
  %v345 = vpop.xlane.xlu0 %344
  %v346 = vmul.f32 %v336, %v51
  %v347 = vmul.f32 %v339, %v51
  %v348 = vmul.f32 %v342, %v51
  %v349 = vmul.f32 %v345, %v51
  %v350 = vsub.f32 %v328, %v346
  %v351 = vsub.f32 %v329, %v347
  %v352 = vsub.f32 %v330, %v348
  %v353 = vsub.f32 %v331, %v349
  %v354 = vmul.f32 %v350, %v350
  %v355 = vmul.f32 %v351, %v351
  %v356 = vmul.f32 %v352, %v352
  %v357 = vmul.f32 %v353, %v353
  %v358 = vsel %vm38, %v354, 0.0
  %359 = vadd.xlane.f32.xlu0 %v358
  %v360 = vpop.xlane.xlu0 %359
  %v361 = vsel %vm38, %v355, 0.0
  %362 = vadd.xlane.f32.xlu0 %v361
  %v363 = vpop.xlane.xlu0 %362
  %v364 = vsel %vm38, %v356, 0.0
  %365 = vadd.xlane.f32.xlu0 %v364
  %v366 = vpop.xlane.xlu0 %365
  %v367 = vsel %vm38, %v357, 0.0
  %368 = vadd.xlane.f32.xlu0 %v367
  %v369 = vpop.xlane.xlu0 %368
  %v370 = vmul.f32 %v360, %v51
  %v371 = vmul.f32 %v363, %v51
  %v372 = vmul.f32 %v366, %v51
  %v373 = vmul.f32 %v369, %v51
  %v374 = vadd.f32 %v370, 1e-05
  %v375 = vadd.f32 %v371, 1e-05
  %v376 = vadd.f32 %v372, 1e-05
  %v377 = vadd.f32 %v373, 1e-05
  %v378 = vrsqrt.pop %v374
  %v379 = vrsqrt.pop %v375
  %v380 = vrsqrt.pop %v376
  %v381 = vrsqrt.pop %v377
  %v382 = vmul.f32 %v350, %v378
  %v383 = vmul.f32 %v351, %v379
  %v384 = vmul.f32 %v352, %v380
  %v385 = vmul.f32 %v353, %v381
  %v387 = vlaneseq
  %v388 = vshrl.u32 %v387, 7
  %v389 = vsub.s32 0, %v388
  %v390 = vrot.slane %v332, %v389
  %v392 = vmul.f32 %v382, %v390
  %v393 = vmul.f32 %v383, %v390
  %v394 = vmul.f32 %v384, %v390
  %v395 = vmul.f32 %v385, %v390
  %v397 = vlaneseq
  %v398 = vshrl.u32 %v397, 7
  %v399 = vsub.s32 0, %v398
  %v400 = vrot.slane %v333, %v399
  %v402 = vadd.f32 %v392, %v400
  %v403 = vadd.f32 %v393, %v400
  %v404 = vadd.f32 %v394, %v400
  %v405 = vadd.f32 %v395, %v400
  %406 = vst.msk [vmem:[%s9] sm:$0xff] %vm38, %v402
  %407 = vst.msk [vmem:[%s9 + $0x8] sm:$0xff] %vm38, %v403
  %408 = vst.msk [vmem:[%s9 + $0x10] sm:$0xff] %vm38, %v404
  %409 = vst.msk [vmem:[%s9 + $0x18] sm:$0xff] %vm38, %v405
  // Predicated region
  $region38: #{_lambda_.24} parent=0 // pred_check
    _
  $region39: #{_lambda_.24} parent=0 // pred_check_branch
    %411 = sbr.rel (0) target = $region41
  $region40: #{_lambda_.24} parent=0 // pred_region
    _
  $region41: #{_lambda_.24} parent=0 // pred_fallthru
    _
  // Predicated region
  $region42: #{_lambda_.24} parent=0 // pred_check
    _
  $region43: #{_lambda_.24} parent=0 // pred_check_branch
    %413 = sbr.rel (0) target = $region45
  $region44: #{_lambda_.24} parent=0 // pred_region
    _
  $region45: #{_lambda_.24} parent=0 // pred_fallthru
    _

// kernel: _lambda_.25
$region0: #{_lambda_.25}
  #allocation0 [shape = 'u32[]', space=smem, size = 0x4, offset = 0x4, fixed_abs, tag = 'smem constant byte address 0x4 - core index']
  #allocation1 [shape = 'u32[144,128]{1,0:T(1,128)}', space=vmem, size = 0x12000, scoped, tag = 'internal scratch']
  #allocation2 [shape = 'f32[32,128]{1,0:T(8,128)}', space=vmem, size = 0x4000, scoped, tag = 'scratch operand']
  %s0 = inlined_call_operand.vmem [shape: f32[1,32,32], index: 0, kind: input, shape index: {}]
  %s1 = inlined_call_operand.vmem [shape: f32[1,32,128], index: 1, kind: input, shape index: {}]
  %s2 = inlined_call_operand.vmem [shape: f32[1,128], index: 2, kind: input, shape index: {}]
  %s3 = inlined_call_operand.vmem [shape: f32[32,128], index: 3, kind: output, shape index: {}]
  %s4 = sld [smem:[#allocation0]]
  $region30: #{_lambda_.25} parent=0
    _
  %s6 = ssub.s32 1, %s4
  %s7 = scalar_select 0, %s6, %s4
  // Predicated region
  $region2: #{_lambda_.25} parent=0 // pred_check
    _
  $region3: #{_lambda_.25} parent=0 // pred_check_branch
    %9 = sbr.rel (0) target = $region5
  $region4: #{_lambda_.25} parent=0 // pred_region
    _
  $region5: #{_lambda_.25} parent=0 // pred_fallthru
    _
  // Predicated region
  $region6: #{_lambda_.25} parent=0 // pred_check
    _
  $region7: #{_lambda_.25} parent=0 // pred_check_branch
    %11 = sbr.rel (0) target = $region9
  $region8: #{_lambda_.25} parent=0 // pred_region
    _
  $region9: #{_lambda_.25} parent=0 // pred_fallthru
    _
  // Predicated region
  $region10: #{_lambda_.25} parent=0 // pred_check
    _
  $region11: #{_lambda_.25} parent=0 // pred_check_branch
    %13 = sbr.rel (0) target = $region13
  $region12: #{_lambda_.25} parent=0 // pred_region
    _
  $region13: #{_lambda_.25} parent=0 // pred_fallthru
    _
  %p14 = scmp.eq.s32.totalorder 0, 0
  // Predicated region
  $region14: #{_lambda_.25} parent=0 // pred_check
    %p15 = pneg %p14
  $region15: #{_lambda_.25} parent=0 // pred_check_branch
    %17 = sbr.rel (%p15) target = $region17
  $region16: #{_lambda_.25} parent=0 // pred_region
    %18 = vst [vmem:[#allocation2] sm:$0xff] 0.0
    %19 = vst [vmem:[#allocation2 + $0x8] sm:$0xff] 0.0
    %20 = vst [vmem:[#allocation2 + $0x10] sm:$0xff] 0.0
    %21 = vst [vmem:[#allocation2 + $0x18] sm:$0xff] 0.0
  $region17: #{_lambda_.25} parent=0 // pred_fallthru
    _
  %v22 = vld [vmem:[#allocation2] sm:$0xff]
  %v23 = vld [vmem:[#allocation2 + $0x8] sm:$0xff]
  %v24 = vld [vmem:[#allocation2 + $0x10] sm:$0xff]
  %v25 = vld [vmem:[#allocation2 + $0x18] sm:$0xff]
  %v26 = vld [vmem:[%s0] sm:$0xff]
  %v27 = vld [vmem:[%s0 + $0x8] sm:$0xff]
  %v28 = vld [vmem:[%s0 + $0x10] sm:$0xff]
  %v29 = vld [vmem:[%s0 + $0x18] sm:$0xff]
  %v30 = vld [vmem:[%s1] sm:$0xff]
  %v31 = vld [vmem:[%s1 + $0x8] sm:$0xff]
  %v32 = vld [vmem:[%s1 + $0x10] sm:$0xff]
  %v33 = vld [vmem:[%s1 + $0x18] sm:$0xff]
  %vm34 = vcmask 261120
  %v36 = vsel %vm34, %v26, 0
  %v39 = vsel %vm34, %v27, 0
  %v42 = vsel %vm34, %v28, 0
  %v45 = vsel %vm34, %v29, 0
  %47 = vmatprep.subr.mxu0 0.0
  %48 = vmatpush1.msra.mxu0 0.0
  %49 = vmatprep.subr.mxu0 0.0
  %50 = vmatpush1.msra.mxu0 0.0
  %51 = vmatprep.subr.mxu0 0.0
  %52 = vmatpush1.msra.mxu0 0.0
  %53 = vmatprep.subr.mxu0 0.0
  %54 = vmatpush1.msra.mxu0 0.0
  %55 = vmatprep.subr.mxu0 0.0
  %56 = vmatpush1.msra.mxu0 0.0
  %57 = vmatprep.subr.mxu0 0.0
  %58 = vmatpush1.msra.mxu0 0.0
  %59 = vmatprep.subr.mxu0 0.0
  %60 = vmatpush1.msra.mxu0 0.0
  %61 = vmatprep.subr.mxu0 0.0
  %62 = vmatpush1.msra.mxu0 0.0
  %63 = vmatprep.subr.mxu0 0.0
  %64 = vmatpush1.msra.mxu0 0.0
  %65 = vmatprep.subr.mxu0 0.0
  %66 = vmatpush1.msra.mxu0 0.0
  %67 = vmatprep.subr.mxu0 0.0
  %68 = vmatpush1.msra.mxu0 0.0
  %69 = vmatprep.subr.mxu0 0.0
  %70 = vmatpush1.msra.mxu0 0.0
  %71 = vmatprep.subr.mxu0 0.0
  %72 = vmatpush1.msra.mxu0 %v33
  %73 = vmatprep.subr.mxu0 0.0
  %74 = vmatpush1.msra.mxu0 %v32
  %75 = vmatprep.subr.mxu0 0.0
  %76 = vmatpush1.msra.mxu0 %v31
  %77 = vmatprep.subr.mxu0 0.0
  %78 = vmatpush1.msra.mxu0 %v30
  %79 = vmatprep.subr.mxu0 0.0
  %80 = vmatpush2.msra.mxu0 0.0
  %81 = vmatprep.subr.mxu0 0.0
  %82 = vmatpush2.msra.mxu0 0.0
  %83 = vmatprep.subr.mxu0 0.0
  %84 = vmatpush2.msra.mxu0 0.0
  %85 = vmatprep.subr.mxu0 0.0
  %86 = vmatpush2.msra.mxu0 0.0
  %87 = vmatprep.subr.mxu0 0.0
  %88 = vmatpush2.msra.mxu0 0.0
  %89 = vmatprep.subr.mxu0 0.0
  %90 = vmatpush2.msra.mxu0 0.0
  %91 = vmatprep.subr.mxu0 0.0
  %92 = vmatpush2.msra.mxu0 0.0
  %93 = vmatprep.subr.mxu0 0.0
  %94 = vmatpush2.msra.mxu0 0.0
  %95 = vmatprep.subr.mxu0 0.0
  %96 = vmatpush2.msra.mxu0 0.0
  %97 = vmatprep.subr.mxu0 0.0
  %98 = vmatpush2.msra.mxu0 0.0
  %99 = vmatprep.subr.mxu0 0.0
  %100 = vmatpush2.msra.mxu0 0.0
  %101 = vmatprep.subr.mxu0 0.0
  %102 = vmatpush2.msra.mxu0 0.0
  %103 = vmatprep.subr.mxu0 0.0
  %104 = vmatpush2.msra.mxu0 0.0
  %105 = vmatprep.subr.mxu0 0.0
  %106 = vmatpush2.msra.mxu0 0.0
  %107 = vmatprep.subr.mxu0 0.0
  %108 = vmatpush2.msra.mxu0 0.0
  %109 = vmatprep.subr.mxu0 0.0
  %110 = vmatpush2.msra.mxu0 0.0
  %111 = vmatprep.mubr.f32.mxu0 0.0
  %112 = vmatmul.mubr.f32.gmra.mxu0 %v36
  %v113 = vpop.f32.mrf.mxu0
  %v114 = vadd.f32 0.0, %v113
  %v115 = vpop.f32.mrf.mxu0
  %116 = vmatprep.mubr.f32.mxu0 0.0
  %117 = vmatmul.mubr.f32.gmra.mxu0 %v39
  %v118 = vpop.f32.mrf.mxu0
  %v119 = vadd.f32 0.0, %v118
  %v120 = vpop.f32.mrf.mxu0
  %121 = vmatprep.mubr.f32.mxu0 0.0
  %122 = vmatmul.mubr.f32.gmra.mxu0 %v42
  %v123 = vpop.f32.mrf.mxu0
  %v124 = vadd.f32 0.0, %v123
  %v125 = vpop.f32.mrf.mxu0
  %126 = vmatprep.mubr.f32.mxu0 0.0
  %127 = vmatmul.mubr.f32.gmra.mxu0 %v45
  %v128 = vpop.f32.mrf.mxu0
  %v129 = vadd.f32 0.0, %v128
  %v130 = vpop.f32.mrf.mxu0
  %131 = vdwg.mxu0
  %v132 = vadd.f32 %v22, %v114
  %v133 = vadd.f32 %v23, %v119
  %v134 = vadd.f32 %v24, %v124
  %v135 = vadd.f32 %v25, %v129
  %136 = vst [vmem:[#allocation2] sm:$0xff] %v132
  %137 = vst [vmem:[#allocation2 + $0x8] sm:$0xff] %v133
  %138 = vst [vmem:[#allocation2 + $0x10] sm:$0xff] %v134
  %139 = vst [vmem:[#allocation2 + $0x18] sm:$0xff] %v135
  // Predicated region
  $region18: #{_lambda_.25} parent=0 // pred_check
    %p140 = pneg %p14
  $region19: #{_lambda_.25} parent=0 // pred_check_branch
    %142 = sbr.rel (%p140) target = $region21
  $region20: #{_lambda_.25} parent=0 // pred_region
    %v143 = vld [vmem:[#allocation2] sm:$0xff]
    %v144 = vld [vmem:[#allocation2 + $0x8] sm:$0xff]
    %v145 = vld [vmem:[#allocation2 + $0x10] sm:$0xff]
    %v146 = vld [vmem:[#allocation2 + $0x18] sm:$0xff]
    %v147 = vld [vmem:[%s2] sm:$0x1]
    %v149 = vlaneseq
    %v150 = vshrl.u32 %v149, 7
    %v151 = vsub.s32 0, %v150
    %v152 = vrot.slane %v147, %v151
    %v154 = vadd.f32 %v143, %v152
    %v155 = vadd.f32 %v144, %v152
    %v156 = vadd.f32 %v145, %v152
    %v157 = vadd.f32 %v146, %v152
    %158 = vst [vmem:[%s3] sm:$0xff] %v154
    %159 = vst [vmem:[%s3 + $0x8] sm:$0xff] %v155
    %160 = vst [vmem:[%s3 + $0x10] sm:$0xff] %v156
    %161 = vst [vmem:[%s3 + $0x18] sm:$0xff] %v157
  $region21: #{_lambda_.25} parent=0 // pred_fallthru
    _
  // Predicated region
  $region22: #{_lambda_.25} parent=0 // pred_check
    _
  $region23: #{_lambda_.25} parent=0 // pred_check_branch
    %163 = sbr.rel (0) target = $region25
  $region24: #{_lambda_.25} parent=0 // pred_region
    _
  $region25: #{_lambda_.25} parent=0 // pred_fallthru
    _
  // Predicated region
  $region26: #{_lambda_.25} parent=0 // pred_check
    _
  $region27: #{_lambda_.25} parent=0 // pred_check_branch
    %165 = sbr.rel (0) target = $region29
  $region28: #{_lambda_.25} parent=0 // pred_region
    _
  $region29: #{_lambda_.25} parent=0 // pred_fallthru
    _

</llo_original>
